<compile_context>
chip_gen: v6e
topology: v6e:2x2x1
jax: 0.10.0
libtpu: 0.0.40
codegen_flags: <defaults>
</compile_context>

<pallas_src>
from functools import partial

import jax
import jax.numpy as jnp
from jax.experimental import pallas as pl
from jax.experimental.pallas import tpu as pltpu

BN_EPS = 1e-5
COMPUTE_DTYPE = jnp.bfloat16      # MXU inputs, scratch and inter-kernel activations
_TAP_FUSE_MAX_CIN = 96            # <=: one fused K=9*Cin dot; >: 9 accumulated dots


def _pick_vmem_limit_bytes():
    # v5e / v6e have 128 MiB physical VMEM -> allow large tiles;
    # v7x has 64 MiB per TensorCore -> stay well under (also the safe default).
    try:
        kind = jax.devices()[0].device_kind.lower()
    except Exception:
        kind = ""
    if ("v5" in kind) or ("v6" in kind):
        return 100 * 1024 * 1024
    return 44 * 1024 * 1024


_COMPILER_PARAMS = pltpu.CompilerParams(
    dimension_semantics=("parallel",),          # shard batch across TCs (megacore)
    vmem_limit_bytes=_pick_vmem_limit_bytes(),
)


# ---------------------------------------------------------------------------
# Kernels (channel-first, flattened padded-spatial layout: (C, Lp), Lp on lanes)
# ---------------------------------------------------------------------------
def _upconv_kernel(x_ref, w_ref, b_ref, o_ref):
    # x: (Cin, M1) bf16   w: (4*Cout, Cin) bf16   b: (4*Cout, 1) f32
    # o: (4*Cout, M1) bf16 (M1 = H1*W1 on lanes).
    o_ref[...] = (
        jnp.dot(w_ref[...], x_ref[...], preferred_element_type=jnp.float32)
        + b_ref[...]
    ).astype(o_ref.dtype)


def _conv3x3_stats(w_ref, sources, taps_ref, mask, *, ext, wp, lp):
    """3x3 'same' conv on flattened, halo-extended activations + masked BN partials.

    sources : list of (ref, row_offset); each ref is (c_s, Le) bf16 with the
              padded-flat activation in columns [ext, ext+Lp) and zeros outside.
              Rows of the virtual concatenated input are [row_offset, row_offset+c_s).
    w_ref   : (Cout, 9*Cin) bf16, taps ordered (dy, dx) row-major, channel minor.
    taps_ref: (9*Cin, Lp) bf16 scratch (used only on the fused path).
    mask    : (1, Lp) f32, 1.0 at interior positions of the padded-flat grid.
    Returns z (Cout, Lp) f32 and the (Cout, 2) masked (sum, sum_sq) partials.
    """
    ci = w_ref.shape[1] // 9
    offs = [dy * wp + dx for dy in (-1, 0, 1) for dx in (-1, 0, 1)]
    if ci <= _TAP_FUSE_MAX_CIN:
        # Assemble the 9 lane-shifted taps in bf16 VMEM and contract with a single
        # K = 9*Cin MXU matmul (bf16 in / f32 accumulate).
        for t, off in enumerate(offs):                      # static unroll: 9x copies
            for ref, row0 in sources:
                taps_ref[t * ci + row0: t * ci + row0 + ref.shape[0], :] = (
                    ref[:, ext + off: ext + off + lp])
        z = jnp.dot(w_ref[...], taps_ref[...], preferred_element_type=jnp.float32)
    else:
        # Production path (Cin already fills the MXU K dim): 9 accumulated dots,
        # no (9*Cin, Lp) slab in VMEM (essential for v7x's 64 MiB VMEM).
        z = jnp.zeros((w_ref.shape[0], lp), jnp.float32)
        for t, off in enumerate(offs):
            parts = [ref[:, ext + off: ext + off + lp] for ref, _ in sources]
            tap = parts[0] if len(parts) == 1 else jnp.concatenate(parts, axis=0)
            z = z + jnp.dot(w_ref[:, t * ci:(t + 1) * ci], tap,
                            preferred_element_type=jnp.float32)
    zm = z * mask                                           # ring/flat-pad excluded
    s0 = jnp.sum(zm, axis=1, keepdims=True)                 # (Cout, 1)
    s1 = jnp.sum(zm * z, axis=1, keepdims=True)             # (Cout, 1)
    return z, jnp.concatenate([s0, s1], axis=1)             # single (Cout, 2) store


def _conv1_kernel(y_ref, x2_ref, w_ref, mask_ref, z_ref, s_ref, taps_ref,
                  *, ext, wp, lp):
    # Fused: virtual channel concat (tap rows) + 3x3 conv + per-image BN partials.
    cy = y_ref.shape[0]
    z, s = _conv3x3_stats(w_ref, [(y_ref, 0), (x2_ref, cy)], taps_ref,
                          mask_ref[...], ext=ext, wp=wp, lp=lp)
    z_ref[...] = z.astype(z_ref.dtype)
    s_ref[...] = s


def _conv2_kernel(z1_ref, w_ref, sc_ref, sh_ref, mask_ref, z_ref, s_ref,
                  a_ext_ref, taps_ref, *, ext, wp, lp):
    # Fused: BN1 affine + ReLU (f32) + re-zero ring/flat-pad + 3x3 conv + partials.
    m = mask_ref[...]
    a = jnp.maximum(z1_ref[...].astype(jnp.float32) * sc_ref[...] + sh_ref[...],
                    0.0) * m
    # Zero only the small halo-extension strips; interior Lp columns are fully
    # overwritten every step (keeps edge taps finite & zero without a full memset).
    c_in = a_ext_ref.shape[0]
    a_ext_ref[:, 0:ext] = jnp.zeros((c_in, ext), a_ext_ref.dtype)
    a_ext_ref[:, ext + lp: 2 * ext + lp] = jnp.zeros((c_in, ext), a_ext_ref.dtype)
    a_ext_ref[:, ext:ext + lp] = a.astype(a_ext_ref.dtype)
    z, s = _conv3x3_stats(w_ref, [(a_ext_ref, 0)], taps_ref, m,
                          ext=ext, wp=wp, lp=lp)
    z_ref[...] = z.astype(z_ref.dtype)
    s_ref[...] = s


def _bn_relu_kernel(z_ref, sc_ref, sh_ref, o_ref):
    o_ref[...] = jnp.maximum(
        z_ref[...].astype(jnp.float32) * sc_ref[...] + sh_ref[...], 0.0)


# ---------------------------------------------------------------------------
# pallas_call wrappers (grid over batch, "parallel" semantics)
# ---------------------------------------------------------------------------
def _upconv(x_flat, w_mat, bias4):
    n, ci, m1 = x_flat.shape
    co4 = w_mat.shape[0]
    return pl.pallas_call(
        _upconv_kernel,
        out_shape=jax.ShapeDtypeStruct((n, co4, m1), COMPUTE_DTYPE),
        grid=(n,),
        in_specs=[
            pl.BlockSpec((None, ci, m1), lambda i: (i, 0, 0)),
            pl.BlockSpec((co4, ci), lambda i: (0, 0)),
            pl.BlockSpec((co4, 1), lambda i: (0, 0)),
        ],
        out_specs=pl.BlockSpec((None, co4, m1), lambda i: (i, 0, 0)),
        compiler_params=_COMPILER_PARAMS,
    )(x_flat, w_mat, bias4)


def _conv1(y_ext, x2_ext, w_mat, mask, *, ext, wp, lp):
    n, cy, le = y_ext.shape
    cx = x2_ext.shape[1]
    ci = cy + cx
    co = w_mat.shape[0]
    fuse = ci <= _TAP_FUSE_MAX_CIN
    taps_shape = (9 * ci, lp) if fuse else (8, 128)   # dummy when taps slab unused
    return pl.pallas_call(
        partial(_conv1_kernel, ext=ext, wp=wp, lp=lp),
        out_shape=(
            jax.ShapeDtypeStruct((n, co, lp), COMPUTE_DTYPE),
            jax.ShapeDtypeStruct((n, co, 2), jnp.float32),
        ),
        grid=(n,),
        in_specs=[
            pl.BlockSpec((None, cy, le), lambda i: (i, 0, 0)),
            pl.BlockSpec((None, cx, le), lambda i: (i, 0, 0)),
            pl.BlockSpec((co, 9 * ci), lambda i: (0, 0)),
            pl.BlockSpec((1, lp), lambda i: (0, 0)),
        ],
        out_specs=(
            pl.BlockSpec((None, co, lp), lambda i: (i, 0, 0)),
            pl.BlockSpec((None, co, 2), lambda i: (i, 0, 0)),
        ),
        scratch_shapes=[pltpu.VMEM(taps_shape, COMPUTE_DTYPE)],
        compiler_params=_COMPILER_PARAMS,
    )(y_ext, x2_ext, w_mat, mask)


def _conv2(z1, w_mat, scale, shift, mask, *, ext, wp, lp):
    n, ci, _ = z1.shape
    co = w_mat.shape[0]
    fuse = ci <= _TAP_FUSE_MAX_CIN
    taps_shape = (9 * ci, lp) if fuse else (8, 128)
    return pl.pallas_call(
        partial(_conv2_kernel, ext=ext, wp=wp, lp=lp),
        out_shape=(
            jax.ShapeDtypeStruct((n, co, lp), COMPUTE_DTYPE),
            jax.ShapeDtypeStruct((n, co, 2), jnp.float32),
        ),
        grid=(n,),
        in_specs=[
            pl.BlockSpec((None, ci, lp), lambda i: (i, 0, 0)),
            pl.BlockSpec((co, 9 * ci), lambda i: (0, 0)),
            pl.BlockSpec((ci, 1), lambda i: (0, 0)),
            pl.BlockSpec((ci, 1), lambda i: (0, 0)),
            pl.BlockSpec((1, lp), lambda i: (0, 0)),
        ],
        out_specs=(
            pl.BlockSpec((None, co, lp), lambda i: (i, 0, 0)),
            pl.BlockSpec((None, co, 2), lambda i: (i, 0, 0)),
        ),
        scratch_shapes=[
            pltpu.VMEM((ci, lp + 2 * ext), COMPUTE_DTYPE),
            pltpu.VMEM(taps_shape, COMPUTE_DTYPE),
        ],
        compiler_params=_COMPILER_PARAMS,
    )(z1, w_mat, scale, shift, mask)


def _bn_relu(z, scale, shift):
    n, co, lp = z.shape
    return pl.pallas_call(
        _bn_relu_kernel,
        out_shape=jax.ShapeDtypeStruct((n, co, lp), jnp.float32),
        grid=(n,),
        in_specs=[
            pl.BlockSpec((None, co, lp), lambda i: (i, 0, 0)),
            pl.BlockSpec((co, 1), lambda i: (0, 0)),
            pl.BlockSpec((co, 1), lambda i: (0, 0)),
        ],
        out_specs=pl.BlockSpec((None, co, lp), lambda i: (i, 0, 0)),
        compiler_params=_COMPILER_PARAMS,
    )(z, scale, shift)


# ---------------------------------------------------------------------------
# Forward pass
# ---------------------------------------------------------------------------
def _bn_affine(stats, gamma, beta, count):
    # stats: (N, Cout, 2) per-image (sum, sum_sq) f32 partials -> global BN(train).
    s = jnp.sum(stats, axis=0)                        # (Cout, 2)
    mean = s[:, 0] / count
    var = jnp.maximum(s[:, 1] / count - mean * mean, 0.0)   # clamp (cancellation)
    scale = gamma * jax.lax.rsqrt(var + BN_EPS)
    shift = beta - mean * scale
    return scale.reshape(-1, 1), shift.reshape(-1, 1)


def decoder_block_forward(x1, x2, params):
    """Forward pass matching PyTorch DecoderBlock.  NCHW in, NCHW out."""
    n, ci_up, h1, w1 = x1.shape
    co_up = params["w_up"].shape[1]
    c2 = x2.shape[1]
    h, w = 2 * h1, 2 * w1
    hp, wp = h + 2, w + 2
    l = hp * wp
    lp = ((l + 127) // 128) * 128          # lane-dense flat length (mult. of 128)
    ext = wp + 1                           # halo extension for the 3x3 tap shifts
    le = lp + 2 * ext
    count = n * h * w                      # BN population size

    # ---- self.up : ConvTranspose2d(k=2, s=2) as one matmul per image ---------
    # torch weight (Cin, Cout, 2, 2) -> rows ordered ((a*2+b)*Cout + o).
    w_up = jnp.transpose(params["w_up"], (2, 3, 1, 0)).reshape(4 * co_up, ci_up)
    bias4 = jnp.tile(params["b_up"], 4).reshape(4 * co_up, 1).astype(jnp.float32)
    x1_flat = x1.reshape(n, ci_up, h1 * w1).astype(COMPUTE_DTYPE)
    y4 = _upconv(x1_flat, w_up.astype(COMPUTE_DTYPE), bias4)      # bf16

    # ---- 2x2 pixel shuffle + zero-pad ring + halo-extended flat (XLA glue) ---
    y = y4.reshape(n, 2, 2, co_up, h1, w1)            # (n, a, b, o, h, w)
    y = jnp.transpose(y, (0, 3, 4, 1, 5, 2)).reshape(n, co_up, h, w)

    def to_ext_flat(t):   # (n,c,h,w) -> (n,c,Le) bf16, activation at cols [ext, ext+L)
        tp = jnp.pad(t, ((0, 0), (0, 0), (1, 1), (1, 1)))
        tp = tp.reshape(t.shape[0], t.shape[1], l)
        return jnp.pad(tp, ((0, 0), (0, 0), (ext, le - l - ext))).astype(COMPUTE_DTYPE)

    y_ext = to_ext_flat(y)
    x2_ext = to_ext_flat(x2)

    # Interior mask over the lane-padded flat grid (1.0 inside, 0.0 ring/flat-pad).
    rr = (jnp.arange(hp) >= 1) & (jnp.arange(hp) <= h)
    cc = (jnp.arange(wp) >= 1) & (jnp.arange(wp) <= w)
    mask = (rr[:, None] & cc[None, :]).astype(jnp.float32).reshape(1, l)
    mask = jnp.pad(mask, ((0, 0), (0, lp - l)))

    # ---- conv1 (fused channel concat) + BN1 partial stats --------------------
    co1 = params["w1"].shape[0]
    w1_mat = jnp.transpose(params["w1"], (0, 2, 3, 1)).reshape(co1, 9 * (co_up + c2))
    z1, st1 = _conv1(y_ext, x2_ext, w1_mat.astype(COMPUTE_DTYPE), mask,
                     ext=ext, wp=wp, lp=lp)
    sc1, sh1 = _bn_affine(st1, params["g1"], params["bta1"], count)

    # ---- conv2 (fused BN1 affine + ReLU) + BN2 partial stats ------------------
    co2 = params["w2"].shape[0]
    w2_mat = jnp.transpose(params["w2"], (0, 2, 3, 1)).reshape(co2, 9 * co1)
    z2, st2 = _conv2(z1, w2_mat.astype(COMPUTE_DTYPE), sc1, sh1, mask,
                     ext=ext, wp=wp, lp=lp)
    sc2, sh2 = _bn_affine(st2, params["g2"], params["bta2"], count)

    # ---- BN2 affine + ReLU epilogue; crop the padding ring --------------------
    out_flat = _bn_relu(z2, sc2, sh2)                  # (n, co2, Lp) f32
    out = out_flat[:, :, :l].reshape(n, co2, hp, wp)[:, :, 1:-1, 1:-1]
    return out


# ---------------------------------------------------------------------------
# Pure-JAX reference (mirrors bf16 MXU inputs AND bf16 inter-kernel activations)
# ---------------------------------------------------------------------------
def _rd(x):
    return x.astype(COMPUTE_DTYPE).astype(jnp.float32)


def reference_forward(x1, x2, params):
    n, _, h1, w1 = x1.shape
    co_up = params["w_up"].shape[1]
    # ConvTranspose2d(k=2, s=2): out[n,o,2h+a,2w+b] = sum_i x[n,i,h,w] W[i,o,a,b] + b[o]
    y = jnp.einsum("nihw,ioab->nohawb", _rd(x1), _rd(params["w_up"]))
    y = y.reshape(n, co_up, 2 * h1, 2 * w1) + params["b_up"][None, :, None, None]
    y = _rd(y)                                         # mirror bf16 y4 storage
    x = jnp.concatenate([y, x2], axis=1)

    def conv_bn_relu(xin, wt, g, b):
        z = jax.lax.conv_general_dilated(
            _rd(xin), _rd(wt), (1, 1), ((1, 1), (1, 1)),
            dimension_numbers=("NCHW", "OIHW", "NCHW"))
        mean = z.mean(axis=(0, 2, 3), keepdims=True)
        var = jnp.maximum((z * z).mean(axis=(0, 2, 3), keepdims=True) - mean * mean,
                          0.0)
        scale = g[None, :, None, None] * jax.lax.rsqrt(var + BN_EPS)
        shift = b[None, :, None, None] - mean * scale
        zq = _rd(z)                                    # mirror bf16 z1/z2 storage
        return jnp.maximum(zq * scale + shift, 0.0)

    x = conv_bn_relu(x, params["w1"], params["g1"], params["bta1"])
    x = conv_bn_relu(x, params["w2"], params["g2"], params["bta2"])
    return x


# ---------------------------------------------------------------------------
if __name__ == "__main__":
    # DecoderBlock(conv_in_channels=8, conv_out_channels=4)
    #   => up: ConvTranspose2d(8, 4, k=2, s=2); conv: 8 -> 4 -> 4
    n = 2
    conv_in, conv_out = 8, 4
    up_in, up_out = conv_in, conv_out
    h1 = w1 = 8                                        # x1 spatial; x2 is 16x16

    keys = jax.random.split(jax.random.PRNGKey(0), 10)
    x1 = jax.random.normal(keys[0], (n, up_in, h1, w1), jnp.float32)              # NCHW
    x2 = jax.random.normal(keys[1], (n, conv_in - up_out, 2 * h1, 2 * w1), jnp.float32)

    params = {
        # ConvTranspose2d weight (torch): (in, out, kH, kW); bias (out,)
        "w_up": 0.1 * jax.random.normal(keys[2], (up_in, up_out, 2, 2), jnp.float32),
        "b_up": 0.1 * jax.random.normal(keys[3], (up_out,), jnp.float32),
        # Conv2d weights (torch): (out, in, 3, 3); BN affine params
        "w1": 0.1 * jax.random.normal(keys[4], (conv_out, conv_in, 3, 3), jnp.float32),
        "g1": 1.0 + 0.1 * jax.random.normal(keys[5], (conv_out,), jnp.float32),
        "bta1": 0.1 * jax.random.normal(keys[6], (conv_out,), jnp.float32),
        "w2": 0.1 * jax.random.normal(keys[7], (conv_out, conv_out, 3, 3), jnp.float32),
        "g2": 1.0 + 0.1 * jax.random.normal(keys[8], (conv_out,), jnp.float32),
        "bta2": 0.1 * jax.random.normal(keys[9], (conv_out,), jnp.float32),
    }

    out = jax.block_until_ready(jax.jit(decoder_block_forward)(x1, x2, params))
    assert out.shape == (n, conv_out, 2 * h1, 2 * w1), out.shape
    assert bool(jnp.all(jnp.isfinite(out)))

    ref = jax.block_until_ready(reference_forward(x1, x2, params))
    max_err = float(jnp.max(jnp.abs(out - ref)))
    assert max_err < 1e-2, max_err

    print("KERNEL_OK")
</pallas_src>

<mosaic_0001>
module attributes {stable_mosaic.version = 11 : i64} {
  func.func @_upconv_kernel(%arg0: i32, %arg1: memref<1x8x64xbf16, #tpu.memory_space<vmem>>, %arg2: memref<16x8xbf16, #tpu.memory_space<vmem>>, %arg3: memref<16x1xf32, #tpu.memory_space<vmem>>, %arg4: memref<1x16x64xbf16, #tpu.memory_space<vmem>>) attributes {dimension_semantics = [#tpu.dimension_semantics<parallel>], iteration_bounds = array<i64: 2>, scalar_prefetch = 0 : i64, scratch_operands = 0 : i64, tpu.core_type = #tpu.core_type<tc>, window_params = [{transform_indices = @transform_0, window_bounds = array<i64: 1, 8, 64>}, {pipeline_mode = #tpu.pipeline_mode<synchronous>, transform_indices = @transform_1, window_bounds = array<i64: 16, 8>}, {pipeline_mode = #tpu.pipeline_mode<synchronous>, transform_indices = @transform_2, window_bounds = array<i64: 16, 1>}, {transform_indices = @transform_3, window_bounds = array<i64: 1, 16, 64>}]} {
    %c0 = arith.constant 0 : index
    %c0_0 = arith.constant 0 : index
    %0 = vector.load %arg2[%c0, %c0_0] : memref<16x8xbf16, #tpu.memory_space<vmem>>, vector<16x8xbf16>
    %c0_1 = arith.constant 0 : index
    %c0_2 = arith.constant 0 : index
    %c0_3 = arith.constant 0 : index
    %1 = vector.load %arg1[%c0_1, %c0_2, %c0_3] : memref<1x8x64xbf16, #tpu.memory_space<vmem>>, vector<1x8x64xbf16>
    %2 = vector.shape_cast %1 : vector<1x8x64xbf16> to vector<8x64xbf16>
    %cst = arith.constant dense<0.000000e+00> : vector<16x64xf32>
    %3 = tpu.matmul %0, %2, %cst {dimension_numbers = #tpu.dot_dimension_numbers<[1], [0], [0], [1], [0, 0, 1, 1], [], []>} : vector<16x8xbf16>, vector<8x64xbf16>, vector<16x64xf32> -> vector<16x64xf32>
    %c0_4 = arith.constant 0 : index
    %c0_5 = arith.constant 0 : index
    %4 = vector.load %arg3[%c0_4, %c0_5] : memref<16x1xf32, #tpu.memory_space<vmem>>, vector<16x1xf32>
    %5 = vector.broadcast %4 : vector<16x1xf32> to vector<16x64xf32>
    %6 = arith.addf %3, %5 : vector<16x64xf32>
    %7 = arith.truncf %6 : vector<16x64xf32> to vector<16x64xbf16>
    %c0_6 = arith.constant 0 : index
    %c0_7 = arith.constant 0 : index
    %c0_8 = arith.constant 0 : index
    %8 = vector.load %arg4[%c0_6, %c0_7, %c0_8] : memref<1x16x64xbf16, #tpu.memory_space<vmem>>, vector<1x16x64xbf16>
    %9 = vector.shape_cast %8 : vector<1x16x64xbf16> to vector<16x64xbf16>
    %10 = vector.shape_cast %7 : vector<16x64xbf16> to vector<1x16x64xbf16>
    tpu.vector_store %arg4[%c0_6, %c0_7, %c0_8], %10 {strides = array<i32>} : memref<1x16x64xbf16, #tpu.memory_space<vmem>>, vector<1x16x64xbf16>,
    return
  }
  func.func @transform_0(%arg0: i32) -> (i32, i32, i32) {
    %c0_i32 = arith.constant 0 : i32
    %c0_i32_0 = arith.constant 0 : i32
    %c0_i32_1 = arith.constant 0 : i32
    return %arg0, %c0_i32, %c0_i32_0 : i32, i32, i32
  }
  func.func @transform_1(%arg0: i32) -> (i32, i32) {
    %c0_i32 = arith.constant 0 : i32
    %c0_i32_0 = arith.constant 0 : i32
    %c0_i32_1 = arith.constant 0 : i32
    return %c0_i32, %c0_i32_0 : i32, i32
  }
  func.func @transform_2(%arg0: i32) -> (i32, i32) {
    %c0_i32 = arith.constant 0 : i32
    %c0_i32_0 = arith.constant 0 : i32
    %c0_i32_1 = arith.constant 0 : i32
    return %c0_i32, %c0_i32_0 : i32, i32
  }
  func.func @transform_3(%arg0: i32) -> (i32, i32, i32) {
    %c0_i32 = arith.constant 0 : i32
    %c0_i32_0 = arith.constant 0 : i32
    %c0_i32_1 = arith.constant 0 : i32
    return %arg0, %c0_i32, %c0_i32_0 : i32, i32, i32
  }
}

module attributes {stable_mosaic.version = 11 : i64} {
  func.func @_conv1_kernel(%arg0: i32, %arg1: memref<1x4x422xbf16, #tpu.memory_space<vmem>>, %arg2: memref<1x4x422xbf16, #tpu.memory_space<vmem>>, %arg3: memref<4x72xbf16, #tpu.memory_space<vmem>>, %arg4: memref<1x384xf32, #tpu.memory_space<vmem>>, %arg5: memref<1x4x384xbf16, #tpu.memory_space<vmem>>, %arg6: memref<1x4x2xf32, #tpu.memory_space<vmem>>, %arg7: memref<72x384xbf16, #tpu.memory_space<vmem>>) attributes {dimension_semantics = [#tpu.dimension_semantics<parallel>], iteration_bounds = array<i64: 2>, scalar_prefetch = 0 : i64, scratch_operands = 1 : i64, tpu.core_type = #tpu.core_type<tc>, window_params = [{transform_indices = @transform_0, window_bounds = array<i64: 1, 4, 422>}, {transform_indices = @transform_1, window_bounds = array<i64: 1, 4, 422>}, {pipeline_mode = #tpu.pipeline_mode<synchronous>, transform_indices = @transform_2, window_bounds = array<i64: 4, 72>}, {pipeline_mode = #tpu.pipeline_mode<synchronous>, transform_indices = @transform_3, window_bounds = array<i64: 1, 384>}, {transform_indices = @transform_4, window_bounds = array<i64: 1, 4, 384>}, {transform_indices = @transform_5, window_bounds = array<i64: 1, 4, 2>}]} {
    %c0 = arith.constant 0 : index
    %c0_0 = arith.constant 0 : index
    %0 = vector.load %arg4[%c0, %c0_0] : memref<1x384xf32, #tpu.memory_space<vmem>>, vector<1x384xf32>
    %c0_1 = arith.constant 0 : index
    %c0_2 = arith.constant 0 : index
    %c0_3 = arith.constant 0 : index
    %1 = vector.load %arg1[%c0_1, %c0_2, %c0_3] : memref<1x4x422xbf16, #tpu.memory_space<vmem>>, vector<1x4x384xbf16>
    %2 = vector.shape_cast %1 : vector<1x4x384xbf16> to vector<4x384xbf16>
    %c0_4 = arith.constant 0 : index
    %c0_5 = arith.constant 0 : index
    %3 = vector.load %arg7[%c0_4, %c0_5] : memref<72x384xbf16, #tpu.memory_space<vmem>>, vector<4x384xbf16>
    tpu.vector_store %arg7[%c0_4, %c0_5], %2 {strides = array<i32>} : memref<72x384xbf16, #tpu.memory_space<vmem>>, vector<4x384xbf16>,
    %c0_6 = arith.constant 0 : index
    %c0_7 = arith.constant 0 : index
    %c0_8 = arith.constant 0 : index
    %4 = vector.load %arg2[%c0_6, %c0_7, %c0_8] : memref<1x4x422xbf16, #tpu.memory_space<vmem>>, vector<1x4x384xbf16>
    %5 = vector.shape_cast %4 : vector<1x4x384xbf16> to vector<4x384xbf16>
    %c4 = arith.constant 4 : index
    %c0_9 = arith.constant 0 : index
    %6 = vector.load %arg7[%c4, %c0_9] : memref<72x384xbf16, #tpu.memory_space<vmem>>, vector<4x384xbf16>
    tpu.vector_store %arg7[%c4, %c0_9], %5 {strides = array<i32>} : memref<72x384xbf16, #tpu.memory_space<vmem>>, vector<4x384xbf16>,
    %c0_10 = arith.constant 0 : index
    %c0_11 = arith.constant 0 : index
    %c1 = arith.constant 1 : index
    %7 = vector.load %arg1[%c0_10, %c0_11, %c1] : memref<1x4x422xbf16, #tpu.memory_space<vmem>>, vector<1x4x384xbf16>
    %8 = vector.shape_cast %7 : vector<1x4x384xbf16> to vector<4x384xbf16>
    %c8 = arith.constant 8 : index
    %c0_12 = arith.constant 0 : index
    %9 = vector.load %arg7[%c8, %c0_12] : memref<72x384xbf16, #tpu.memory_space<vmem>>, vector<4x384xbf16>
    tpu.vector_store %arg7[%c8, %c0_12], %8 {strides = array<i32>} : memref<72x384xbf16, #tpu.memory_space<vmem>>, vector<4x384xbf16>,
    %c0_13 = arith.constant 0 : index
    %c0_14 = arith.constant 0 : index
    %c1_15 = arith.constant 1 : index
    %10 = vector.load %arg2[%c0_13, %c0_14, %c1_15] : memref<1x4x422xbf16, #tpu.memory_space<vmem>>, vector<1x4x384xbf16>
    %11 = vector.shape_cast %10 : vector<1x4x384xbf16> to vector<4x384xbf16>
    %c12 = arith.constant 12 : index
    %c0_16 = arith.constant 0 : index
    %12 = vector.load %arg7[%c12, %c0_16] : memref<72x384xbf16, #tpu.memory_space<vmem>>, vector<4x384xbf16>
    tpu.vector_store %arg7[%c12, %c0_16], %11 {strides = array<i32>} : memref<72x384xbf16, #tpu.memory_space<vmem>>, vector<4x384xbf16>,
    %c0_17 = arith.constant 0 : index
    %c0_18 = arith.constant 0 : index
    %c2 = arith.constant 2 : index
    %13 = vector.load %arg1[%c0_17, %c0_18, %c2] : memref<1x4x422xbf16, #tpu.memory_space<vmem>>, vector<1x4x384xbf16>
    %14 = vector.shape_cast %13 : vector<1x4x384xbf16> to vector<4x384xbf16>
    %c16 = arith.constant 16 : index
    %c0_19 = arith.constant 0 : index
    %15 = vector.load %arg7[%c16, %c0_19] : memref<72x384xbf16, #tpu.memory_space<vmem>>, vector<4x384xbf16>
    tpu.vector_store %arg7[%c16, %c0_19], %14 {strides = array<i32>} : memref<72x384xbf16, #tpu.memory_space<vmem>>, vector<4x384xbf16>,
    %c0_20 = arith.constant 0 : index
    %c0_21 = arith.constant 0 : index
    %c2_22 = arith.constant 2 : index
    %16 = vector.load %arg2[%c0_20, %c0_21, %c2_22] : memref<1x4x422xbf16, #tpu.memory_space<vmem>>, vector<1x4x384xbf16>
    %17 = vector.shape_cast %16 : vector<1x4x384xbf16> to vector<4x384xbf16>
    %c20 = arith.constant 20 : index
    %c0_23 = arith.constant 0 : index
    %18 = vector.load %arg7[%c20, %c0_23] : memref<72x384xbf16, #tpu.memory_space<vmem>>, vector<4x384xbf16>
    tpu.vector_store %arg7[%c20, %c0_23], %17 {strides = array<i32>} : memref<72x384xbf16, #tpu.memory_space<vmem>>, vector<4x384xbf16>,
    %c0_24 = arith.constant 0 : index
    %c0_25 = arith.constant 0 : index
    %c18 = arith.constant 18 : index
    %19 = vector.load %arg1[%c0_24, %c0_25, %c18] : memref<1x4x422xbf16, #tpu.memory_space<vmem>>, vector<1x4x384xbf16>
    %20 = vector.shape_cast %19 : vector<1x4x384xbf16> to vector<4x384xbf16>
    %c24 = arith.constant 24 : index
    %c0_26 = arith.constant 0 : index
    %21 = vector.load %arg7[%c24, %c0_26] : memref<72x384xbf16, #tpu.memory_space<vmem>>, vector<4x384xbf16>
    tpu.vector_store %arg7[%c24, %c0_26], %20 {strides = array<i32>} : memref<72x384xbf16, #tpu.memory_space<vmem>>, vector<4x384xbf16>,
    %c0_27 = arith.constant 0 : index
    %c0_28 = arith.constant 0 : index
    %c18_29 = arith.constant 18 : index
    %22 = vector.load %arg2[%c0_27, %c0_28, %c18_29] : memref<1x4x422xbf16, #tpu.memory_space<vmem>>, vector<1x4x384xbf16>
    %23 = vector.shape_cast %22 : vector<1x4x384xbf16> to vector<4x384xbf16>
    %c28 = arith.constant 28 : index
    %c0_30 = arith.constant 0 : index
    %24 = vector.load %arg7[%c28, %c0_30] : memref<72x384xbf16, #tpu.memory_space<vmem>>, vector<4x384xbf16>
    tpu.vector_store %arg7[%c28, %c0_30], %23 {strides = array<i32>} : memref<72x384xbf16, #tpu.memory_space<vmem>>, vector<4x384xbf16>,
    %c0_31 = arith.constant 0 : index
    %c0_32 = arith.constant 0 : index
    %c19 = arith.constant 19 : index
    %25 = vector.load %arg1[%c0_31, %c0_32, %c19] : memref<1x4x422xbf16, #tpu.memory_space<vmem>>, vector<1x4x384xbf16>
    %26 = vector.shape_cast %25 : vector<1x4x384xbf16> to vector<4x384xbf16>
    %c32 = arith.constant 32 : index
    %c0_33 = arith.constant 0 : index
    %27 = vector.load %arg7[%c32, %c0_33] : memref<72x384xbf16, #tpu.memory_space<vmem>>, vector<4x384xbf16>
    tpu.vector_store %arg7[%c32, %c0_33], %26 {strides = array<i32>} : memref<72x384xbf16, #tpu.memory_space<vmem>>, vector<4x384xbf16>,
    %c0_34 = arith.constant 0 : index
    %c0_35 = arith.constant 0 : index
    %c19_36 = arith.constant 19 : index
    %28 = vector.load %arg2[%c0_34, %c0_35, %c19_36] : memref<1x4x422xbf16, #tpu.memory_space<vmem>>, vector<1x4x384xbf16>
    %29 = vector.shape_cast %28 : vector<1x4x384xbf16> to vector<4x384xbf16>
    %c36 = arith.constant 36 : index
    %c0_37 = arith.constant 0 : index
    %30 = vector.load %arg7[%c36, %c0_37] : memref<72x384xbf16, #tpu.memory_space<vmem>>, vector<4x384xbf16>
    tpu.vector_store %arg7[%c36, %c0_37], %29 {strides = array<i32>} : memref<72x384xbf16, #tpu.memory_space<vmem>>, vector<4x384xbf16>,
    %c0_38 = arith.constant 0 : index
    %c0_39 = arith.constant 0 : index
    %c20_40 = arith.constant 20 : index
    %31 = vector.load %arg1[%c0_38, %c0_39, %c20_40] : memref<1x4x422xbf16, #tpu.memory_space<vmem>>, vector<1x4x384xbf16>
    %32 = vector.shape_cast %31 : vector<1x4x384xbf16> to vector<4x384xbf16>
    %c40 = arith.constant 40 : index
    %c0_41 = arith.constant 0 : index
    %33 = vector.load %arg7[%c40, %c0_41] : memref<72x384xbf16, #tpu.memory_space<vmem>>, vector<4x384xbf16>
    tpu.vector_store %arg7[%c40, %c0_41], %32 {strides = array<i32>} : memref<72x384xbf16, #tpu.memory_space<vmem>>, vector<4x384xbf16>,
    %c0_42 = arith.constant 0 : index
    %c0_43 = arith.constant 0 : index
    %c20_44 = arith.constant 20 : index
    %34 = vector.load %arg2[%c0_42, %c0_43, %c20_44] : memref<1x4x422xbf16, #tpu.memory_space<vmem>>, vector<1x4x384xbf16>
    %35 = vector.shape_cast %34 : vector<1x4x384xbf16> to vector<4x384xbf16>
    %c44 = arith.constant 44 : index
    %c0_45 = arith.constant 0 : index
    %36 = vector.load %arg7[%c44, %c0_45] : memref<72x384xbf16, #tpu.memory_space<vmem>>, vector<4x384xbf16>
    tpu.vector_store %arg7[%c44, %c0_45], %35 {strides = array<i32>} : memref<72x384xbf16, #tpu.memory_space<vmem>>, vector<4x384xbf16>,
    %c0_46 = arith.constant 0 : index
    %c0_47 = arith.constant 0 : index
    %c36_48 = arith.constant 36 : index
    %37 = vector.load %arg1[%c0_46, %c0_47, %c36_48] : memref<1x4x422xbf16, #tpu.memory_space<vmem>>, vector<1x4x384xbf16>
    %38 = vector.shape_cast %37 : vector<1x4x384xbf16> to vector<4x384xbf16>
    %c48 = arith.constant 48 : index
    %c0_49 = arith.constant 0 : index
    %39 = vector.load %arg7[%c48, %c0_49] : memref<72x384xbf16, #tpu.memory_space<vmem>>, vector<4x384xbf16>
    tpu.vector_store %arg7[%c48, %c0_49], %38 {strides = array<i32>} : memref<72x384xbf16, #tpu.memory_space<vmem>>, vector<4x384xbf16>,
    %c0_50 = arith.constant 0 : index
    %c0_51 = arith.constant 0 : index
    %c36_52 = arith.constant 36 : index
    %40 = vector.load %arg2[%c0_50, %c0_51, %c36_52] : memref<1x4x422xbf16, #tpu.memory_space<vmem>>, vector<1x4x384xbf16>
    %41 = vector.shape_cast %40 : vector<1x4x384xbf16> to vector<4x384xbf16>
    %c52 = arith.constant 52 : index
    %c0_53 = arith.constant 0 : index
    %42 = vector.load %arg7[%c52, %c0_53] : memref<72x384xbf16, #tpu.memory_space<vmem>>, vector<4x384xbf16>
    tpu.vector_store %arg7[%c52, %c0_53], %41 {strides = array<i32>} : memref<72x384xbf16, #tpu.memory_space<vmem>>, vector<4x384xbf16>,
    %c0_54 = arith.constant 0 : index
    %c0_55 = arith.constant 0 : index
    %c37 = arith.constant 37 : index
    %43 = vector.load %arg1[%c0_54, %c0_55, %c37] : memref<1x4x422xbf16, #tpu.memory_space<vmem>>, vector<1x4x384xbf16>
    %44 = vector.shape_cast %43 : vector<1x4x384xbf16> to vector<4x384xbf16>
    %c56 = arith.constant 56 : index
    %c0_56 = arith.constant 0 : index
    %45 = vector.load %arg7[%c56, %c0_56] : memref<72x384xbf16, #tpu.memory_space<vmem>>, vector<4x384xbf16>
    tpu.vector_store %arg7[%c56, %c0_56], %44 {strides = array<i32>} : memref<72x384xbf16, #tpu.memory_space<vmem>>, vector<4x384xbf16>,
    %c0_57 = arith.constant 0 : index
    %c0_58 = arith.constant 0 : index
    %c37_59 = arith.constant 37 : index
    %46 = vector.load %arg2[%c0_57, %c0_58, %c37_59] : memref<1x4x422xbf16, #tpu.memory_space<vmem>>, vector<1x4x384xbf16>
    %47 = vector.shape_cast %46 : vector<1x4x384xbf16> to vector<4x384xbf16>
    %c60 = arith.constant 60 : index
    %c0_60 = arith.constant 0 : index
    %48 = vector.load %arg7[%c60, %c0_60] : memref<72x384xbf16, #tpu.memory_space<vmem>>, vector<4x384xbf16>
    tpu.vector_store %arg7[%c60, %c0_60], %47 {strides = array<i32>} : memref<72x384xbf16, #tpu.memory_space<vmem>>, vector<4x384xbf16>,
    %c0_61 = arith.constant 0 : index
    %c0_62 = arith.constant 0 : index
    %c38 = arith.constant 38 : index
    %49 = vector.load %arg1[%c0_61, %c0_62, %c38] : memref<1x4x422xbf16, #tpu.memory_space<vmem>>, vector<1x4x384xbf16>
    %50 = vector.shape_cast %49 : vector<1x4x384xbf16> to vector<4x384xbf16>
    %c64 = arith.constant 64 : index
    %c0_63 = arith.constant 0 : index
    %51 = vector.load %arg7[%c64, %c0_63] : memref<72x384xbf16, #tpu.memory_space<vmem>>, vector<4x384xbf16>
    tpu.vector_store %arg7[%c64, %c0_63], %50 {strides = array<i32>} : memref<72x384xbf16, #tpu.memory_space<vmem>>, vector<4x384xbf16>,
    %c0_64 = arith.constant 0 : index
    %c0_65 = arith.constant 0 : index
    %c38_66 = arith.constant 38 : index
    %52 = vector.load %arg2[%c0_64, %c0_65, %c38_66] : memref<1x4x422xbf16, #tpu.memory_space<vmem>>, vector<1x4x384xbf16>
    %53 = vector.shape_cast %52 : vector<1x4x384xbf16> to vector<4x384xbf16>
    %c68 = arith.constant 68 : index
    %c0_67 = arith.constant 0 : index
    %54 = vector.load %arg7[%c68, %c0_67] : memref<72x384xbf16, #tpu.memory_space<vmem>>, vector<4x384xbf16>
    tpu.vector_store %arg7[%c68, %c0_67], %53 {strides = array<i32>} : memref<72x384xbf16, #tpu.memory_space<vmem>>, vector<4x384xbf16>,
    %c0_68 = arith.constant 0 : index
    %c0_69 = arith.constant 0 : index
    %55 = vector.load %arg3[%c0_68, %c0_69] : memref<4x72xbf16, #tpu.memory_space<vmem>>, vector<4x72xbf16>
    %c0_70 = arith.constant 0 : index
    %c0_71 = arith.constant 0 : index
    %56 = vector.load %arg7[%c0_70, %c0_71] : memref<72x384xbf16, #tpu.memory_space<vmem>>, vector<72x384xbf16>
    %cst = arith.constant dense<0.000000e+00> : vector<4x384xf32>
    %57 = tpu.matmul %55, %56, %cst {dimension_numbers = #tpu.dot_dimension_numbers<[1], [0], [0], [1], [0, 0, 1, 1], [], []>} : vector<4x72xbf16>, vector<72x384xbf16>, vector<4x384xf32> -> vector<4x384xf32>
    %58 = vector.broadcast %0 : vector<1x384xf32> to vector<4x384xf32>
    %59 = arith.mulf %57, %58 : vector<4x384xf32>
    %cst_72 = arith.constant dense<0.000000e+00> : vector<4xf32>
    %60 = vector.multi_reduction <add>, %59, %cst_72 [1] : vector<4x384xf32> to vector<4xf32>
    %61 = vector.shape_cast %60 : vector<4xf32> to vector<4x1xf32>
    %62 = arith.mulf %59, %57 : vector<4x384xf32>
    %cst_73 = arith.constant dense<0.000000e+00> : vector<4xf32>
    %63 = vector.multi_reduction <add>, %62, %cst_73 [1] : vector<4x384xf32> to vector<4xf32>
    %64 = vector.shape_cast %63 : vector<4xf32> to vector<4x1xf32>
    %65 = tpu.concatenate %61, %64 in 1 : vector<4x1xf32>, vector<4x1xf32> -> vector<4x2xf32>
    %66 = arith.truncf %57 : vector<4x384xf32> to vector<4x384xbf16>
    %c0_74 = arith.constant 0 : index
    %c0_75 = arith.constant 0 : index
    %c0_76 = arith.constant 0 : index
    %67 = vector.load %arg5[%c0_74, %c0_75, %c0_76] : memref<1x4x384xbf16, #tpu.memory_space<vmem>>, vector<1x4x384xbf16>
    %68 = vector.shape_cast %67 : vector<1x4x384xbf16> to vector<4x384xbf16>
    %69 = vector.shape_cast %66 : vector<4x384xbf16> to vector<1x4x384xbf16>
    tpu.vector_store %arg5[%c0_74, %c0_75, %c0_76], %69 {strides = array<i32>} : memref<1x4x384xbf16, #tpu.memory_space<vmem>>, vector<1x4x384xbf16>,
    %c0_77 = arith.constant 0 : index
    %c0_78 = arith.constant 0 : index
    %c0_79 = arith.constant 0 : index
    %70 = vector.load %arg6[%c0_77, %c0_78, %c0_79] : memref<1x4x2xf32, #tpu.memory_space<vmem>>, vector<1x4x2xf32>
    %71 = vector.shape_cast %70 : vector<1x4x2xf32> to vector<4x2xf32>
    %72 = vector.shape_cast %65 : vector<4x2xf32> to vector<1x4x2xf32>
    tpu.vector_store %arg6[%c0_77, %c0_78, %c0_79], %72 {strides = array<i32>} : memref<1x4x2xf32, #tpu.memory_space<vmem>>, vector<1x4x2xf32>,
    return
  }
  func.func @transform_0(%arg0: i32) -> (i32, i32, i32) {
    %c0_i32 = arith.constant 0 : i32
    %c0_i32_0 = arith.constant 0 : i32
    %c0_i32_1 = arith.constant 0 : i32
    return %arg0, %c0_i32, %c0_i32_0 : i32, i32, i32
  }
  func.func @transform_1(%arg0: i32) -> (i32, i32, i32) {
    %c0_i32 = arith.constant 0 : i32
    %c0_i32_0 = arith.constant 0 : i32
    %c0_i32_1 = arith.constant 0 : i32
    return %arg0, %c0_i32, %c0_i32_0 : i32, i32, i32
  }
  func.func @transform_2(%arg0: i32) -> (i32, i32) {
    %c0_i32 = arith.constant 0 : i32
    %c0_i32_0 = arith.constant 0 : i32
    %c0_i32_1 = arith.constant 0 : i32
    return %c0_i32, %c0_i32_0 : i32, i32
  }
  func.func @transform_3(%arg0: i32) -> (i32, i32) {
    %c0_i32 = arith.constant 0 : i32
    %c0_i32_0 = arith.constant 0 : i32
    %c0_i32_1 = arith.constant 0 : i32
    return %c0_i32, %c0_i32_0 : i32, i32
  }
  func.func @transform_4(%arg0: i32) -> (i32, i32, i32) {
    %c0_i32 = arith.constant 0 : i32
    %c0_i32_0 = arith.constant 0 : i32
    %c0_i32_1 = arith.constant 0 : i32
    return %arg0, %c0_i32, %c0_i32_0 : i32, i32, i32
  }
  func.func @transform_5(%arg0: i32) -> (i32, i32, i32) {
    %c0_i32 = arith.constant 0 : i32
    %c0_i32_0 = arith.constant 0 : i32
    %c0_i32_1 = arith.constant 0 : i32
    return %arg0, %c0_i32, %c0_i32_0 : i32, i32, i32
  }
}

module attributes {stable_mosaic.version = 11 : i64} {
  func.func @_bn_relu_kernel(%arg0: i32, %arg1: memref<1x4x384xbf16, #tpu.memory_space<vmem>>, %arg2: memref<4x1xf32, #tpu.memory_space<vmem>>, %arg3: memref<4x1xf32, #tpu.memory_space<vmem>>, %arg4: memref<1x4x384xf32, #tpu.memory_space<vmem>>) attributes {dimension_semantics = [#tpu.dimension_semantics<parallel>], iteration_bounds = array<i64: 2>, scalar_prefetch = 0 : i64, scratch_operands = 0 : i64, tpu.core_type = #tpu.core_type<tc>, window_params = [{transform_indices = @transform_0, window_bounds = array<i64: 1, 4, 384>}, {pipeline_mode = #tpu.pipeline_mode<synchronous>, transform_indices = @transform_1, window_bounds = array<i64: 4, 1>}, {pipeline_mode = #tpu.pipeline_mode<synchronous>, transform_indices = @transform_2, window_bounds = array<i64: 4, 1>}, {transform_indices = @transform_3, window_bounds = array<i64: 1, 4, 384>}]} {
    %c0 = arith.constant 0 : index
    %c0_0 = arith.constant 0 : index
    %c0_1 = arith.constant 0 : index
    %0 = vector.load %arg1[%c0, %c0_0, %c0_1] : memref<1x4x384xbf16, #tpu.memory_space<vmem>>, vector<1x4x384xbf16>
    %1 = vector.shape_cast %0 : vector<1x4x384xbf16> to vector<4x384xbf16>
    %2 = arith.extf %1 : vector<4x384xbf16> to vector<4x384xf32>
    %c0_2 = arith.constant 0 : index
    %c0_3 = arith.constant 0 : index
    %3 = vector.load %arg2[%c0_2, %c0_3] : memref<4x1xf32, #tpu.memory_space<vmem>>, vector<4x1xf32>
    %4 = vector.broadcast %3 : vector<4x1xf32> to vector<4x384xf32>
    %5 = arith.mulf %2, %4 : vector<4x384xf32>
    %c0_4 = arith.constant 0 : index
    %c0_5 = arith.constant 0 : index
    %6 = vector.load %arg3[%c0_4, %c0_5] : memref<4x1xf32, #tpu.memory_space<vmem>>, vector<4x1xf32>
    %7 = vector.broadcast %6 : vector<4x1xf32> to vector<4x384xf32>
    %8 = arith.addf %5, %7 : vector<4x384xf32>
    %cst = arith.constant 0.000000e+00 : f32
    %9 = vector.broadcast %cst : f32 to vector<4x384xf32>
    %10 = arith.maximumf %8, %9 : vector<4x384xf32>
    %c0_6 = arith.constant 0 : index
    %c0_7 = arith.constant 0 : index
    %c0_8 = arith.constant 0 : index
    %11 = vector.load %arg4[%c0_6, %c0_7, %c0_8] : memref<1x4x384xf32, #tpu.memory_space<vmem>>, vector<1x4x384xf32>
    %12 = vector.shape_cast %11 : vector<1x4x384xf32> to vector<4x384xf32>
    %13 = vector.shape_cast %10 : vector<4x384xf32> to vector<1x4x384xf32>
    tpu.vector_store %arg4[%c0_6, %c0_7, %c0_8], %13 {strides = array<i32>} : memref<1x4x384xf32, #tpu.memory_space<vmem>>, vector<1x4x384xf32>,
    return
  }
  func.func @transform_0(%arg0: i32) -> (i32, i32, i32) {
    %c0_i32 = arith.constant 0 : i32
    %c0_i32_0 = arith.constant 0 : i32
    %c0_i32_1 = arith.constant 0 : i32
    return %arg0, %c0_i32, %c0_i32_0 : i32, i32, i32
  }
  func.func @transform_1(%arg0: i32) -> (i32, i32) {
    %c0_i32 = arith.constant 0 : i32
    %c0_i32_0 = arith.constant 0 : i32
    %c0_i32_1 = arith.constant 0 : i32
    return %c0_i32, %c0_i32_0 : i32, i32
  }
  func.func @transform_2(%arg0: i32) -> (i32, i32) {
    %c0_i32 = arith.constant 0 : i32
    %c0_i32_0 = arith.constant 0 : i32
    %c0_i32_1 = arith.constant 0 : i32
    return %c0_i32, %c0_i32_0 : i32, i32
  }
  func.func @transform_3(%arg0: i32) -> (i32, i32, i32) {
    %c0_i32 = arith.constant 0 : i32
    %c0_i32_0 = arith.constant 0 : i32
    %c0_i32_1 = arith.constant 0 : i32
    return %arg0, %c0_i32, %c0_i32_0 : i32, i32, i32
  }
}

module attributes {stable_mosaic.version = 11 : i64} {
  func.func @_conv2_kernel(%arg0: i32, %arg1: memref<1x4x384xbf16, #tpu.memory_space<vmem>>, %arg2: memref<4x36xbf16, #tpu.memory_space<vmem>>, %arg3: memref<4x1xf32, #tpu.memory_space<vmem>>, %arg4: memref<4x1xf32, #tpu.memory_space<vmem>>, %arg5: memref<1x384xf32, #tpu.memory_space<vmem>>, %arg6: memref<1x4x384xbf16, #tpu.memory_space<vmem>>, %arg7: memref<1x4x2xf32, #tpu.memory_space<vmem>>, %arg8: memref<4x422xbf16, #tpu.memory_space<vmem>>, %arg9: memref<36x384xbf16, #tpu.memory_space<vmem>>) attributes {dimension_semantics = [#tpu.dimension_semantics<parallel>], iteration_bounds = array<i64: 2>, scalar_prefetch = 0 : i64, scratch_operands = 2 : i64, tpu.core_type = #tpu.core_type<tc>, window_params = [{transform_indices = @transform_0, window_bounds = array<i64: 1, 4, 384>}, {pipeline_mode = #tpu.pipeline_mode<synchronous>, transform_indices = @transform_1, window_bounds = array<i64: 4, 36>}, {pipeline_mode = #tpu.pipeline_mode<synchronous>, transform_indices = @transform_2, window_bounds = array<i64: 4, 1>}, {pipeline_mode = #tpu.pipeline_mode<synchronous>, transform_indices = @transform_3, window_bounds = array<i64: 4, 1>}, {pipeline_mode = #tpu.pipeline_mode<synchronous>, transform_indices = @transform_4, window_bounds = array<i64: 1, 384>}, {transform_indices = @transform_5, window_bounds = array<i64: 1, 4, 384>}, {transform_indices = @transform_6, window_bounds = array<i64: 1, 4, 2>}]} {
    %c0 = arith.constant 0 : index
    %c0_0 = arith.constant 0 : index
    %0 = vector.load %arg5[%c0, %c0_0] : memref<1x384xf32, #tpu.memory_space<vmem>>, vector<1x384xf32>
    %c0_1 = arith.constant 0 : index
    %c0_2 = arith.constant 0 : index
    %c0_3 = arith.constant 0 : index
    %1 = vector.load %arg1[%c0_1, %c0_2, %c0_3] : memref<1x4x384xbf16, #tpu.memory_space<vmem>>, vector<1x4x384xbf16>
    %2 = vector.shape_cast %1 : vector<1x4x384xbf16> to vector<4x384xbf16>
    %3 = arith.extf %2 : vector<4x384xbf16> to vector<4x384xf32>
    %c0_4 = arith.constant 0 : index
    %c0_5 = arith.constant 0 : index
    %4 = vector.load %arg3[%c0_4, %c0_5] : memref<4x1xf32, #tpu.memory_space<vmem>>, vector<4x1xf32>
    %5 = vector.broadcast %4 : vector<4x1xf32> to vector<4x384xf32>
    %6 = arith.mulf %3, %5 : vector<4x384xf32>
    %c0_6 = arith.constant 0 : index
    %c0_7 = arith.constant 0 : index
    %7 = vector.load %arg4[%c0_6, %c0_7] : memref<4x1xf32, #tpu.memory_space<vmem>>, vector<4x1xf32>
    %8 = vector.broadcast %7 : vector<4x1xf32> to vector<4x384xf32>
    %9 = arith.addf %6, %8 : vector<4x384xf32>
    %cst = arith.constant 0.000000e+00 : f32
    %10 = vector.broadcast %cst : f32 to vector<4x384xf32>
    %11 = arith.maximumf %9, %10 : vector<4x384xf32>
    %12 = vector.broadcast %0 : vector<1x384xf32> to vector<4x384xf32>
    %13 = arith.mulf %11, %12 : vector<4x384xf32>
    %cst_8 = arith.constant 0.000000e+00 : bf16
    %14 = vector.broadcast %cst_8 : bf16 to vector<4x19xbf16>
    %c0_9 = arith.constant 0 : index
    %c0_10 = arith.constant 0 : index
    %15 = vector.load %arg8[%c0_9, %c0_10] : memref<4x422xbf16, #tpu.memory_space<vmem>>, vector<4x19xbf16>
    tpu.vector_store %arg8[%c0_9, %c0_10], %14 {strides = array<i32>} : memref<4x422xbf16, #tpu.memory_space<vmem>>, vector<4x19xbf16>,
    %cst_11 = arith.constant 0.000000e+00 : bf16
    %16 = vector.broadcast %cst_11 : bf16 to vector<4x19xbf16>
    %c0_12 = arith.constant 0 : index
    %c403 = arith.constant 403 : index
    %17 = vector.load %arg8[%c0_12, %c403] : memref<4x422xbf16, #tpu.memory_space<vmem>>, vector<4x19xbf16>
    tpu.vector_store %arg8[%c0_12, %c403], %16 {strides = array<i32>} : memref<4x422xbf16, #tpu.memory_space<vmem>>, vector<4x19xbf16>,
    %18 = arith.truncf %13 : vector<4x384xf32> to vector<4x384xbf16>
    %c0_13 = arith.constant 0 : index
    %c19 = arith.constant 19 : index
    %19 = vector.load %arg8[%c0_13, %c19] : memref<4x422xbf16, #tpu.memory_space<vmem>>, vector<4x384xbf16>
    tpu.vector_store %arg8[%c0_13, %c19], %18 {strides = array<i32>} : memref<4x422xbf16, #tpu.memory_space<vmem>>, vector<4x384xbf16>,
    %c0_14 = arith.constant 0 : index
    %c0_15 = arith.constant 0 : index
    %20 = vector.load %arg8[%c0_14, %c0_15] : memref<4x422xbf16, #tpu.memory_space<vmem>>, vector<4x384xbf16>
    %c0_16 = arith.constant 0 : index
    %c0_17 = arith.constant 0 : index
    %21 = vector.load %arg9[%c0_16, %c0_17] : memref<36x384xbf16, #tpu.memory_space<vmem>>, vector<4x384xbf16>
    tpu.vector_store %arg9[%c0_16, %c0_17], %20 {strides = array<i32>} : memref<36x384xbf16, #tpu.memory_space<vmem>>, vector<4x384xbf16>,
    %c0_18 = arith.constant 0 : index
    %c1 = arith.constant 1 : index
    %22 = vector.load %arg8[%c0_18, %c1] : memref<4x422xbf16, #tpu.memory_space<vmem>>, vector<4x384xbf16>
    %c4 = arith.constant 4 : index
    %c0_19 = arith.constant 0 : index
    %23 = vector.load %arg9[%c4, %c0_19] : memref<36x384xbf16, #tpu.memory_space<vmem>>, vector<4x384xbf16>
    tpu.vector_store %arg9[%c4, %c0_19], %22 {strides = array<i32>} : memref<36x384xbf16, #tpu.memory_space<vmem>>, vector<4x384xbf16>,
    %c0_20 = arith.constant 0 : index
    %c2 = arith.constant 2 : index
    %24 = vector.load %arg8[%c0_20, %c2] : memref<4x422xbf16, #tpu.memory_space<vmem>>, vector<4x384xbf16>
    %c8 = arith.constant 8 : index
    %c0_21 = arith.constant 0 : index
    %25 = vector.load %arg9[%c8, %c0_21] : memref<36x384xbf16, #tpu.memory_space<vmem>>, vector<4x384xbf16>
    tpu.vector_store %arg9[%c8, %c0_21], %24 {strides = array<i32>} : memref<36x384xbf16, #tpu.memory_space<vmem>>, vector<4x384xbf16>,
    %c0_22 = arith.constant 0 : index
    %c18 = arith.constant 18 : index
    %26 = vector.load %arg8[%c0_22, %c18] : memref<4x422xbf16, #tpu.memory_space<vmem>>, vector<4x384xbf16>
    %c12 = arith.constant 12 : index
    %c0_23 = arith.constant 0 : index
    %27 = vector.load %arg9[%c12, %c0_23] : memref<36x384xbf16, #tpu.memory_space<vmem>>, vector<4x384xbf16>
    tpu.vector_store %arg9[%c12, %c0_23], %26 {strides = array<i32>} : memref<36x384xbf16, #tpu.memory_space<vmem>>, vector<4x384xbf16>,
    %c0_24 = arith.constant 0 : index
    %c19_25 = arith.constant 19 : index
    %28 = vector.load %arg8[%c0_24, %c19_25] : memref<4x422xbf16, #tpu.memory_space<vmem>>, vector<4x384xbf16>
    %c16 = arith.constant 16 : index
    %c0_26 = arith.constant 0 : index
    %29 = vector.load %arg9[%c16, %c0_26] : memref<36x384xbf16, #tpu.memory_space<vmem>>, vector<4x384xbf16>
    tpu.vector_store %arg9[%c16, %c0_26], %28 {strides = array<i32>} : memref<36x384xbf16, #tpu.memory_space<vmem>>, vector<4x384xbf16>,
    %c0_27 = arith.constant 0 : index
    %c20 = arith.constant 20 : index
    %30 = vector.load %arg8[%c0_27, %c20] : memref<4x422xbf16, #tpu.memory_space<vmem>>, vector<4x384xbf16>
    %c20_28 = arith.constant 20 : index
    %c0_29 = arith.constant 0 : index
    %31 = vector.load %arg9[%c20_28, %c0_29] : memref<36x384xbf16, #tpu.memory_space<vmem>>, vector<4x384xbf16>
    tpu.vector_store %arg9[%c20_28, %c0_29], %30 {strides = array<i32>} : memref<36x384xbf16, #tpu.memory_space<vmem>>, vector<4x384xbf16>,
    %c0_30 = arith.constant 0 : index
    %c36 = arith.constant 36 : index
    %32 = vector.load %arg8[%c0_30, %c36] : memref<4x422xbf16, #tpu.memory_space<vmem>>, vector<4x384xbf16>
    %c24 = arith.constant 24 : index
    %c0_31 = arith.constant 0 : index
    %33 = vector.load %arg9[%c24, %c0_31] : memref<36x384xbf16, #tpu.memory_space<vmem>>, vector<4x384xbf16>
    tpu.vector_store %arg9[%c24, %c0_31], %32 {strides = array<i32>} : memref<36x384xbf16, #tpu.memory_space<vmem>>, vector<4x384xbf16>,
    %c0_32 = arith.constant 0 : index
    %c37 = arith.constant 37 : index
    %34 = vector.load %arg8[%c0_32, %c37] : memref<4x422xbf16, #tpu.memory_space<vmem>>, vector<4x384xbf16>
    %c28 = arith.constant 28 : index
    %c0_33 = arith.constant 0 : index
    %35 = vector.load %arg9[%c28, %c0_33] : memref<36x384xbf16, #tpu.memory_space<vmem>>, vector<4x384xbf16>
    tpu.vector_store %arg9[%c28, %c0_33], %34 {strides = array<i32>} : memref<36x384xbf16, #tpu.memory_space<vmem>>, vector<4x384xbf16>,
    %c0_34 = arith.constant 0 : index
    %c38 = arith.constant 38 : index
    %36 = vector.load %arg8[%c0_34, %c38] : memref<4x422xbf16, #tpu.memory_space<vmem>>, vector<4x384xbf16>
    %c32 = arith.constant 32 : index
    %c0_35 = arith.constant 0 : index
    %37 = vector.load %arg9[%c32, %c0_35] : memref<36x384xbf16, #tpu.memory_space<vmem>>, vector<4x384xbf16>
    tpu.vector_store %arg9[%c32, %c0_35], %36 {strides = array<i32>} : memref<36x384xbf16, #tpu.memory_space<vmem>>, vector<4x384xbf16>,
    %c0_36 = arith.constant 0 : index
    %c0_37 = arith.constant 0 : index
    %38 = vector.load %arg2[%c0_36, %c0_37] : memref<4x36xbf16, #tpu.memory_space<vmem>>, vector<4x36xbf16>
    %c0_38 = arith.constant 0 : index
    %c0_39 = arith.constant 0 : index
    %39 = vector.load %arg9[%c0_38, %c0_39] : memref<36x384xbf16, #tpu.memory_space<vmem>>, vector<36x384xbf16>
    %cst_40 = arith.constant dense<0.000000e+00> : vector<4x384xf32>
    %40 = tpu.matmul %38, %39, %cst_40 {dimension_numbers = #tpu.dot_dimension_numbers<[1], [0], [0], [1], [0, 0, 1, 1], [], []>} : vector<4x36xbf16>, vector<36x384xbf16>, vector<4x384xf32> -> vector<4x384xf32>
    %41 = vector.broadcast %0 : vector<1x384xf32> to vector<4x384xf32>
    %42 = arith.mulf %40, %41 : vector<4x384xf32>
    %cst_41 = arith.constant dense<0.000000e+00> : vector<4xf32>
    %43 = vector.multi_reduction <add>, %42, %cst_41 [1] : vector<4x384xf32> to vector<4xf32>
    %44 = vector.shape_cast %43 : vector<4xf32> to vector<4x1xf32>
    %45 = arith.mulf %42, %40 : vector<4x384xf32>
    %cst_42 = arith.constant dense<0.000000e+00> : vector<4xf32>
    %46 = vector.multi_reduction <add>, %45, %cst_42 [1] : vector<4x384xf32> to vector<4xf32>
    %47 = vector.shape_cast %46 : vector<4xf32> to vector<4x1xf32>
    %48 = tpu.concatenate %44, %47 in 1 : vector<4x1xf32>, vector<4x1xf32> -> vector<4x2xf32>
    %49 = arith.truncf %40 : vector<4x384xf32> to vector<4x384xbf16>
    %c0_43 = arith.constant 0 : index
    %c0_44 = arith.constant 0 : index
    %c0_45 = arith.constant 0 : index
    %50 = vector.load %arg6[%c0_43, %c0_44, %c0_45] : memref<1x4x384xbf16, #tpu.memory_space<vmem>>, vector<1x4x384xbf16>
    %51 = vector.shape_cast %50 : vector<1x4x384xbf16> to vector<4x384xbf16>
    %52 = vector.shape_cast %49 : vector<4x384xbf16> to vector<1x4x384xbf16>
    tpu.vector_store %arg6[%c0_43, %c0_44, %c0_45], %52 {strides = array<i32>} : memref<1x4x384xbf16, #tpu.memory_space<vmem>>, vector<1x4x384xbf16>,
    %c0_46 = arith.constant 0 : index
    %c0_47 = arith.constant 0 : index
    %c0_48 = arith.constant 0 : index
    %53 = vector.load %arg7[%c0_46, %c0_47, %c0_48] : memref<1x4x2xf32, #tpu.memory_space<vmem>>, vector<1x4x2xf32>
    %54 = vector.shape_cast %53 : vector<1x4x2xf32> to vector<4x2xf32>
    %55 = vector.shape_cast %48 : vector<4x2xf32> to vector<1x4x2xf32>
    tpu.vector_store %arg7[%c0_46, %c0_47, %c0_48], %55 {strides = array<i32>} : memref<1x4x2xf32, #tpu.memory_space<vmem>>, vector<1x4x2xf32>,
    return
  }
  func.func @transform_0(%arg0: i32) -> (i32, i32, i32) {
    %c0_i32 = arith.constant 0 : i32
    %c0_i32_0 = arith.constant 0 : i32
    %c0_i32_1 = arith.constant 0 : i32
    return %arg0, %c0_i32, %c0_i32_0 : i32, i32, i32
  }
  func.func @transform_1(%arg0: i32) -> (i32, i32) {
    %c0_i32 = arith.constant 0 : i32
    %c0_i32_0 = arith.constant 0 : i32
    %c0_i32_1 = arith.constant 0 : i32
    return %c0_i32, %c0_i32_0 : i32, i32
  }
  func.func @transform_2(%arg0: i32) -> (i32, i32) {
    %c0_i32 = arith.constant 0 : i32
    %c0_i32_0 = arith.constant 0 : i32
    %c0_i32_1 = arith.constant 0 : i32
    return %c0_i32, %c0_i32_0 : i32, i32
  }
  func.func @transform_3(%arg0: i32) -> (i32, i32) {
    %c0_i32 = arith.constant 0 : i32
    %c0_i32_0 = arith.constant 0 : i32
    %c0_i32_1 = arith.constant 0 : i32
    return %c0_i32, %c0_i32_0 : i32, i32
  }
  func.func @transform_4(%arg0: i32) -> (i32, i32) {
    %c0_i32 = arith.constant 0 : i32
    %c0_i32_0 = arith.constant 0 : i32
    %c0_i32_1 = arith.constant 0 : i32
    return %c0_i32, %c0_i32_0 : i32, i32
  }
  func.func @transform_5(%arg0: i32) -> (i32, i32, i32) {
    %c0_i32 = arith.constant 0 : i32
    %c0_i32_0 = arith.constant 0 : i32
    %c0_i32_1 = arith.constant 0 : i32
    return %arg0, %c0_i32, %c0_i32_0 : i32, i32, i32
  }
  func.func @transform_6(%arg0: i32) -> (i32, i32, i32) {
    %c0_i32 = arith.constant 0 : i32
    %c0_i32_0 = arith.constant 0 : i32
    %c0_i32_1 = arith.constant 0 : i32
    return %arg0, %c0_i32, %c0_i32_0 : i32, i32, i32
  }
}

</mosaic_0001>

<llo_original>
// kernel: tile.0
$region0: #{tile.0}
  %s0 = inlined_call_operand.vmem [shape: f32[4,4], index: 0, kind: input, shape index: {}]
  %s1 = inlined_call_operand.vmem [shape: f32[16,1], index: 1, kind: output, shape index: {}]
  $region1: #{tile.0} parent=0
    #allocation0 [shape = 'u8[4096]{0}', space=vmem, size = 0x1000, scoped, tag = 'scoped mem for input reshape']
    %s3 = sshll.u32 1, 4
    %s4 = ssub.s32 %s3, 1
    %v5 = vld [vmem:[%s0] sm:%s4]
    %6 = vst [vmem:[#allocation0] sm:%s4] %v5
    %v7 = vld [vmem:[#allocation0] sm:$0xf]
    %vm8 = vcmask 7168
    %9 = vst.msk [vmem:[%s1] ss:$4 sm:$0xf] %vm8, %v7
    %v10 = vld [vmem:[#allocation0] sm:$0xf]
    %11 = vrot.lane.b32.xlu0 %v10, 127
    %v12 = vpop.permute.xlu0 %11
    %vm13 = vcmask 7168
    %s14 = scalar_lea.vmem %s1, 1
    %15 = vst.msk [vmem:[%s14] ss:$4 sm:$0xf] %vm13, %v12
    %v16 = vld [vmem:[#allocation0] sm:$0xf]
    %17 = vrot.lane.b32.xlu0 %v16, 126
    %v18 = vpop.permute.xlu0 %17
    %vm19 = vcmask 7168
    %s20 = scalar_lea.vmem %s1, 2
    %21 = vst.msk [vmem:[%s20] ss:$4 sm:$0xf] %vm19, %v18
    %v22 = vld [vmem:[#allocation0] sm:$0xf]
    %23 = vrot.lane.b32.xlu0 %v22, 125
    %v24 = vpop.permute.xlu0 %23
    %vm25 = vcmask 7168
    %s26 = scalar_lea.vmem %s1, 3
    %27 = vst.msk [vmem:[%s26] ss:$4 sm:$0xf] %vm25, %v24

// kernel: tile.8
$region0: #{tile.8}
  #allocation0 [shape = 's32[1]{0}', space=sflag, size = 0x4, scoped, tag = 'scoped memory for tile.8']
  %s0 = inlined_call_operand.vmem [shape: f32[4], index: 0, kind: input, shape index: {}]
  %s1 = inlined_call_operand.vmem [shape: f32[4,4], index: 1, kind: output, shape index: {}]
  // Predicated region
  $region2: #{tile.8} parent=0 // pred_check
    _
  $region3: #{tile.8} parent=0 // pred_check_branch
    %3 = sbr.rel (0) target = $region5
  $region4: #{tile.8} parent=0 // pred_region
    _
  $region5: #{tile.8} parent=0 // pred_fallthru
    _
  %v4 = vld [vmem:[%s0] ss:$0 sm:$0xff]
  %5 = vst [vmem:[%s1] sm:$0xf] %v4

// kernel: decoder_block_forward.4
$region0: #{decoder_block_forward.4}
  #allocation0 [shape = 'u32[]', space=smem, size = 0x4, offset = 0x4, fixed_abs, tag = 'smem constant byte address 0x4 - core index']
  #allocation1 [shape = 'u32[144,128]{1,0:T(1,128)}', space=vmem, size = 0x12000, scoped, tag = 'internal scratch']
  %s0 = inlined_call_operand.vmem [shape: bf16[2,8,64], index: 0, kind: input, shape index: {}]
  %s1 = inlined_call_operand.vmem [shape: bf16[16,8], index: 1, kind: input, shape index: {}]
  %s2 = inlined_call_operand.vmem [shape: f32[16,1], index: 2, kind: input, shape index: {}]
  %s3 = inlined_call_operand.vmem [shape: bf16[2,16,64], index: 3, kind: output, shape index: {}]
  %s4 = sld [smem:[#allocation0]]
  $region45: #{decoder_block_forward.4} parent=0
    _
  %s6 = ssub.s32 1, %s4
  %s7 = scalar_select 0, %s6, %s4
  loop: start=0, step=1, limit=4
  $region2: #{decoder_block_forward.4} parent=0 // loop_pre_header
    _
  $region3: #{decoder_block_forward.4} parent=0 // loop_header
    %s9 = sphi 0, %s13
    %p10 = scmp.ge.s32.totalorder %s9, 4
    %s19 = sphi 0, %s21
    %s22 = sphi 0, %s19
    %s23 = sphi 0, %s22
    %s39 = sphi 0, %s23
    %s43 = sphi 0, %s43
    %s45 = sphi 0, %s43
    %s46 = sphi 0, %s45
    %s60 = sphi 0, %s46
    %s64 = sphi 0, %s64
    %s66 = sphi 0, %s64
    %s67 = sphi 0, %s66
    %s81 = sphi 0, %s67
    %s87 = sphi 0, %s89
    %s90 = sphi 0, %s87
    %s91 = sphi 0, %s90
    %s107 = sphi 0, %s91
  $region4: #{decoder_block_forward.4} parent=0 // loop_header_branch
    %12 = sbr.rel (%p10) target = $region8
  $region5: #{decoder_block_forward.4} parent=0 // loop_body
    %s14 = ssub.s32 %s9, 1
    %s15 = ssub.s32 %s9, 2
    %s16 = sadd.s32 %s9, 1
    %s17 = ssub.s32 %s9, %s16
    %p18 = scmp.eq.s32.totalorder %s17, 0
    %s20 = sadd.s32 %s19, 1
    %s21 = scalar_select %p18, %s19, %s20
    %p24 = pneg %p18
    %p25 = scmp.eq.s32.totalorder %s9, 1
    %p26 = por %p24, %p25
    %p27 = scmp.ne.s32.totalorder %s19, %s22
    %p28 = scmp.eq.s32.totalorder %s9, 0
    %p29 = por %p27, %p28
    %p30 = scmp.ne.s32.totalorder %s19, %s22
    %p31 = scmp.eq.s32.totalorder %s14, 1
    %p32 = por %p30, %p31
    %p33 = scmp.ne.s32.totalorder %s22, %s23
    %p34 = scmp.eq.s32.totalorder %s14, 0
    %p35 = por %p33, %p34
    %p36 = scmp.ne.s32.totalorder %s22, %s23
    %p37 = scmp.eq.s32.totalorder %s15, 1
    %p38 = por %p36, %p37
    %p40 = scmp.ne.s32.totalorder %s23, %s39
    %p41 = scmp.eq.s32.totalorder %s15, 0
    %p42 = por %p40, %p41
    %s44 = sadd.s32 %s43, 1
    %p47 = scmp.eq.s32.totalorder %s9, 1
    %p48 = scmp.ne.s32.totalorder %s43, %s45
    %p49 = scmp.eq.s32.totalorder %s9, 0
    %p50 = por %p48, %p49
    %p51 = scmp.ne.s32.totalorder %s43, %s45
    %p52 = scmp.eq.s32.totalorder %s14, 1
    %p53 = por %p51, %p52
    %p54 = scmp.ne.s32.totalorder %s45, %s46
    %p55 = scmp.eq.s32.totalorder %s14, 0
    %p56 = por %p54, %p55
    %p57 = scmp.ne.s32.totalorder %s45, %s46
    %p58 = scmp.eq.s32.totalorder %s15, 1
    %p59 = por %p57, %p58
    %p61 = scmp.ne.s32.totalorder %s46, %s60
    %p62 = scmp.eq.s32.totalorder %s15, 0
    %p63 = por %p61, %p62
    %s65 = sadd.s32 %s64, 1
    %p68 = scmp.eq.s32.totalorder %s9, 1
    %p69 = scmp.ne.s32.totalorder %s64, %s66
    %p70 = scmp.eq.s32.totalorder %s9, 0
    %p71 = por %p69, %p70
    %p72 = scmp.ne.s32.totalorder %s64, %s66
    %p73 = scmp.eq.s32.totalorder %s14, 1
    %p74 = por %p72, %p73
    %p75 = scmp.ne.s32.totalorder %s66, %s67
    %p76 = scmp.eq.s32.totalorder %s14, 0
    %p77 = por %p75, %p76
    %p78 = scmp.ne.s32.totalorder %s66, %s67
    %p79 = scmp.eq.s32.totalorder %s15, 1
    %p80 = por %p78, %p79
    %p82 = scmp.ne.s32.totalorder %s67, %s81
    %p83 = scmp.eq.s32.totalorder %s15, 0
    %p84 = por %p82, %p83
    %s85 = ssub.s32 %s9, %s16
    %p86 = scmp.eq.s32.totalorder %s85, 0
    %s88 = sadd.s32 %s87, 1
    %s89 = scalar_select %p86, %s87, %s88
    %p92 = pneg %p86
    %p93 = scmp.eq.s32.totalorder %s9, 1
    %p94 = por %p92, %p93
    %p95 = scmp.ne.s32.totalorder %s87, %s90
    %p96 = scmp.eq.s32.totalorder %s9, 0
    %p97 = por %p95, %p96
    %p98 = scmp.ne.s32.totalorder %s87, %s90
    %p99 = scmp.eq.s32.totalorder %s14, 1
    %p100 = por %p98, %p99
    %p101 = scmp.ne.s32.totalorder %s90, %s91
    %p102 = scmp.eq.s32.totalorder %s14, 0
    %p103 = por %p101, %p102
    %p104 = scmp.ne.s32.totalorder %s90, %s91
    %p105 = scmp.eq.s32.totalorder %s15, 1
    %p106 = por %p104, %p105
    %p108 = scmp.ne.s32.totalorder %s91, %s107
    %p109 = scmp.eq.s32.totalorder %s15, 0
    %p110 = por %p108, %p109
    %p111 = scmp.le.s32.totalorder 1, %s9
    %p112 = scmp.lt.s32.totalorder %s9, 3
    %p113 = pnand %p111, %p112
    %p114 = pneg %p113
    // Predicated region
    $region9: #{decoder_block_forward.4} parent=5 // pred_check
      _
    $region10: #{decoder_block_forward.4} parent=5 // pred_check_branch
      %116 = sbr.rel (%p113) target = $region12
    $region11: #{decoder_block_forward.4} parent=5 // pred_region
      %s117 = ssub.s32 %s9, 1
      // Predicated region
      $region13: #{decoder_block_forward.4} parent=11 // pred_check
        %p118 = pneg %p56
      $region14: #{decoder_block_forward.4} parent=11 // pred_check_branch
        %120 = sbr.rel (%p118) target = $region16
      $region15: #{decoder_block_forward.4} parent=11 // pred_region
        _
      $region16: #{decoder_block_forward.4} parent=11 // pred_fallthru
        _
      // Predicated region
      $region17: #{decoder_block_forward.4} parent=11 // pred_check
        %p121 = pneg %p77
      $region18: #{decoder_block_forward.4} parent=11 // pred_check_branch
        %123 = sbr.rel (%p121) target = $region20
      $region19: #{decoder_block_forward.4} parent=11 // pred_region
        _
      $region20: #{decoder_block_forward.4} parent=11 // pred_fallthru
        _
    $region12: #{decoder_block_forward.4} parent=5 // pred_fallthru
      _
    %p124 = scmp.lt.s32.totalorder %s9, 2
    // Predicated region
    $region21: #{decoder_block_forward.4} parent=5 // pred_check
      %p125 = pneg %p124
    $region22: #{decoder_block_forward.4} parent=5 // pred_check_branch
      %127 = sbr.rel (%p125) target = $region24
    $region23: #{decoder_block_forward.4} parent=5 // pred_region
      // Predicated region
      $region25: #{decoder_block_forward.4} parent=23 // pred_check
        %p128 = pneg %p29
      $region26: #{decoder_block_forward.4} parent=23 // pred_check_branch
        %130 = sbr.rel (%p128) target = $region28
      $region27: #{decoder_block_forward.4} parent=23 // pred_region
        %p131 = scmp.lt.s32.totalorder %s9, 1
        %s132 = scalar_select %p131, %s9, 1
        %s133 = smul.addr %s132, 4
        %s134 = scalar_lea.vmem %s0, %s133
      $region28: #{decoder_block_forward.4} parent=23 // pred_fallthru
        _
    $region24: #{decoder_block_forward.4} parent=5 // pred_fallthru
      _
    %p135 = scmp.le.s32.totalorder 1, %s9
    %p136 = scmp.lt.s32.totalorder %s9, 3
    %p137 = pnand %p135, %p136
    %p138 = pneg %p137
    // Predicated region
    $region29: #{decoder_block_forward.4} parent=5 // pred_check
      _
    $region30: #{decoder_block_forward.4} parent=5 // pred_check_branch
      %140 = sbr.rel (%p137) target = $region32
    $region31: #{decoder_block_forward.4} parent=5 // pred_region
      %s141 = ssub.s32 %s9, 1
      %p142 = scmp.lt.s32.totalorder %s14, 1
      %s143 = scalar_select %p142, %s14, 1
      %s144 = smul.addr %s143, 4
      %s145 = scalar_lea.vmem %s0, %s144
      %p146 = pneg %p35
      %p147 = pneg %p32
      %p148 = pneg %p56
      %p149 = pneg %p53
      %p150 = pneg %p77
      %p151 = pneg %p74
      %p152 = pneg %p103
      %p153 = pneg %p100
      %p154 = scmp.lt.s32.totalorder %s14, 1
      %s155 = scalar_select %p154, %s14, 1
      %s156 = smul.addr %s155, 2
      %s157 = smul.addr %s156, 4
      %s158 = scalar_lea.vmem %s3, %s157
      %p159 = scmp.lt.s32.totalorder %s14, 1
      %s160 = scalar_select %p159, %s14, 1
      %s161 = smul.addr %s160, 4
      %s162 = scalar_lea.vmem %s0, %s161
      %p163 = scmp.lt.s32.totalorder %s14, 1
      %s164 = scalar_select %p163, %s14, 1
      %s165 = smul.addr %s164, 2
      %s166 = smul.addr %s165, 4
      %s167 = scalar_lea.vmem %s3, %s166
      %v169 = vld [vmem:[%s1] sm:$0xf]
      %v170 = vld [vmem:[%s1 + $0x4] sm:$0xf]
      %v171 = vld [vmem:[%s162] sm:$0xf]
      %v172 = vld [vmem:[%s2] sm:$0xff]
      %v173 = vld [vmem:[%s2 + $0x8] sm:$0xff]
      %175 = vset.pattern.permute.xlu0 0
      %176 = vperm.xlu0 %175, %v172
      %v177 = vpop.permute.xlu0 %176
      %180 = vset.pattern.permute.xlu0 0
      %181 = vperm.xlu0 %180, %v173
      %v182 = vpop.permute.xlu0 %181
      %v186 = vunpack.c.l.b16 %v169
      %v187 = vunpack.c.l.b16 %v170
      %v188 = vpack.c.b16 %v187, %v186
      %vm189 = vcmask 64512
      %v191 = vsel %vm189, %v188, 0
      %vm193 = vcmask 1043456
      %v195 = vsel %vm193, %v171, 0
      %197 = vmatprep.subr.bf16.mxu0 0
      %198 = vmatpush1.bf16.msra.mxu0 0
      %199 = vmatprep.subr.bf16.mxu0 0
      %200 = vmatpush1.bf16.msra.mxu0 0
      %201 = vmatprep.subr.bf16.mxu0 0
      %202 = vmatpush1.bf16.msra.mxu0 0
      %203 = vmatprep.subr.bf16.mxu0 0
      %204 = vmatpush1.bf16.msra.mxu0 0
      %205 = vmatprep.subr.bf16.mxu0 0
      %206 = vmatpush1.bf16.msra.mxu0 0
      %207 = vmatprep.subr.bf16.mxu0 0
      %208 = vmatpush1.bf16.msra.mxu0 0
      %209 = vmatprep.subr.bf16.mxu0 0
      %210 = vmatpush1.bf16.msra.mxu0 0
      %211 = vmatprep.subr.bf16.mxu0 0
      %212 = vmatpush1.bf16.msra.mxu0 %v195
      %213 = vmatprep.subr.bf16.mxu0 0
      %214 = vmatpush2.bf16.msra.mxu0 0
      %215 = vmatprep.subr.bf16.mxu0 0
      %216 = vmatpush2.bf16.msra.mxu0 0
      %217 = vmatprep.subr.bf16.mxu0 0
      %218 = vmatpush2.bf16.msra.mxu0 0
      %219 = vmatprep.subr.bf16.mxu0 0
      %220 = vmatpush2.bf16.msra.mxu0 0
      %221 = vmatprep.subr.bf16.mxu0 0
      %222 = vmatpush2.bf16.msra.mxu0 0
      %223 = vmatprep.subr.bf16.mxu0 0
      %224 = vmatpush2.bf16.msra.mxu0 0
      %225 = vmatprep.subr.bf16.mxu0 0
      %226 = vmatpush2.bf16.msra.mxu0 0
      %227 = vmatprep.subr.bf16.mxu0 0
      %228 = vmatpush2.bf16.msra.mxu0 0
      %229 = vmatprep.mubr.bf16.mxu0 0
      %230 = vmatmul.mubr.bf16.gmra.mxu0 %v191
      %v231 = vpop.f32.mrf.mxu0
      %v232 = vadd.f32 %v177, %v231
      %v233 = vpop.f32.mrf.mxu0
      %v234 = vpop.f32.mrf.mxu0
      %v235 = vadd.f32 %v182, %v234
      %v236 = vpop.f32.mrf.mxu0
      %237 = vdwg.mxu0
      %v238 = vpack.c.bf16 %v235, %v232
      %v240 = vunpack.c.l.b16 %v238
      %v241 = vunpack.c.h.b16 %v238
      %v242 = vpack.c.b16 %v240, %v240
      %v243 = vpack.c.b16 %v241, %v241
      %vm246 = vcmask 519168
      %247 = vst.msk [vmem:[%s167] sm:$0xf] %vm246, %v242
      %248 = vst.msk [vmem:[%s167 + $0x4] sm:$0xf] %vm246, %v243
      %p249 = scmp.lt.s32.totalorder %s14, 1
      %s250 = scalar_select %p249, %s14, 1
      %s251 = smul.addr %s250, 2
      %s252 = smul.addr %s251, 4
      %s253 = scalar_lea.vmem %s3, %s252
      // Predicated region
      $region33: #{decoder_block_forward.4} parent=31 // pred_check
        %p254 = pneg %p100
      $region34: #{decoder_block_forward.4} parent=31 // pred_check_branch
        %256 = sbr.rel (%p254) target = $region36
      $region35: #{decoder_block_forward.4} parent=31 // pred_region
        _
      $region36: #{decoder_block_forward.4} parent=31 // pred_fallthru
        _
    $region32: #{decoder_block_forward.4} parent=5 // pred_fallthru
      _
    %p257 = scmp.le.s32.totalorder 2, %s9
    // Predicated region
    $region37: #{decoder_block_forward.4} parent=5 // pred_check
      %p258 = pneg %p257
    $region38: #{decoder_block_forward.4} parent=5 // pred_check_branch
      %260 = sbr.rel (%p258) target = $region40
    $region39: #{decoder_block_forward.4} parent=5 // pred_region
      %s261 = ssub.s32 %s9, 2
      // Predicated region
      $region41: #{decoder_block_forward.4} parent=39 // pred_check
        %p262 = pneg %p106
      $region42: #{decoder_block_forward.4} parent=39 // pred_check_branch
        %264 = sbr.rel (%p262) target = $region44
      $region43: #{decoder_block_forward.4} parent=39 // pred_region
        %p265 = scmp.lt.s32.totalorder %s15, 1
        %s266 = scalar_select %p265, %s15, 1
        %s267 = smul.addr %s266, 2
        %s268 = smul.addr %s267, 4
        %s269 = scalar_lea.vmem %s3, %s268
      $region44: #{decoder_block_forward.4} parent=39 // pred_fallthru
        _
    $region40: #{decoder_block_forward.4} parent=5 // pred_fallthru
      _
  $region6: #{decoder_block_forward.4} parent=0 // loop_footer
    %s13 = sadd.s32 1, %s9
  $region7: #{decoder_block_forward.4} parent=0 // loop_footer_branch
    %8 = sbr.rel target = $region3
  $region8: #{decoder_block_forward.4} parent=0 // loop_exit
    _

// kernel: decoder_block_forward.7
$region0: #{decoder_block_forward.7}
  #allocation0 [shape = 'u32[]', space=smem, size = 0x4, offset = 0x4, fixed_abs, tag = 'smem constant byte address 0x4 - core index']
  #allocation1 [shape = 'u32[144,128]{1,0:T(1,128)}', space=vmem, size = 0x12000, scoped, tag = 'internal scratch']
  %s0 = inlined_call_operand.vmem [shape: bf16[2,4,384], index: 0, kind: input, shape index: {}]
  %s1 = inlined_call_operand.vmem [shape: f32[4,1], index: 1, kind: input, shape index: {}]
  %s2 = inlined_call_operand.vmem [shape: f32[4,1], index: 2, kind: input, shape index: {}]
  %s3 = inlined_call_operand.vmem [shape: f32[2,4,384], index: 3, kind: output, shape index: {}]
  %s4 = sld [smem:[#allocation0]]
  $region45: #{decoder_block_forward.7} parent=0
    _
  %s6 = ssub.s32 1, %s4
  %s7 = scalar_select 0, %s6, %s4
  loop: start=0, step=1, limit=4
  $region2: #{decoder_block_forward.7} parent=0 // loop_pre_header
    _
  $region3: #{decoder_block_forward.7} parent=0 // loop_header
    %s9 = sphi 0, %s13
    %p10 = scmp.ge.s32.totalorder %s9, 4
    %s19 = sphi 0, %s21
    %s22 = sphi 0, %s19
    %s23 = sphi 0, %s22
    %s39 = sphi 0, %s23
    %s43 = sphi 0, %s43
    %s45 = sphi 0, %s43
    %s46 = sphi 0, %s45
    %s60 = sphi 0, %s46
    %s64 = sphi 0, %s64
    %s66 = sphi 0, %s64
    %s67 = sphi 0, %s66
    %s81 = sphi 0, %s67
    %s87 = sphi 0, %s89
    %s90 = sphi 0, %s87
    %s91 = sphi 0, %s90
    %s107 = sphi 0, %s91
  $region4: #{decoder_block_forward.7} parent=0 // loop_header_branch
    %12 = sbr.rel (%p10) target = $region8
  $region5: #{decoder_block_forward.7} parent=0 // loop_body
    %s14 = ssub.s32 %s9, 1
    %s15 = ssub.s32 %s9, 2
    %s16 = sadd.s32 %s9, 1
    %s17 = ssub.s32 %s9, %s16
    %p18 = scmp.eq.s32.totalorder %s17, 0
    %s20 = sadd.s32 %s19, 1
    %s21 = scalar_select %p18, %s19, %s20
    %p24 = pneg %p18
    %p25 = scmp.eq.s32.totalorder %s9, 1
    %p26 = por %p24, %p25
    %p27 = scmp.ne.s32.totalorder %s19, %s22
    %p28 = scmp.eq.s32.totalorder %s9, 0
    %p29 = por %p27, %p28
    %p30 = scmp.ne.s32.totalorder %s19, %s22
    %p31 = scmp.eq.s32.totalorder %s14, 1
    %p32 = por %p30, %p31
    %p33 = scmp.ne.s32.totalorder %s22, %s23
    %p34 = scmp.eq.s32.totalorder %s14, 0
    %p35 = por %p33, %p34
    %p36 = scmp.ne.s32.totalorder %s22, %s23
    %p37 = scmp.eq.s32.totalorder %s15, 1
    %p38 = por %p36, %p37
    %p40 = scmp.ne.s32.totalorder %s23, %s39
    %p41 = scmp.eq.s32.totalorder %s15, 0
    %p42 = por %p40, %p41
    %s44 = sadd.s32 %s43, 1
    %p47 = scmp.eq.s32.totalorder %s9, 1
    %p48 = scmp.ne.s32.totalorder %s43, %s45
    %p49 = scmp.eq.s32.totalorder %s9, 0
    %p50 = por %p48, %p49
    %p51 = scmp.ne.s32.totalorder %s43, %s45
    %p52 = scmp.eq.s32.totalorder %s14, 1
    %p53 = por %p51, %p52
    %p54 = scmp.ne.s32.totalorder %s45, %s46
    %p55 = scmp.eq.s32.totalorder %s14, 0
    %p56 = por %p54, %p55
    %p57 = scmp.ne.s32.totalorder %s45, %s46
    %p58 = scmp.eq.s32.totalorder %s15, 1
    %p59 = por %p57, %p58
    %p61 = scmp.ne.s32.totalorder %s46, %s60
    %p62 = scmp.eq.s32.totalorder %s15, 0
    %p63 = por %p61, %p62
    %s65 = sadd.s32 %s64, 1
    %p68 = scmp.eq.s32.totalorder %s9, 1
    %p69 = scmp.ne.s32.totalorder %s64, %s66
    %p70 = scmp.eq.s32.totalorder %s9, 0
    %p71 = por %p69, %p70
    %p72 = scmp.ne.s32.totalorder %s64, %s66
    %p73 = scmp.eq.s32.totalorder %s14, 1
    %p74 = por %p72, %p73
    %p75 = scmp.ne.s32.totalorder %s66, %s67
    %p76 = scmp.eq.s32.totalorder %s14, 0
    %p77 = por %p75, %p76
    %p78 = scmp.ne.s32.totalorder %s66, %s67
    %p79 = scmp.eq.s32.totalorder %s15, 1
    %p80 = por %p78, %p79
    %p82 = scmp.ne.s32.totalorder %s67, %s81
    %p83 = scmp.eq.s32.totalorder %s15, 0
    %p84 = por %p82, %p83
    %s85 = ssub.s32 %s9, %s16
    %p86 = scmp.eq.s32.totalorder %s85, 0
    %s88 = sadd.s32 %s87, 1
    %s89 = scalar_select %p86, %s87, %s88
    %p92 = pneg %p86
    %p93 = scmp.eq.s32.totalorder %s9, 1
    %p94 = por %p92, %p93
    %p95 = scmp.ne.s32.totalorder %s87, %s90
    %p96 = scmp.eq.s32.totalorder %s9, 0
    %p97 = por %p95, %p96
    %p98 = scmp.ne.s32.totalorder %s87, %s90
    %p99 = scmp.eq.s32.totalorder %s14, 1
    %p100 = por %p98, %p99
    %p101 = scmp.ne.s32.totalorder %s90, %s91
    %p102 = scmp.eq.s32.totalorder %s14, 0
    %p103 = por %p101, %p102
    %p104 = scmp.ne.s32.totalorder %s90, %s91
    %p105 = scmp.eq.s32.totalorder %s15, 1
    %p106 = por %p104, %p105
    %p108 = scmp.ne.s32.totalorder %s91, %s107
    %p109 = scmp.eq.s32.totalorder %s15, 0
    %p110 = por %p108, %p109
    %p111 = scmp.le.s32.totalorder 1, %s9
    %p112 = scmp.lt.s32.totalorder %s9, 3
    %p113 = pnand %p111, %p112
    %p114 = pneg %p113
    // Predicated region
    $region9: #{decoder_block_forward.7} parent=5 // pred_check
      _
    $region10: #{decoder_block_forward.7} parent=5 // pred_check_branch
      %116 = sbr.rel (%p113) target = $region12
    $region11: #{decoder_block_forward.7} parent=5 // pred_region
      %s117 = ssub.s32 %s9, 1
      // Predicated region
      $region13: #{decoder_block_forward.7} parent=11 // pred_check
        %p118 = pneg %p56
      $region14: #{decoder_block_forward.7} parent=11 // pred_check_branch
        %120 = sbr.rel (%p118) target = $region16
      $region15: #{decoder_block_forward.7} parent=11 // pred_region
        _
      $region16: #{decoder_block_forward.7} parent=11 // pred_fallthru
        _
      // Predicated region
      $region17: #{decoder_block_forward.7} parent=11 // pred_check
        %p121 = pneg %p77
      $region18: #{decoder_block_forward.7} parent=11 // pred_check_branch
        %123 = sbr.rel (%p121) target = $region20
      $region19: #{decoder_block_forward.7} parent=11 // pred_region
        _
      $region20: #{decoder_block_forward.7} parent=11 // pred_fallthru
        _
    $region12: #{decoder_block_forward.7} parent=5 // pred_fallthru
      _
    %p124 = scmp.lt.s32.totalorder %s9, 2
    // Predicated region
    $region21: #{decoder_block_forward.7} parent=5 // pred_check
      %p125 = pneg %p124
    $region22: #{decoder_block_forward.7} parent=5 // pred_check_branch
      %127 = sbr.rel (%p125) target = $region24
    $region23: #{decoder_block_forward.7} parent=5 // pred_region
      // Predicated region
      $region25: #{decoder_block_forward.7} parent=23 // pred_check
        %p128 = pneg %p29
      $region26: #{decoder_block_forward.7} parent=23 // pred_check_branch
        %130 = sbr.rel (%p128) target = $region28
      $region27: #{decoder_block_forward.7} parent=23 // pred_region
        %p131 = scmp.lt.s32.totalorder %s9, 1
        %s132 = scalar_select %p131, %s9, 1
        %s133 = smul.addr %s132, 3
        %s134 = smul.addr %s133, 2
        %s135 = scalar_lea.vmem %s0, %s134
      $region28: #{decoder_block_forward.7} parent=23 // pred_fallthru
        _
    $region24: #{decoder_block_forward.7} parent=5 // pred_fallthru
      _
    %p136 = scmp.le.s32.totalorder 1, %s9
    %p137 = scmp.lt.s32.totalorder %s9, 3
    %p138 = pnand %p136, %p137
    %p139 = pneg %p138
    // Predicated region
    $region29: #{decoder_block_forward.7} parent=5 // pred_check
      _
    $region30: #{decoder_block_forward.7} parent=5 // pred_check_branch
      %141 = sbr.rel (%p138) target = $region32
    $region31: #{decoder_block_forward.7} parent=5 // pred_region
      %s142 = ssub.s32 %s9, 1
      %p143 = scmp.lt.s32.totalorder %s14, 1
      %s144 = scalar_select %p143, %s14, 1
      %s145 = smul.addr %s144, 3
      %s146 = smul.addr %s145, 2
      %s147 = scalar_lea.vmem %s0, %s146
      %p148 = pneg %p35
      %p149 = pneg %p32
      %p150 = pneg %p56
      %p151 = pneg %p53
      %p152 = pneg %p77
      %p153 = pneg %p74
      %p154 = pneg %p103
      %p155 = pneg %p100
      %p156 = scmp.lt.s32.totalorder %s14, 1
      %s157 = scalar_select %p156, %s14, 1
      %s158 = smul.addr %s157, 3
      %s159 = smul.addr %s158, 4
      %s160 = scalar_lea.vmem %s3, %s159
      %p161 = scmp.lt.s32.totalorder %s14, 1
      %s162 = scalar_select %p161, %s14, 1
      %s163 = smul.addr %s162, 3
      %s164 = smul.addr %s163, 2
      %s165 = scalar_lea.vmem %s0, %s164
      %p166 = scmp.lt.s32.totalorder %s14, 1
      %s167 = scalar_select %p166, %s14, 1
      %s168 = smul.addr %s167, 3
      %s169 = smul.addr %s168, 4
      %s170 = scalar_lea.vmem %s3, %s169
      %v171 = vld [vmem:[%s165] sm:$0x3f]
      %v172 = vunpack.c.l.bf16 %v171
      %v173 = vunpack.c.h.bf16 %v171
      %v174 = vld [vmem:[%s1] sm:$0xf]
      %176 = vset.pattern.permute.xlu0 0
      %177 = vperm.xlu0 %176, %v174
      %v178 = vpop.permute.xlu0 %177
      %v180 = vunpack.c.l.s4 839922192
      %v181 = vunpack.c.0.s8 %v180
      %v182 = vlaneseq
      %v183 = vshrl.u32 %v182, 7
      %v184 = vsub.s32 %v181, %v183
      %v185 = vrot.slane %v178, %v184
      %v187 = vmul.f32 %v172, %v185
      %v188 = vmul.f32 %v173, %v185
      %v189 = vld [vmem:[%s2] sm:$0xf]
      %191 = vset.pattern.permute.xlu0 0
      %192 = vperm.xlu0 %191, %v189
      %v193 = vpop.permute.xlu0 %192
      %v195 = vunpack.c.l.s4 839922192
      %v196 = vunpack.c.0.s8 %v195
      %v197 = vlaneseq
      %v198 = vshrl.u32 %v197, 7
      %v199 = vsub.s32 %v196, %v198
      %v200 = vrot.slane %v193, %v199
      %v202 = vadd.f32 %v187, %v200
      %v203 = vadd.f32 %v188, %v200
      %v204 = vmax.f32 %v202, 0.0
      %v205 = vmax.f32 %v203, 0.0
      %206 = vst [vmem:[%s170] sm:$0xff] %v204
      %207 = vst [vmem:[%s170 + $0x8] sm:$0xf] %v205
      %p208 = scmp.lt.s32.totalorder %s14, 1
      %s209 = scalar_select %p208, %s14, 1
      %s210 = smul.addr %s209, 3
      %s211 = smul.addr %s210, 4
      %s212 = scalar_lea.vmem %s3, %s211
      // Predicated region
      $region33: #{decoder_block_forward.7} parent=31 // pred_check
        %p213 = pneg %p100
      $region34: #{decoder_block_forward.7} parent=31 // pred_check_branch
        %215 = sbr.rel (%p213) target = $region36
      $region35: #{decoder_block_forward.7} parent=31 // pred_region
        _
      $region36: #{decoder_block_forward.7} parent=31 // pred_fallthru
        _
    $region32: #{decoder_block_forward.7} parent=5 // pred_fallthru
      _
    %p216 = scmp.le.s32.totalorder 2, %s9
    // Predicated region
    $region37: #{decoder_block_forward.7} parent=5 // pred_check
      %p217 = pneg %p216
    $region38: #{decoder_block_forward.7} parent=5 // pred_check_branch
      %219 = sbr.rel (%p217) target = $region40
    $region39: #{decoder_block_forward.7} parent=5 // pred_region
      %s220 = ssub.s32 %s9, 2
      // Predicated region
      $region41: #{decoder_block_forward.7} parent=39 // pred_check
        %p221 = pneg %p106
      $region42: #{decoder_block_forward.7} parent=39 // pred_check_branch
        %223 = sbr.rel (%p221) target = $region44
      $region43: #{decoder_block_forward.7} parent=39 // pred_region
        %p224 = scmp.lt.s32.totalorder %s15, 1
        %s225 = scalar_select %p224, %s15, 1
        %s226 = smul.addr %s225, 3
        %s227 = smul.addr %s226, 4
        %s228 = scalar_lea.vmem %s3, %s227
      $region44: #{decoder_block_forward.7} parent=39 // pred_fallthru
        _
    $region40: #{decoder_block_forward.7} parent=5 // pred_fallthru
      _
  $region6: #{decoder_block_forward.7} parent=0 // loop_footer
    %s13 = sadd.s32 1, %s9
  $region7: #{decoder_block_forward.7} parent=0 // loop_footer_branch
    %8 = sbr.rel target = $region3
  $region8: #{decoder_block_forward.7} parent=0 // loop_exit
    _

// kernel: decoder_block_forward.5
$region0: #{decoder_block_forward.5}
  #allocation0 [shape = 'u32[]', space=smem, size = 0x4, offset = 0x4, fixed_abs, tag = 'smem constant byte address 0x4 - core index']
  #allocation1 [shape = 'u32[144,128]{1,0:T(1,128)}', space=vmem, size = 0x12000, scoped, tag = 'internal scratch']
  #allocation2 [shape = 'bf16[72,384]{1,0:T(8,128)(2,1)}', space=vmem, size = 0xd800, scoped, tag = 'scratch operand']
  %s0 = inlined_call_operand.vmem [shape: bf16[2,4,422], index: 0, kind: input, shape index: {}]
  %s1 = inlined_call_operand.vmem [shape: bf16[2,4,422], index: 1, kind: input, shape index: {}]
  %s2 = inlined_call_operand.vmem [shape: bf16[4,72], index: 2, kind: input, shape index: {}]
  %s3 = inlined_call_operand.vmem [shape: f32[1,384], index: 3, kind: input, shape index: {}]
  %s4 = inlined_call_operand.vmem [shape: bf16[2,4,384], index: 4, kind: output, shape index: {0}]
  %s5 = inlined_call_operand.vmem [shape: f32[2,4,2], index: 5, kind: output, shape index: {1}]
  %6 = xla_tuple %s4, %s5
  %s7 = sld [smem:[#allocation0]]
  $region57: #{decoder_block_forward.5} parent=0
    _
  %s9 = ssub.s32 1, %s7
  %s10 = scalar_select 0, %s9, %s7
  loop: start=0, step=1, limit=4
  $region2: #{decoder_block_forward.5} parent=0 // loop_pre_header
    _
  $region3: #{decoder_block_forward.5} parent=0 // loop_header
    %s12 = sphi 0, %s16
    %p13 = scmp.ge.s32.totalorder %s12, 4
    %s22 = sphi 0, %s24
    %s25 = sphi 0, %s22
    %s26 = sphi 0, %s25
    %s42 = sphi 0, %s26
    %s48 = sphi 0, %s50
    %s51 = sphi 0, %s48
    %s52 = sphi 0, %s51
    %s68 = sphi 0, %s52
    %s72 = sphi 0, %s72
    %s74 = sphi 0, %s72
    %s75 = sphi 0, %s74
    %s89 = sphi 0, %s75
    %s93 = sphi 0, %s93
    %s95 = sphi 0, %s93
    %s96 = sphi 0, %s95
    %s110 = sphi 0, %s96
    %s116 = sphi 0, %s118
    %s119 = sphi 0, %s116
    %s120 = sphi 0, %s119
    %s136 = sphi 0, %s120
    %s142 = sphi 0, %s144
    %s145 = sphi 0, %s142
    %s146 = sphi 0, %s145
    %s162 = sphi 0, %s146
  $region4: #{decoder_block_forward.5} parent=0 // loop_header_branch
    %15 = sbr.rel (%p13) target = $region8
  $region5: #{decoder_block_forward.5} parent=0 // loop_body
    %s17 = ssub.s32 %s12, 1
    %s18 = ssub.s32 %s12, 2
    %s19 = sadd.s32 %s12, 1
    %s20 = ssub.s32 %s12, %s19
    %p21 = scmp.eq.s32.totalorder %s20, 0
    %s23 = sadd.s32 %s22, 1
    %s24 = scalar_select %p21, %s22, %s23
    %p27 = pneg %p21
    %p28 = scmp.eq.s32.totalorder %s12, 1
    %p29 = por %p27, %p28
    %p30 = scmp.ne.s32.totalorder %s22, %s25
    %p31 = scmp.eq.s32.totalorder %s12, 0
    %p32 = por %p30, %p31
    %p33 = scmp.ne.s32.totalorder %s22, %s25
    %p34 = scmp.eq.s32.totalorder %s17, 1
    %p35 = por %p33, %p34
    %p36 = scmp.ne.s32.totalorder %s25, %s26
    %p37 = scmp.eq.s32.totalorder %s17, 0
    %p38 = por %p36, %p37
    %p39 = scmp.ne.s32.totalorder %s25, %s26
    %p40 = scmp.eq.s32.totalorder %s18, 1
    %p41 = por %p39, %p40
    %p43 = scmp.ne.s32.totalorder %s26, %s42
    %p44 = scmp.eq.s32.totalorder %s18, 0
    %p45 = por %p43, %p44
    %s46 = ssub.s32 %s12, %s19
    %p47 = scmp.eq.s32.totalorder %s46, 0
    %s49 = sadd.s32 %s48, 1
    %s50 = scalar_select %p47, %s48, %s49
    %p53 = pneg %p47
    %p54 = scmp.eq.s32.totalorder %s12, 1
    %p55 = por %p53, %p54
    %p56 = scmp.ne.s32.totalorder %s48, %s51
    %p57 = scmp.eq.s32.totalorder %s12, 0
    %p58 = por %p56, %p57
    %p59 = scmp.ne.s32.totalorder %s48, %s51
    %p60 = scmp.eq.s32.totalorder %s17, 1
    %p61 = por %p59, %p60
    %p62 = scmp.ne.s32.totalorder %s51, %s52
    %p63 = scmp.eq.s32.totalorder %s17, 0
    %p64 = por %p62, %p63
    %p65 = scmp.ne.s32.totalorder %s51, %s52
    %p66 = scmp.eq.s32.totalorder %s18, 1
    %p67 = por %p65, %p66
    %p69 = scmp.ne.s32.totalorder %s52, %s68
    %p70 = scmp.eq.s32.totalorder %s18, 0
    %p71 = por %p69, %p70
    %s73 = sadd.s32 %s72, 1
    %p76 = scmp.eq.s32.totalorder %s12, 1
    %p77 = scmp.ne.s32.totalorder %s72, %s74
    %p78 = scmp.eq.s32.totalorder %s12, 0
    %p79 = por %p77, %p78
    %p80 = scmp.ne.s32.totalorder %s72, %s74
    %p81 = scmp.eq.s32.totalorder %s17, 1
    %p82 = por %p80, %p81
    %p83 = scmp.ne.s32.totalorder %s74, %s75
    %p84 = scmp.eq.s32.totalorder %s17, 0
    %p85 = por %p83, %p84
    %p86 = scmp.ne.s32.totalorder %s74, %s75
    %p87 = scmp.eq.s32.totalorder %s18, 1
    %p88 = por %p86, %p87
    %p90 = scmp.ne.s32.totalorder %s75, %s89
    %p91 = scmp.eq.s32.totalorder %s18, 0
    %p92 = por %p90, %p91
    %s94 = sadd.s32 %s93, 1
    %p97 = scmp.eq.s32.totalorder %s12, 1
    %p98 = scmp.ne.s32.totalorder %s93, %s95
    %p99 = scmp.eq.s32.totalorder %s12, 0
    %p100 = por %p98, %p99
    %p101 = scmp.ne.s32.totalorder %s93, %s95
    %p102 = scmp.eq.s32.totalorder %s17, 1
    %p103 = por %p101, %p102
    %p104 = scmp.ne.s32.totalorder %s95, %s96
    %p105 = scmp.eq.s32.totalorder %s17, 0
    %p106 = por %p104, %p105
    %p107 = scmp.ne.s32.totalorder %s95, %s96
    %p108 = scmp.eq.s32.totalorder %s18, 1
    %p109 = por %p107, %p108
    %p111 = scmp.ne.s32.totalorder %s96, %s110
    %p112 = scmp.eq.s32.totalorder %s18, 0
    %p113 = por %p111, %p112
    %s114 = ssub.s32 %s12, %s19
    %p115 = scmp.eq.s32.totalorder %s114, 0
    %s117 = sadd.s32 %s116, 1
    %s118 = scalar_select %p115, %s116, %s117
    %p121 = pneg %p115
    %p122 = scmp.eq.s32.totalorder %s12, 1
    %p123 = por %p121, %p122
    %p124 = scmp.ne.s32.totalorder %s116, %s119
    %p125 = scmp.eq.s32.totalorder %s12, 0
    %p126 = por %p124, %p125
    %p127 = scmp.ne.s32.totalorder %s116, %s119
    %p128 = scmp.eq.s32.totalorder %s17, 1
    %p129 = por %p127, %p128
    %p130 = scmp.ne.s32.totalorder %s119, %s120
    %p131 = scmp.eq.s32.totalorder %s17, 0
    %p132 = por %p130, %p131
    %p133 = scmp.ne.s32.totalorder %s119, %s120
    %p134 = scmp.eq.s32.totalorder %s18, 1
    %p135 = por %p133, %p134
    %p137 = scmp.ne.s32.totalorder %s120, %s136
    %p138 = scmp.eq.s32.totalorder %s18, 0
    %p139 = por %p137, %p138
    %s140 = ssub.s32 %s12, %s19
    %p141 = scmp.eq.s32.totalorder %s140, 0
    %s143 = sadd.s32 %s142, 1
    %s144 = scalar_select %p141, %s142, %s143
    %p147 = pneg %p141
    %p148 = scmp.eq.s32.totalorder %s12, 1
    %p149 = por %p147, %p148
    %p150 = scmp.ne.s32.totalorder %s142, %s145
    %p151 = scmp.eq.s32.totalorder %s12, 0
    %p152 = por %p150, %p151
    %p153 = scmp.ne.s32.totalorder %s142, %s145
    %p154 = scmp.eq.s32.totalorder %s17, 1
    %p155 = por %p153, %p154
    %p156 = scmp.ne.s32.totalorder %s145, %s146
    %p157 = scmp.eq.s32.totalorder %s17, 0
    %p158 = por %p156, %p157
    %p159 = scmp.ne.s32.totalorder %s145, %s146
    %p160 = scmp.eq.s32.totalorder %s18, 1
    %p161 = por %p159, %p160
    %p163 = scmp.ne.s32.totalorder %s146, %s162
    %p164 = scmp.eq.s32.totalorder %s18, 0
    %p165 = por %p163, %p164
    %p166 = scmp.le.s32.totalorder 1, %s12
    %p167 = scmp.lt.s32.totalorder %s12, 3
    %p168 = pnand %p166, %p167
    %p169 = pneg %p168
    // Predicated region
    $region9: #{decoder_block_forward.5} parent=5 // pred_check
      _
    $region10: #{decoder_block_forward.5} parent=5 // pred_check_branch
      %171 = sbr.rel (%p168) target = $region12
    $region11: #{decoder_block_forward.5} parent=5 // pred_region
      %s172 = ssub.s32 %s12, 1
      // Predicated region
      $region13: #{decoder_block_forward.5} parent=11 // pred_check
        %p173 = pneg %p85
      $region14: #{decoder_block_forward.5} parent=11 // pred_check_branch
        %175 = sbr.rel (%p173) target = $region16
      $region15: #{decoder_block_forward.5} parent=11 // pred_region
        _
      $region16: #{decoder_block_forward.5} parent=11 // pred_fallthru
        _
      // Predicated region
      $region17: #{decoder_block_forward.5} parent=11 // pred_check
        %p176 = pneg %p106
      $region18: #{decoder_block_forward.5} parent=11 // pred_check_branch
        %178 = sbr.rel (%p176) target = $region20
      $region19: #{decoder_block_forward.5} parent=11 // pred_region
        _
      $region20: #{decoder_block_forward.5} parent=11 // pred_fallthru
        _
    $region12: #{decoder_block_forward.5} parent=5 // pred_fallthru
      _
    %p179 = scmp.lt.s32.totalorder %s12, 2
    // Predicated region
    $region21: #{decoder_block_forward.5} parent=5 // pred_check
      %p180 = pneg %p179
    $region22: #{decoder_block_forward.5} parent=5 // pred_check_branch
      %182 = sbr.rel (%p180) target = $region24
    $region23: #{decoder_block_forward.5} parent=5 // pred_region
      // Predicated region
      $region25: #{decoder_block_forward.5} parent=23 // pred_check
        %p183 = pneg %p32
      $region26: #{decoder_block_forward.5} parent=23 // pred_check_branch
        %185 = sbr.rel (%p183) target = $region28
      $region27: #{decoder_block_forward.5} parent=23 // pred_region
        %p186 = scmp.lt.s32.totalorder %s12, 1
        %s187 = scalar_select %p186, %s12, 1
        %s188 = smul.addr %s187, 4
        %s189 = smul.addr %s188, 2
        %s190 = scalar_lea.vmem %s0, %s189
      $region28: #{decoder_block_forward.5} parent=23 // pred_fallthru
        _
      // Predicated region
      $region29: #{decoder_block_forward.5} parent=23 // pred_check
        %p191 = pneg %p58
      $region30: #{decoder_block_forward.5} parent=23 // pred_check_branch
        %193 = sbr.rel (%p191) target = $region32
      $region31: #{decoder_block_forward.5} parent=23 // pred_region
        %p194 = scmp.lt.s32.totalorder %s12, 1
        %s195 = scalar_select %p194, %s12, 1
        %s196 = smul.addr %s195, 4
        %s197 = smul.addr %s196, 2
        %s198 = scalar_lea.vmem %s1, %s197
      $region32: #{decoder_block_forward.5} parent=23 // pred_fallthru
        _
    $region24: #{decoder_block_forward.5} parent=5 // pred_fallthru
      _
    %p199 = scmp.le.s32.totalorder 1, %s12
    %p200 = scmp.lt.s32.totalorder %s12, 3
    %p201 = pnand %p199, %p200
    %p202 = pneg %p201
    // Predicated region
    $region33: #{decoder_block_forward.5} parent=5 // pred_check
      _
    $region34: #{decoder_block_forward.5} parent=5 // pred_check_branch
      %204 = sbr.rel (%p201) target = $region36
    $region35: #{decoder_block_forward.5} parent=5 // pred_region
      %s205 = ssub.s32 %s12, 1
      %p206 = scmp.lt.s32.totalorder %s17, 1
      %s207 = scalar_select %p206, %s17, 1
      %s208 = smul.addr %s207, 4
      %s209 = smul.addr %s208, 2
      %s210 = scalar_lea.vmem %s0, %s209
      %p211 = pneg %p38
      %p212 = pneg %p35
      %p213 = scmp.lt.s32.totalorder %s17, 1
      %s214 = scalar_select %p213, %s17, 1
      %s215 = smul.addr %s214, 4
      %s216 = smul.addr %s215, 2
      %s217 = scalar_lea.vmem %s1, %s216
      %p218 = pneg %p64
      %p219 = pneg %p61
      %p220 = pneg %p85
      %p221 = pneg %p82
      %p222 = pneg %p106
      %p223 = pneg %p103
      %p224 = pneg %p132
      %p225 = pneg %p129
      %p226 = scmp.lt.s32.totalorder %s17, 1
      %s227 = scalar_select %p226, %s17, 1
      %s228 = smul.addr %s227, 3
      %s229 = smul.addr %s228, 2
      %s230 = scalar_lea.vmem %s4, %s229
      %p231 = pneg %p158
      %p232 = pneg %p155
      %p233 = scmp.lt.s32.totalorder %s17, 1
      %s234 = scalar_select %p233, %s17, 1
      %s235 = smul.addr %s234, 4
      %s236 = scalar_lea.vmem %s5, %s235
      %p237 = scmp.lt.s32.totalorder %s17, 1
      %s238 = scalar_select %p237, %s17, 1
      %s239 = smul.addr %s238, 4
      %s240 = smul.addr %s239, 2
      %s241 = scalar_lea.vmem %s0, %s240
      %p242 = scmp.lt.s32.totalorder %s17, 1
      %s243 = scalar_select %p242, %s17, 1
      %s244 = smul.addr %s243, 4
      %s245 = smul.addr %s244, 2
      %s246 = scalar_lea.vmem %s1, %s245
      %p247 = scmp.lt.s32.totalorder %s17, 1
      %s248 = scalar_select %p247, %s17, 1
      %s249 = smul.addr %s248, 3
      %s250 = smul.addr %s249, 2
      %s251 = scalar_lea.vmem %s4, %s250
      %p252 = scmp.lt.s32.totalorder %s17, 1
      %s253 = scalar_select %p252, %s17, 1
      %s254 = smul.addr %s253, 4
      %s255 = scalar_lea.vmem %s5, %s254
      %v257 = vld [vmem:[%s3] sm:$0x7]
      %v258 = vld [vmem:[%s241] sm:$0x3f]
      %v260 = vcombine.high %v258, %v258
      %v262 = vunpack.c.l.s4 1983009808
      %v263 = vunpack.c.0.s8 %v262
      %v264 = vlaneseq
      %v265 = vshrl.u32 %v264, 7
      %v266 = vsub.s32 %v263, %v265
      %v267 = vrot.slane %v258, %v266
      %v269 = vunpack.c.l.s4 1983009808
      %v270 = vunpack.c.0.s8 %v269
      %v271 = vlaneseq
      %v272 = vshrl.u32 %v271, 7
      %v273 = vsub.s32 %v270, %v272
      %v274 = vrot.slane %v260, %v273
      %277 = vst [vmem:[#allocation2] sm:$0x33] %v267
      %278 = vst [vmem:[#allocation2 + $0x8] sm:$0x3] %v274
      %v279 = vld [vmem:[%s246] sm:$0x3f]
      %v281 = vcombine.low %v279, %v279
      %v283 = vunpack.c.l.s4 1983009808
      %v284 = vunpack.c.0.s8 %v283
      %v285 = vlaneseq
      %v286 = vshrl.u32 %v285, 7
      %v287 = vsub.s32 %v284, %v286
      %v288 = vrot.slane %v281, %v287
      %v290 = vunpack.c.l.s4 1983009808
      %v291 = vunpack.c.0.s8 %v290
      %v292 = vlaneseq
      %v293 = vshrl.u32 %v292, 7
      %v294 = vsub.s32 %v291, %v293
      %v295 = vrot.slane %v279, %v294
      %298 = vst [vmem:[#allocation2] sm:$0xcc] %v288
      %299 = vst [vmem:[#allocation2 + $0x8] sm:$0xc] %v295
      %v300 = vld [vmem:[%s241] sm:$0xff]
      %v302 = vcombine.high %v300, %v300
      %v304 = vunpack.c.l.s4 1983009808
      %v305 = vunpack.c.0.s8 %v304
      %v306 = vlaneseq
      %v307 = vshrl.u32 %v306, 7
      %v308 = vsub.s32 %v305, %v307
      %v309 = vrot.slane %v300, %v308
      %v311 = vunpack.c.l.s4 1983009808
      %v312 = vunpack.c.0.s8 %v311
      %v313 = vlaneseq
      %v314 = vshrl.u32 %v313, 7
      %v315 = vsub.s32 %v312, %v314
      %v316 = vrot.slane %v302, %v315
      %317 = vrot.lane.b32.xlu0 %v309, 127
      %v318 = vpop.permute.xlu0 %317
      %319 = vrot.lane.b32.xlu0 %v316, 127
      %v320 = vpop.permute.xlu0 %319
      %v321 = vrot.slane %v318, 4
      %v322 = vrot.slane %v320, 4
      %vm323 = vcmask 1043456
      %v324 = vsel %vm323, %v321, %v322
      %vm325 = vcmask 1039360
      %v326 = vsel %vm325, %v318, %v324
      %v327 = vsel %vm325, %v320, %v322
      %330 = vst [vmem:[#allocation2 + $0xc] sm:$0x33] %v326
      %331 = vst [vmem:[#allocation2 + $0x14] sm:$0x3] %v327
      %v332 = vld [vmem:[%s246] sm:$0xff]
      %v334 = vcombine.low %v332, %v332
      %v336 = vunpack.c.l.s4 1983009808
      %v337 = vunpack.c.0.s8 %v336
      %v338 = vlaneseq
      %v339 = vshrl.u32 %v338, 7
      %v340 = vsub.s32 %v337, %v339
      %v341 = vrot.slane %v334, %v340
      %v343 = vunpack.c.l.s4 1983009808
      %v344 = vunpack.c.0.s8 %v343
      %v345 = vlaneseq
      %v346 = vshrl.u32 %v345, 7
      %v347 = vsub.s32 %v344, %v346
      %v348 = vrot.slane %v332, %v347
      %349 = vrot.lane.b32.xlu0 %v341, 127
      %v350 = vpop.permute.xlu0 %349
      %351 = vrot.lane.b32.xlu0 %v348, 127
      %v352 = vpop.permute.xlu0 %351
      %v353 = vrot.slane %v350, 4
      %v354 = vrot.slane %v352, 4
      %v355 = vsel %vm323, %v353, %v354
      %v356 = vsel %vm325, %v350, %v355
      %v357 = vsel %vm325, %v352, %v354
      %360 = vst [vmem:[#allocation2 + $0xc] sm:$0xcc] %v356
      %361 = vst [vmem:[#allocation2 + $0x14] sm:$0xc] %v357
      %v362 = vld [vmem:[%s241] sm:$0xff]
      %v364 = vcombine.high %v362, %v362
      %v366 = vunpack.c.l.s4 1983009808
      %v367 = vunpack.c.0.s8 %v366
      %v368 = vlaneseq
      %v369 = vshrl.u32 %v368, 7
      %v370 = vsub.s32 %v367, %v369
      %v371 = vrot.slane %v362, %v370
      %v373 = vunpack.c.l.s4 1983009808
      %v374 = vunpack.c.0.s8 %v373
      %v375 = vlaneseq
      %v376 = vshrl.u32 %v375, 7
      %v377 = vsub.s32 %v374, %v376
      %v378 = vrot.slane %v364, %v377
      %379 = vrot.lane.b32.xlu0 %v371, 126
      %v380 = vpop.permute.xlu0 %379
      %381 = vrot.lane.b32.xlu0 %v378, 126
      %v382 = vpop.permute.xlu0 %381
      %v383 = vrot.slane %v380, 4
      %v384 = vrot.slane %v382, 4
      %v385 = vsel %vm323, %v383, %v384
      %vm386 = vcmask 1031168
      %v387 = vsel %vm386, %v380, %v385
      %v388 = vsel %vm386, %v382, %v384
      %391 = vst [vmem:[#allocation2 + $0x18] sm:$0x33] %v387
      %392 = vst [vmem:[#allocation2 + $0x20] sm:$0x3] %v388
      %v393 = vld [vmem:[%s246] sm:$0xff]
      %v395 = vcombine.low %v393, %v393
      %v397 = vunpack.c.l.s4 1983009808
      %v398 = vunpack.c.0.s8 %v397
      %v399 = vlaneseq
      %v400 = vshrl.u32 %v399, 7
      %v401 = vsub.s32 %v398, %v400
      %v402 = vrot.slane %v395, %v401
      %v404 = vunpack.c.l.s4 1983009808
      %v405 = vunpack.c.0.s8 %v404
      %v406 = vlaneseq
      %v407 = vshrl.u32 %v406, 7
      %v408 = vsub.s32 %v405, %v407
      %v409 = vrot.slane %v393, %v408
      %410 = vrot.lane.b32.xlu0 %v402, 126
      %v411 = vpop.permute.xlu0 %410
      %412 = vrot.lane.b32.xlu0 %v409, 126
      %v413 = vpop.permute.xlu0 %412
      %v414 = vrot.slane %v411, 4
      %v415 = vrot.slane %v413, 4
      %v416 = vsel %vm323, %v414, %v415
      %v417 = vsel %vm386, %v411, %v416
      %v418 = vsel %vm386, %v413, %v415
      %421 = vst [vmem:[#allocation2 + $0x18] sm:$0xcc] %v417
      %422 = vst [vmem:[#allocation2 + $0x20] sm:$0xc] %v418
      %v423 = vld [vmem:[%s241] sm:$0xff]
      %v425 = vcombine.high %v423, %v423
      %v427 = vunpack.c.l.s4 1983009808
      %v428 = vunpack.c.0.s8 %v427
      %v429 = vlaneseq
      %v430 = vshrl.u32 %v429, 7
      %v431 = vsub.s32 %v428, %v430
      %v432 = vrot.slane %v423, %v431
      %v434 = vunpack.c.l.s4 1983009808
      %v435 = vunpack.c.0.s8 %v434
      %v436 = vlaneseq
      %v437 = vshrl.u32 %v436, 7
      %v438 = vsub.s32 %v435, %v437
      %v439 = vrot.slane %v425, %v438
      %440 = vrot.lane.b32.xlu0 %v432, 110
      %v441 = vpop.permute.xlu0 %440
      %442 = vrot.lane.b32.xlu0 %v439, 110
      %v443 = vpop.permute.xlu0 %442
      %v444 = vrot.slane %v441, 4
      %v445 = vrot.slane %v443, 4
      %v446 = vsel %vm323, %v444, %v445
      %vm447 = vcmask 900096
      %v448 = vsel %vm447, %v441, %v446
      %v449 = vsel %vm447, %v443, %v445
      %452 = vst [vmem:[#allocation2 + $0x24] sm:$0x33] %v448
      %453 = vst [vmem:[#allocation2 + $0x2c] sm:$0x3] %v449
      %v454 = vld [vmem:[%s246] sm:$0xff]
      %v456 = vcombine.low %v454, %v454
      %v458 = vunpack.c.l.s4 1983009808
      %v459 = vunpack.c.0.s8 %v458
      %v460 = vlaneseq
      %v461 = vshrl.u32 %v460, 7
      %v462 = vsub.s32 %v459, %v461
      %v463 = vrot.slane %v456, %v462
      %v465 = vunpack.c.l.s4 1983009808
      %v466 = vunpack.c.0.s8 %v465
      %v467 = vlaneseq
      %v468 = vshrl.u32 %v467, 7
      %v469 = vsub.s32 %v466, %v468
      %v470 = vrot.slane %v454, %v469
      %471 = vrot.lane.b32.xlu0 %v463, 110
      %v472 = vpop.permute.xlu0 %471
      %473 = vrot.lane.b32.xlu0 %v470, 110
      %v474 = vpop.permute.xlu0 %473
      %v475 = vrot.slane %v472, 4
      %v476 = vrot.slane %v474, 4
      %v477 = vsel %vm323, %v475, %v476
      %v478 = vsel %vm447, %v472, %v477
      %v479 = vsel %vm447, %v474, %v476
      %482 = vst [vmem:[#allocation2 + $0x24] sm:$0xcc] %v478
      %483 = vst [vmem:[#allocation2 + $0x2c] sm:$0xc] %v479
      %v484 = vld [vmem:[%s241] sm:$0xff]
      %v486 = vcombine.high %v484, %v484
      %v488 = vunpack.c.l.s4 1983009808
      %v489 = vunpack.c.0.s8 %v488
      %v490 = vlaneseq
      %v491 = vshrl.u32 %v490, 7
      %v492 = vsub.s32 %v489, %v491
      %v493 = vrot.slane %v484, %v492
      %v495 = vunpack.c.l.s4 1983009808
      %v496 = vunpack.c.0.s8 %v495
      %v497 = vlaneseq
      %v498 = vshrl.u32 %v497, 7
      %v499 = vsub.s32 %v496, %v498
      %v500 = vrot.slane %v486, %v499
      %501 = vrot.lane.b32.xlu0 %v493, 109
      %v502 = vpop.permute.xlu0 %501
      %503 = vrot.lane.b32.xlu0 %v500, 109
      %v504 = vpop.permute.xlu0 %503
      %v505 = vrot.slane %v502, 4
      %v506 = vrot.slane %v504, 4
      %v507 = vsel %vm323, %v505, %v506
      %vm508 = vcmask 891904
      %v509 = vsel %vm508, %v502, %v507
      %v510 = vsel %vm508, %v504, %v506
      %513 = vst [vmem:[#allocation2 + $0x30] sm:$0x33] %v509
      %514 = vst [vmem:[#allocation2 + $0x38] sm:$0x3] %v510
      %v515 = vld [vmem:[%s246] sm:$0xff]
      %v517 = vcombine.low %v515, %v515
      %v519 = vunpack.c.l.s4 1983009808
      %v520 = vunpack.c.0.s8 %v519
      %v521 = vlaneseq
      %v522 = vshrl.u32 %v521, 7
      %v523 = vsub.s32 %v520, %v522
      %v524 = vrot.slane %v517, %v523
      %v526 = vunpack.c.l.s4 1983009808
      %v527 = vunpack.c.0.s8 %v526
      %v528 = vlaneseq
      %v529 = vshrl.u32 %v528, 7
      %v530 = vsub.s32 %v527, %v529
      %v531 = vrot.slane %v515, %v530
      %532 = vrot.lane.b32.xlu0 %v524, 109
      %v533 = vpop.permute.xlu0 %532
      %534 = vrot.lane.b32.xlu0 %v531, 109
      %v535 = vpop.permute.xlu0 %534
      %v536 = vrot.slane %v533, 4
      %v537 = vrot.slane %v535, 4
      %v538 = vsel %vm323, %v536, %v537
      %v539 = vsel %vm508, %v533, %v538
      %v540 = vsel %vm508, %v535, %v537
      %543 = vst [vmem:[#allocation2 + $0x30] sm:$0xcc] %v539
      %544 = vst [vmem:[#allocation2 + $0x38] sm:$0xc] %v540
      %v545 = vld [vmem:[%s241] sm:$0xff]
      %v547 = vcombine.high %v545, %v545
      %v549 = vunpack.c.l.s4 1983009808
      %v550 = vunpack.c.0.s8 %v549
      %v551 = vlaneseq
      %v552 = vshrl.u32 %v551, 7
      %v553 = vsub.s32 %v550, %v552
      %v554 = vrot.slane %v545, %v553
      %v556 = vunpack.c.l.s4 1983009808
      %v557 = vunpack.c.0.s8 %v556
      %v558 = vlaneseq
      %v559 = vshrl.u32 %v558, 7
      %v560 = vsub.s32 %v557, %v559
      %v561 = vrot.slane %v547, %v560
      %562 = vrot.lane.b32.xlu0 %v554, 108
      %v563 = vpop.permute.xlu0 %562
      %564 = vrot.lane.b32.xlu0 %v561, 108
      %v565 = vpop.permute.xlu0 %564
      %v566 = vrot.slane %v563, 4
      %v567 = vrot.slane %v565, 4
      %v568 = vsel %vm323, %v566, %v567
      %vm569 = vcmask 883712
      %v570 = vsel %vm569, %v563, %v568
      %v571 = vsel %vm569, %v565, %v567
      %574 = vst [vmem:[#allocation2 + $0x3c] sm:$0x33] %v570
      %575 = vst [vmem:[#allocation2 + $0x44] sm:$0x3] %v571
      %v576 = vld [vmem:[%s246] sm:$0xff]
      %v578 = vcombine.low %v576, %v576
      %v580 = vunpack.c.l.s4 1983009808
      %v581 = vunpack.c.0.s8 %v580
      %v582 = vlaneseq
      %v583 = vshrl.u32 %v582, 7
      %v584 = vsub.s32 %v581, %v583
      %v585 = vrot.slane %v578, %v584
      %v587 = vunpack.c.l.s4 1983009808
      %v588 = vunpack.c.0.s8 %v587
      %v589 = vlaneseq
      %v590 = vshrl.u32 %v589, 7
      %v591 = vsub.s32 %v588, %v590
      %v592 = vrot.slane %v576, %v591
      %593 = vrot.lane.b32.xlu0 %v585, 108
      %v594 = vpop.permute.xlu0 %593
      %595 = vrot.lane.b32.xlu0 %v592, 108
      %v596 = vpop.permute.xlu0 %595
      %v597 = vrot.slane %v594, 4
      %v598 = vrot.slane %v596, 4
      %v599 = vsel %vm323, %v597, %v598
      %v600 = vsel %vm569, %v594, %v599
      %v601 = vsel %vm569, %v596, %v598
      %604 = vst [vmem:[#allocation2 + $0x3c] sm:$0xcc] %v600
      %605 = vst [vmem:[#allocation2 + $0x44] sm:$0xc] %v601
      %v606 = vld [vmem:[%s241] sm:$0xff]
      %v608 = vcombine.high %v606, %v606
      %v610 = vunpack.c.l.s4 1983009808
      %v611 = vunpack.c.0.s8 %v610
      %v612 = vlaneseq
      %v613 = vshrl.u32 %v612, 7
      %v614 = vsub.s32 %v611, %v613
      %v615 = vrot.slane %v606, %v614
      %v617 = vunpack.c.l.s4 1983009808
      %v618 = vunpack.c.0.s8 %v617
      %v619 = vlaneseq
      %v620 = vshrl.u32 %v619, 7
      %v621 = vsub.s32 %v618, %v620
      %v622 = vrot.slane %v608, %v621
      %623 = vrot.lane.b32.xlu0 %v615, 92
      %v624 = vpop.permute.xlu0 %623
      %625 = vrot.lane.b32.xlu0 %v622, 92
      %v626 = vpop.permute.xlu0 %625
      %v627 = vrot.slane %v624, 4
      %v628 = vrot.slane %v626, 4
      %v629 = vsel %vm323, %v627, %v628
      %vm630 = vcmask 752640
      %v631 = vsel %vm630, %v624, %v629
      %v632 = vsel %vm630, %v626, %v628
      %635 = vst [vmem:[#allocation2 + $0x48] sm:$0x33] %v631
      %636 = vst [vmem:[#allocation2 + $0x50] sm:$0x3] %v632
      %v637 = vld [vmem:[%s246] sm:$0xff]
      %v639 = vcombine.low %v637, %v637
      %v641 = vunpack.c.l.s4 1983009808
      %v642 = vunpack.c.0.s8 %v641
      %v643 = vlaneseq
      %v644 = vshrl.u32 %v643, 7
      %v645 = vsub.s32 %v642, %v644
      %v646 = vrot.slane %v639, %v645
      %v648 = vunpack.c.l.s4 1983009808
      %v649 = vunpack.c.0.s8 %v648
      %v650 = vlaneseq
      %v651 = vshrl.u32 %v650, 7
      %v652 = vsub.s32 %v649, %v651
      %v653 = vrot.slane %v637, %v652
      %654 = vrot.lane.b32.xlu0 %v646, 92
      %v655 = vpop.permute.xlu0 %654
      %656 = vrot.lane.b32.xlu0 %v653, 92
      %v657 = vpop.permute.xlu0 %656
      %v658 = vrot.slane %v655, 4
      %v659 = vrot.slane %v657, 4
      %v660 = vsel %vm323, %v658, %v659
      %v661 = vsel %vm630, %v655, %v660
      %v662 = vsel %vm630, %v657, %v659
      %665 = vst [vmem:[#allocation2 + $0x48] sm:$0xcc] %v661
      %666 = vst [vmem:[#allocation2 + $0x50] sm:$0xc] %v662
      %v667 = vld [vmem:[%s241] sm:$0xff]
      %v669 = vcombine.high %v667, %v667
      %v671 = vunpack.c.l.s4 1983009808
      %v672 = vunpack.c.0.s8 %v671
      %v673 = vlaneseq
      %v674 = vshrl.u32 %v673, 7
      %v675 = vsub.s32 %v672, %v674
      %v676 = vrot.slane %v667, %v675
      %v678 = vunpack.c.l.s4 1983009808
      %v679 = vunpack.c.0.s8 %v678
      %v680 = vlaneseq
      %v681 = vshrl.u32 %v680, 7
      %v682 = vsub.s32 %v679, %v681
      %v683 = vrot.slane %v669, %v682
      %684 = vrot.lane.b32.xlu0 %v676, 91
      %v685 = vpop.permute.xlu0 %684
      %686 = vrot.lane.b32.xlu0 %v683, 91
      %v687 = vpop.permute.xlu0 %686
      %v688 = vrot.slane %v685, 4
      %v689 = vrot.slane %v687, 4
      %v690 = vsel %vm323, %v688, %v689
      %vm691 = vcmask 744448
      %v692 = vsel %vm691, %v685, %v690
      %v693 = vsel %vm691, %v687, %v689
      %696 = vst [vmem:[#allocation2 + $0x54] sm:$0x33] %v692
      %697 = vst [vmem:[#allocation2 + $0x5c] sm:$0x3] %v693
      %v698 = vld [vmem:[%s246] sm:$0xff]
      %v700 = vcombine.low %v698, %v698
      %v702 = vunpack.c.l.s4 1983009808
      %v703 = vunpack.c.0.s8 %v702
      %v704 = vlaneseq
      %v705 = vshrl.u32 %v704, 7
      %v706 = vsub.s32 %v703, %v705
      %v707 = vrot.slane %v700, %v706
      %v709 = vunpack.c.l.s4 1983009808
      %v710 = vunpack.c.0.s8 %v709
      %v711 = vlaneseq
      %v712 = vshrl.u32 %v711, 7
      %v713 = vsub.s32 %v710, %v712
      %v714 = vrot.slane %v698, %v713
      %715 = vrot.lane.b32.xlu0 %v707, 91
      %v716 = vpop.permute.xlu0 %715
      %717 = vrot.lane.b32.xlu0 %v714, 91
      %v718 = vpop.permute.xlu0 %717
      %v719 = vrot.slane %v716, 4
      %v720 = vrot.slane %v718, 4
      %v721 = vsel %vm323, %v719, %v720
      %v722 = vsel %vm691, %v716, %v721
      %v723 = vsel %vm691, %v718, %v720
      %726 = vst [vmem:[#allocation2 + $0x54] sm:$0xcc] %v722
      %727 = vst [vmem:[#allocation2 + $0x5c] sm:$0xc] %v723
      %v728 = vld [vmem:[%s241] sm:$0xff]
      %v730 = vcombine.high %v728, %v728
      %v732 = vunpack.c.l.s4 1983009808
      %v733 = vunpack.c.0.s8 %v732
      %v734 = vlaneseq
      %v735 = vshrl.u32 %v734, 7
      %v736 = vsub.s32 %v733, %v735
      %v737 = vrot.slane %v728, %v736
      %v739 = vunpack.c.l.s4 1983009808
      %v740 = vunpack.c.0.s8 %v739
      %v741 = vlaneseq
      %v742 = vshrl.u32 %v741, 7
      %v743 = vsub.s32 %v740, %v742
      %v744 = vrot.slane %v730, %v743
      %745 = vrot.lane.b32.xlu0 %v737, 90
      %v746 = vpop.permute.xlu0 %745
      %747 = vrot.lane.b32.xlu0 %v744, 90
      %v748 = vpop.permute.xlu0 %747
      %v749 = vrot.slane %v746, 4
      %v750 = vrot.slane %v748, 4
      %v751 = vsel %vm323, %v749, %v750
      %vm752 = vcmask 736256
      %v753 = vsel %vm752, %v746, %v751
      %v754 = vsel %vm752, %v748, %v750
      %757 = vst [vmem:[#allocation2 + $0x60] sm:$0x33] %v753
      %758 = vst [vmem:[#allocation2 + $0x68] sm:$0x3] %v754
      %v759 = vld [vmem:[%s246] sm:$0xff]
      %v761 = vcombine.low %v759, %v759
      %v763 = vunpack.c.l.s4 1983009808
      %v764 = vunpack.c.0.s8 %v763
      %v765 = vlaneseq
      %v766 = vshrl.u32 %v765, 7
      %v767 = vsub.s32 %v764, %v766
      %v768 = vrot.slane %v761, %v767
      %v770 = vunpack.c.l.s4 1983009808
      %v771 = vunpack.c.0.s8 %v770
      %v772 = vlaneseq
      %v773 = vshrl.u32 %v772, 7
      %v774 = vsub.s32 %v771, %v773
      %v775 = vrot.slane %v759, %v774
      %776 = vrot.lane.b32.xlu0 %v768, 90
      %v777 = vpop.permute.xlu0 %776
      %778 = vrot.lane.b32.xlu0 %v775, 90
      %v779 = vpop.permute.xlu0 %778
      %v780 = vrot.slane %v777, 4
      %v781 = vrot.slane %v779, 4
      %v782 = vsel %vm323, %v780, %v781
      %v783 = vsel %vm752, %v777, %v782
      %v784 = vsel %vm752, %v779, %v781
      %787 = vst [vmem:[#allocation2 + $0x60] sm:$0xcc] %v783
      %788 = vst [vmem:[#allocation2 + $0x68] sm:$0xc] %v784
      %v789 = vld [vmem:[%s2] sm:$0x3]
      %v790 = vld [vmem:[#allocation2] sm:$0xff]
      %v791 = vld [vmem:[#allocation2 + $0x8] sm:$0xf]
      %v792 = vld [vmem:[#allocation2 + $0xc] sm:$0xff]
      %v793 = vld [vmem:[#allocation2 + $0x14] sm:$0xf]
      %v794 = vld [vmem:[#allocation2 + $0x18] sm:$0xff]
      %v795 = vld [vmem:[#allocation2 + $0x20] sm:$0xf]
      %v796 = vld [vmem:[#allocation2 + $0x24] sm:$0xff]
      %v797 = vld [vmem:[#allocation2 + $0x2c] sm:$0xf]
      %v798 = vld [vmem:[#allocation2 + $0x30] sm:$0xff]
      %v799 = vld [vmem:[#allocation2 + $0x38] sm:$0xf]
      %v800 = vld [vmem:[#allocation2 + $0x3c] sm:$0xff]
      %v801 = vld [vmem:[#allocation2 + $0x44] sm:$0xf]
      %v802 = vld [vmem:[#allocation2 + $0x48] sm:$0xff]
      %v803 = vld [vmem:[#allocation2 + $0x50] sm:$0xf]
      %v804 = vld [vmem:[#allocation2 + $0x54] sm:$0xff]
      %v805 = vld [vmem:[#allocation2 + $0x5c] sm:$0xf]
      %v806 = vld [vmem:[#allocation2 + $0x60] sm:$0xff]
      %v807 = vld [vmem:[#allocation2 + $0x68] sm:$0xf]
      %v826 = vunpack.c.l.b16 %v790
      %v827 = vunpack.c.h.b16 %v790
      %v828 = vunpack.c.l.b16 %v791
      %v829 = vunpack.c.l.b16 %v792
      %v830 = vunpack.c.h.b16 %v792
      %v831 = vunpack.c.l.b16 %v793
      %v832 = vunpack.c.l.b16 %v794
      %v833 = vunpack.c.h.b16 %v794
      %v834 = vunpack.c.l.b16 %v795
      %v835 = vunpack.c.l.b16 %v796
      %v836 = vunpack.c.h.b16 %v796
      %v837 = vunpack.c.l.b16 %v797
      %v838 = vunpack.c.l.b16 %v798
      %v839 = vunpack.c.h.b16 %v798
      %v840 = vunpack.c.l.b16 %v799
      %v841 = vunpack.c.l.b16 %v800
      %v842 = vunpack.c.h.b16 %v800
      %v843 = vunpack.c.l.b16 %v801
      %v844 = vunpack.c.l.b16 %v802
      %v845 = vunpack.c.h.b16 %v802
      %v846 = vunpack.c.l.b16 %v803
      %v847 = vunpack.c.l.b16 %v804
      %v848 = vunpack.c.h.b16 %v804
      %v849 = vunpack.c.l.b16 %v805
      %v850 = vunpack.c.l.b16 %v806
      %v851 = vunpack.c.h.b16 %v806
      %v852 = vunpack.c.l.b16 %v807
      %v853 = vpack.c.b16 %v829, %v826
      %v854 = vpack.c.b16 %v830, %v827
      %v855 = vpack.c.b16 %v831, %v828
      %v856 = vpack.c.b16 %v835, %v832
      %v857 = vpack.c.b16 %v836, %v833
      %v858 = vpack.c.b16 %v837, %v834
      %v859 = vpack.c.b16 %v841, %v838
      %v860 = vpack.c.b16 %v842, %v839
      %v861 = vpack.c.b16 %v843, %v840
      %v862 = vpack.c.b16 %v847, %v844
      %v863 = vpack.c.b16 %v848, %v845
      %v864 = vpack.c.b16 %v849, %v846
      %v865 = vpack.c.b16 %v850, %v850
      %v866 = vpack.c.b16 %v851, %v851
      %v867 = vpack.c.b16 %v852, %v852
      %vm880 = vcmask 588800
      %v882 = vsel %vm880, %v789, 0
      %vm884 = vcmask 1043456
      %v886 = vsel %vm884, %v865, 0
      %v889 = vsel %vm884, %v866, 0
      %v892 = vsel %vm884, %v867, 0
      %894 = vmatprep.subr.bf16.mxu0 0
      %895 = vmatpush1.bf16.msra.mxu0 0
      %896 = vmatprep.subr.bf16.mxu0 0
      %897 = vmatpush1.bf16.msra.mxu0 0
      %898 = vmatprep.subr.bf16.mxu0 0
      %899 = vmatpush1.bf16.msra.mxu0 0
      %900 = vmatprep.subr.bf16.mxu0 %v889
      %901 = vmatpush1.bf16.msra.mxu0 %v886
      %902 = vmatprep.subr.bf16.mxu0 %v863
      %903 = vmatpush1.bf16.msra.mxu0 %v862
      %904 = vmatprep.subr.bf16.mxu0 %v860
      %905 = vmatpush1.bf16.msra.mxu0 %v859
      %906 = vmatprep.subr.bf16.mxu0 %v857
      %907 = vmatpush1.bf16.msra.mxu0 %v856
      %908 = vmatprep.subr.bf16.mxu0 %v854
      %909 = vmatpush1.bf16.msra.mxu0 %v853
      %910 = vmatprep.subr.bf16.mxu0 0
      %911 = vmatpush2.bf16.msra.mxu0 0
      %912 = vmatprep.subr.bf16.mxu0 0
      %913 = vmatpush2.bf16.msra.mxu0 0
      %914 = vmatprep.subr.bf16.mxu0 0
      %915 = vmatpush2.bf16.msra.mxu0 0
      %916 = vmatprep.subr.bf16.mxu0 0
      %917 = vmatpush2.bf16.msra.mxu0 0
      %918 = vmatprep.subr.bf16.mxu0 0
      %919 = vmatpush2.bf16.msra.mxu0 0
      %920 = vmatprep.subr.bf16.mxu0 0
      %921 = vmatpush2.bf16.msra.mxu0 0
      %922 = vmatprep.subr.bf16.mxu0 0
      %923 = vmatpush2.bf16.msra.mxu0 0
      %924 = vmatprep.subr.bf16.mxu0 0
      %925 = vmatpush2.bf16.msra.mxu0 0
      %926 = vmatprep.mubr.bf16.mxu0 0
      %927 = vmatmul.mubr.bf16.gmra.mxu0 %v882
      %v928 = vpop.f32.mrf.mxu0
      %v929 = vadd.f32 0.0, %v928
      %v930 = vpop.f32.mrf.mxu0
      %v931 = vadd.f32 0.0, %v930
      %v932 = vpop.f32.mrf.mxu0
      %v933 = vpop.f32.mrf.mxu0
      %934 = vdwg.mxu0
      %935 = vmatprep.subr.bf16.mxu0 0
      %936 = vmatpush1.bf16.msra.mxu0 0
      %937 = vmatprep.subr.bf16.mxu0 0
      %938 = vmatpush1.bf16.msra.mxu0 0
      %939 = vmatprep.subr.bf16.mxu0 0
      %940 = vmatpush1.bf16.msra.mxu0 0
      %941 = vmatprep.subr.bf16.mxu0 0
      %942 = vmatpush1.bf16.msra.mxu0 %v892
      %943 = vmatprep.subr.bf16.mxu0 0
      %944 = vmatpush1.bf16.msra.mxu0 %v864
      %945 = vmatprep.subr.bf16.mxu0 0
      %946 = vmatpush1.bf16.msra.mxu0 %v861
      %947 = vmatprep.subr.bf16.mxu0 0
      %948 = vmatpush1.bf16.msra.mxu0 %v858
      %949 = vmatprep.subr.bf16.mxu0 0
      %950 = vmatpush1.bf16.msra.mxu0 %v855
      %951 = vmatprep.subr.bf16.mxu0 0
      %952 = vmatpush2.bf16.msra.mxu0 0
      %953 = vmatprep.subr.bf16.mxu0 0
      %954 = vmatpush2.bf16.msra.mxu0 0
      %955 = vmatprep.subr.bf16.mxu0 0
      %956 = vmatpush2.bf16.msra.mxu0 0
      %957 = vmatprep.subr.bf16.mxu0 0
      %958 = vmatpush2.bf16.msra.mxu0 0
      %959 = vmatprep.subr.bf16.mxu0 0
      %960 = vmatpush2.bf16.msra.mxu0 0
      %961 = vmatprep.subr.bf16.mxu0 0
      %962 = vmatpush2.bf16.msra.mxu0 0
      %963 = vmatprep.subr.bf16.mxu0 0
      %964 = vmatpush2.bf16.msra.mxu0 0
      %965 = vmatprep.subr.bf16.mxu0 0
      %966 = vmatpush2.bf16.msra.mxu0 0
      %967 = vmatprep.mubr.bf16.mxu0 0
      %968 = vmatmul.mubr.bf16.gmra.mxu0 %v882
      %v969 = vpop.f32.mrf.mxu0
      %v970 = vadd.f32 0.0, %v969
      %v971 = vpop.f32.mrf.mxu0
      %v972 = vpop.f32.mrf.mxu0
      %v973 = vpop.f32.mrf.mxu0
      %974 = vdwg.mxu0
      %v976 = vlaneseq
      %v977 = vshrl.u32 %v976, 7
      %v978 = vsub.s32 0, %v977
      %v979 = vrot.slane %v257, %v978
      %v980 = vlaneseq
      %v981 = vshrl.u32 %v980, 7
      %v982 = vsub.s32 1, %v981
      %v983 = vrot.slane %v257, %v982
      %v984 = vlaneseq
      %v985 = vshrl.u32 %v984, 7
      %v986 = vsub.s32 2, %v985
      %v987 = vrot.slane %v257, %v986
      %v991 = vmul.f32 %v929, %v979
      %v992 = vmul.f32 %v931, %v983
      %v993 = vmul.f32 %v970, %v987
      %v994 = vsel %vm884, %v991, 0.0
      %v995 = vsel %vm884, %v992, 0.0
      %v996 = vadd.f32 %v994, %v995
      %v997 = vsel %vm884, %v993, 0.0
      %v998 = vadd.f32 %v996, %v997
      %999 = vadd.xlane.f32.xlu0 %v998
      %v1000 = vpop.xlane.xlu0 %999
      %v1001 = vmul.f32 %v991, %v929
      %v1002 = vmul.f32 %v992, %v931
      %v1003 = vmul.f32 %v993, %v970
      %v1004 = vsel %vm884, %v1001, 0.0
      %v1005 = vsel %vm884, %v1002, 0.0
      %v1006 = vadd.f32 %v1004, %v1005
      %v1007 = vsel %vm884, %v1003, 0.0
      %v1008 = vadd.f32 %v1006, %v1007
      %1009 = vadd.xlane.f32.xlu0 %v1008
      %v1010 = vpop.xlane.xlu0 %1009
      %vm1011 = vcmask 7168
      %v1012 = vsel %vm1011, %v1000, %v1010
      %v1013 = vpack.c.bf16 %v929, %v929
      %v1014 = vpack.c.bf16 %v931, %v931
      %v1015 = vpack.c.bf16 %v970, %v970
      %v1019 = vcombine.low %v1013, %v1014
      %v1021 = vunpack.c.l.s4 1983009808
      %v1022 = vunpack.c.0.s8 %v1021
      %v1023 = vlaneseq
      %v1024 = vshrl.u32 %v1023, 7
      %v1025 = vsub.s32 %v1022, %v1024
      %v1026 = vrot.slane %v1019, %v1025
      %v1028 = vunpack.c.l.s4 1983009808
      %v1029 = vunpack.c.0.s8 %v1028
      %v1030 = vlaneseq
      %v1031 = vshrl.u32 %v1030, 7
      %v1032 = vsub.s32 %v1029, %v1031
      %v1033 = vrot.slane %v1015, %v1032
      %v1034 = vcombine.low %v1026, %v1033
      %1036 = vst [vmem:[%s251] sm:$0x3f] %v1034
      %vm1037 = vcmask 11264
      %1038 = vst.msk [vmem:[%s255] sm:$0xf] %vm1037, %v1012
      %p1039 = scmp.lt.s32.totalorder %s17, 1
      %s1040 = scalar_select %p1039, %s17, 1
      %s1041 = smul.addr %s1040, 3
      %s1042 = smul.addr %s1041, 2
      %s1043 = scalar_lea.vmem %s4, %s1042
      %p1044 = scmp.lt.s32.totalorder %s17, 1
      %s1045 = scalar_select %p1044, %s17, 1
      %s1046 = smul.addr %s1045, 4
      %s1047 = scalar_lea.vmem %s5, %s1046
      // Predicated region
      $region37: #{decoder_block_forward.5} parent=35 // pred_check
        %p1048 = pneg %p129
      $region38: #{decoder_block_forward.5} parent=35 // pred_check_branch
        %1050 = sbr.rel (%p1048) target = $region40
      $region39: #{decoder_block_forward.5} parent=35 // pred_region
        _
      $region40: #{decoder_block_forward.5} parent=35 // pred_fallthru
        _
      // Predicated region
      $region41: #{decoder_block_forward.5} parent=35 // pred_check
        %p1051 = pneg %p155
      $region42: #{decoder_block_forward.5} parent=35 // pred_check_branch
        %1053 = sbr.rel (%p1051) target = $region44
      $region43: #{decoder_block_forward.5} parent=35 // pred_region
        _
      $region44: #{decoder_block_forward.5} parent=35 // pred_fallthru
        _
    $region36: #{decoder_block_forward.5} parent=5 // pred_fallthru
      _
    %p1054 = scmp.le.s32.totalorder 2, %s12
    // Predicated region
    $region45: #{decoder_block_forward.5} parent=5 // pred_check
      %p1055 = pneg %p1054
    $region46: #{decoder_block_forward.5} parent=5 // pred_check_branch
      %1057 = sbr.rel (%p1055) target = $region48
    $region47: #{decoder_block_forward.5} parent=5 // pred_region
      %s1058 = ssub.s32 %s12, 2
      // Predicated region
      $region49: #{decoder_block_forward.5} parent=47 // pred_check
        %p1059 = pneg %p135
      $region50: #{decoder_block_forward.5} parent=47 // pred_check_branch
        %1061 = sbr.rel (%p1059) target = $region52
      $region51: #{decoder_block_forward.5} parent=47 // pred_region
        %p1062 = scmp.lt.s32.totalorder %s18, 1
        %s1063 = scalar_select %p1062, %s18, 1
        %s1064 = smul.addr %s1063, 3
        %s1065 = smul.addr %s1064, 2
        %s1066 = scalar_lea.vmem %s4, %s1065
      $region52: #{decoder_block_forward.5} parent=47 // pred_fallthru
        _
      // Predicated region
      $region53: #{decoder_block_forward.5} parent=47 // pred_check
        %p1067 = pneg %p161
      $region54: #{decoder_block_forward.5} parent=47 // pred_check_branch
        %1069 = sbr.rel (%p1067) target = $region56
      $region55: #{decoder_block_forward.5} parent=47 // pred_region
        %p1070 = scmp.lt.s32.totalorder %s18, 1
        %s1071 = scalar_select %p1070, %s18, 1
        %s1072 = smul.addr %s1071, 4
        %s1073 = scalar_lea.vmem %s5, %s1072
      $region56: #{decoder_block_forward.5} parent=47 // pred_fallthru
        _
    $region48: #{decoder_block_forward.5} parent=5 // pred_fallthru
      _
  $region6: #{decoder_block_forward.5} parent=0 // loop_footer
    %s16 = sadd.s32 1, %s12
  $region7: #{decoder_block_forward.5} parent=0 // loop_footer_branch
    %11 = sbr.rel target = $region3
  $region8: #{decoder_block_forward.5} parent=0 // loop_exit
    _

// kernel: decoder_block_forward.6
$region0: #{decoder_block_forward.6}
  #allocation0 [shape = 'u32[]', space=smem, size = 0x4, offset = 0x4, fixed_abs, tag = 'smem constant byte address 0x4 - core index']
  #allocation1 [shape = 'u32[144,128]{1,0:T(1,128)}', space=vmem, size = 0x12000, scoped, tag = 'internal scratch']
  #allocation2 [shape = 'bf16[4,422]{1,0:T(4,128)(2,1)}', space=vmem, size = 0x1000, scoped, tag = 'scratch operand']
  #allocation3 [shape = 'bf16[36,384]{1,0:T(8,128)(2,1)}', space=vmem, size = 0x7800, scoped, tag = 'scratch operand']
  %s0 = inlined_call_operand.vmem [shape: bf16[2,4,384], index: 0, kind: input, shape index: {}]
  %s1 = inlined_call_operand.vmem [shape: bf16[4,36], index: 1, kind: input, shape index: {}]
  %s2 = inlined_call_operand.vmem [shape: f32[4,1], index: 2, kind: input, shape index: {}]
  %s3 = inlined_call_operand.vmem [shape: f32[4,1], index: 3, kind: input, shape index: {}]
  %s4 = inlined_call_operand.vmem [shape: f32[1,384], index: 4, kind: input, shape index: {}]
  %s5 = inlined_call_operand.vmem [shape: bf16[2,4,384], index: 5, kind: output, shape index: {0}]
  %s6 = inlined_call_operand.vmem [shape: f32[2,4,2], index: 6, kind: output, shape index: {1}]
  %7 = xla_tuple %s5, %s6
  %s8 = sld [smem:[#allocation0]]
  $region61: #{decoder_block_forward.6} parent=0
    _
  %s10 = ssub.s32 1, %s8
  %s11 = scalar_select 0, %s10, %s8
  loop: start=0, step=1, limit=4
  $region2: #{decoder_block_forward.6} parent=0 // loop_pre_header
    _
  $region3: #{decoder_block_forward.6} parent=0 // loop_header
    %s13 = sphi 0, %s17
    %p14 = scmp.ge.s32.totalorder %s13, 4
    %s23 = sphi 0, %s25
    %s26 = sphi 0, %s23
    %s27 = sphi 0, %s26
    %s43 = sphi 0, %s27
    %s47 = sphi 0, %s47
    %s49 = sphi 0, %s47
    %s50 = sphi 0, %s49
    %s64 = sphi 0, %s50
    %s68 = sphi 0, %s68
    %s70 = sphi 0, %s68
    %s71 = sphi 0, %s70
    %s85 = sphi 0, %s71
    %s89 = sphi 0, %s89
    %s91 = sphi 0, %s89
    %s92 = sphi 0, %s91
    %s106 = sphi 0, %s92
    %s110 = sphi 0, %s110
    %s112 = sphi 0, %s110
    %s113 = sphi 0, %s112
    %s127 = sphi 0, %s113
    %s133 = sphi 0, %s135
    %s136 = sphi 0, %s133
    %s137 = sphi 0, %s136
    %s153 = sphi 0, %s137
    %s159 = sphi 0, %s161
    %s162 = sphi 0, %s159
    %s163 = sphi 0, %s162
    %s179 = sphi 0, %s163
  $region4: #{decoder_block_forward.6} parent=0 // loop_header_branch
    %16 = sbr.rel (%p14) target = $region8
  $region5: #{decoder_block_forward.6} parent=0 // loop_body
    %s18 = ssub.s32 %s13, 1
    %s19 = ssub.s32 %s13, 2
    %s20 = sadd.s32 %s13, 1
    %s21 = ssub.s32 %s13, %s20
    %p22 = scmp.eq.s32.totalorder %s21, 0
    %s24 = sadd.s32 %s23, 1
    %s25 = scalar_select %p22, %s23, %s24
    %p28 = pneg %p22
    %p29 = scmp.eq.s32.totalorder %s13, 1
    %p30 = por %p28, %p29
    %p31 = scmp.ne.s32.totalorder %s23, %s26
    %p32 = scmp.eq.s32.totalorder %s13, 0
    %p33 = por %p31, %p32
    %p34 = scmp.ne.s32.totalorder %s23, %s26
    %p35 = scmp.eq.s32.totalorder %s18, 1
    %p36 = por %p34, %p35
    %p37 = scmp.ne.s32.totalorder %s26, %s27
    %p38 = scmp.eq.s32.totalorder %s18, 0
    %p39 = por %p37, %p38
    %p40 = scmp.ne.s32.totalorder %s26, %s27
    %p41 = scmp.eq.s32.totalorder %s19, 1
    %p42 = por %p40, %p41
    %p44 = scmp.ne.s32.totalorder %s27, %s43
    %p45 = scmp.eq.s32.totalorder %s19, 0
    %p46 = por %p44, %p45
    %s48 = sadd.s32 %s47, 1
    %p51 = scmp.eq.s32.totalorder %s13, 1
    %p52 = scmp.ne.s32.totalorder %s47, %s49
    %p53 = scmp.eq.s32.totalorder %s13, 0
    %p54 = por %p52, %p53
    %p55 = scmp.ne.s32.totalorder %s47, %s49
    %p56 = scmp.eq.s32.totalorder %s18, 1
    %p57 = por %p55, %p56
    %p58 = scmp.ne.s32.totalorder %s49, %s50
    %p59 = scmp.eq.s32.totalorder %s18, 0
    %p60 = por %p58, %p59
    %p61 = scmp.ne.s32.totalorder %s49, %s50
    %p62 = scmp.eq.s32.totalorder %s19, 1
    %p63 = por %p61, %p62
    %p65 = scmp.ne.s32.totalorder %s50, %s64
    %p66 = scmp.eq.s32.totalorder %s19, 0
    %p67 = por %p65, %p66
    %s69 = sadd.s32 %s68, 1
    %p72 = scmp.eq.s32.totalorder %s13, 1
    %p73 = scmp.ne.s32.totalorder %s68, %s70
    %p74 = scmp.eq.s32.totalorder %s13, 0
    %p75 = por %p73, %p74
    %p76 = scmp.ne.s32.totalorder %s68, %s70
    %p77 = scmp.eq.s32.totalorder %s18, 1
    %p78 = por %p76, %p77
    %p79 = scmp.ne.s32.totalorder %s70, %s71
    %p80 = scmp.eq.s32.totalorder %s18, 0
    %p81 = por %p79, %p80
    %p82 = scmp.ne.s32.totalorder %s70, %s71
    %p83 = scmp.eq.s32.totalorder %s19, 1
    %p84 = por %p82, %p83
    %p86 = scmp.ne.s32.totalorder %s71, %s85
    %p87 = scmp.eq.s32.totalorder %s19, 0
    %p88 = por %p86, %p87
    %s90 = sadd.s32 %s89, 1
    %p93 = scmp.eq.s32.totalorder %s13, 1
    %p94 = scmp.ne.s32.totalorder %s89, %s91
    %p95 = scmp.eq.s32.totalorder %s13, 0
    %p96 = por %p94, %p95
    %p97 = scmp.ne.s32.totalorder %s89, %s91
    %p98 = scmp.eq.s32.totalorder %s18, 1
    %p99 = por %p97, %p98
    %p100 = scmp.ne.s32.totalorder %s91, %s92
    %p101 = scmp.eq.s32.totalorder %s18, 0
    %p102 = por %p100, %p101
    %p103 = scmp.ne.s32.totalorder %s91, %s92
    %p104 = scmp.eq.s32.totalorder %s19, 1
    %p105 = por %p103, %p104
    %p107 = scmp.ne.s32.totalorder %s92, %s106
    %p108 = scmp.eq.s32.totalorder %s19, 0
    %p109 = por %p107, %p108
    %s111 = sadd.s32 %s110, 1
    %p114 = scmp.eq.s32.totalorder %s13, 1
    %p115 = scmp.ne.s32.totalorder %s110, %s112
    %p116 = scmp.eq.s32.totalorder %s13, 0
    %p117 = por %p115, %p116
    %p118 = scmp.ne.s32.totalorder %s110, %s112
    %p119 = scmp.eq.s32.totalorder %s18, 1
    %p120 = por %p118, %p119
    %p121 = scmp.ne.s32.totalorder %s112, %s113
    %p122 = scmp.eq.s32.totalorder %s18, 0
    %p123 = por %p121, %p122
    %p124 = scmp.ne.s32.totalorder %s112, %s113
    %p125 = scmp.eq.s32.totalorder %s19, 1
    %p126 = por %p124, %p125
    %p128 = scmp.ne.s32.totalorder %s113, %s127
    %p129 = scmp.eq.s32.totalorder %s19, 0
    %p130 = por %p128, %p129
    %s131 = ssub.s32 %s13, %s20
    %p132 = scmp.eq.s32.totalorder %s131, 0
    %s134 = sadd.s32 %s133, 1
    %s135 = scalar_select %p132, %s133, %s134
    %p138 = pneg %p132
    %p139 = scmp.eq.s32.totalorder %s13, 1
    %p140 = por %p138, %p139
    %p141 = scmp.ne.s32.totalorder %s133, %s136
    %p142 = scmp.eq.s32.totalorder %s13, 0
    %p143 = por %p141, %p142
    %p144 = scmp.ne.s32.totalorder %s133, %s136
    %p145 = scmp.eq.s32.totalorder %s18, 1
    %p146 = por %p144, %p145
    %p147 = scmp.ne.s32.totalorder %s136, %s137
    %p148 = scmp.eq.s32.totalorder %s18, 0
    %p149 = por %p147, %p148
    %p150 = scmp.ne.s32.totalorder %s136, %s137
    %p151 = scmp.eq.s32.totalorder %s19, 1
    %p152 = por %p150, %p151
    %p154 = scmp.ne.s32.totalorder %s137, %s153
    %p155 = scmp.eq.s32.totalorder %s19, 0
    %p156 = por %p154, %p155
    %s157 = ssub.s32 %s13, %s20
    %p158 = scmp.eq.s32.totalorder %s157, 0
    %s160 = sadd.s32 %s159, 1
    %s161 = scalar_select %p158, %s159, %s160
    %p164 = pneg %p158
    %p165 = scmp.eq.s32.totalorder %s13, 1
    %p166 = por %p164, %p165
    %p167 = scmp.ne.s32.totalorder %s159, %s162
    %p168 = scmp.eq.s32.totalorder %s13, 0
    %p169 = por %p167, %p168
    %p170 = scmp.ne.s32.totalorder %s159, %s162
    %p171 = scmp.eq.s32.totalorder %s18, 1
    %p172 = por %p170, %p171
    %p173 = scmp.ne.s32.totalorder %s162, %s163
    %p174 = scmp.eq.s32.totalorder %s18, 0
    %p175 = por %p173, %p174
    %p176 = scmp.ne.s32.totalorder %s162, %s163
    %p177 = scmp.eq.s32.totalorder %s19, 1
    %p178 = por %p176, %p177
    %p180 = scmp.ne.s32.totalorder %s163, %s179
    %p181 = scmp.eq.s32.totalorder %s19, 0
    %p182 = por %p180, %p181
    %p183 = scmp.le.s32.totalorder 1, %s13
    %p184 = scmp.lt.s32.totalorder %s13, 3
    %p185 = pnand %p183, %p184
    %p186 = pneg %p185
    // Predicated region
    $region9: #{decoder_block_forward.6} parent=5 // pred_check
      _
    $region10: #{decoder_block_forward.6} parent=5 // pred_check_branch
      %188 = sbr.rel (%p185) target = $region12
    $region11: #{decoder_block_forward.6} parent=5 // pred_region
      %s189 = ssub.s32 %s13, 1
      // Predicated region
      $region13: #{decoder_block_forward.6} parent=11 // pred_check
        %p190 = pneg %p60
      $region14: #{decoder_block_forward.6} parent=11 // pred_check_branch
        %192 = sbr.rel (%p190) target = $region16
      $region15: #{decoder_block_forward.6} parent=11 // pred_region
        _
      $region16: #{decoder_block_forward.6} parent=11 // pred_fallthru
        _
      // Predicated region
      $region17: #{decoder_block_forward.6} parent=11 // pred_check
        %p193 = pneg %p81
      $region18: #{decoder_block_forward.6} parent=11 // pred_check_branch
        %195 = sbr.rel (%p193) target = $region20
      $region19: #{decoder_block_forward.6} parent=11 // pred_region
        _
      $region20: #{decoder_block_forward.6} parent=11 // pred_fallthru
        _
      // Predicated region
      $region21: #{decoder_block_forward.6} parent=11 // pred_check
        %p196 = pneg %p102
      $region22: #{decoder_block_forward.6} parent=11 // pred_check_branch
        %198 = sbr.rel (%p196) target = $region24
      $region23: #{decoder_block_forward.6} parent=11 // pred_region
        _
      $region24: #{decoder_block_forward.6} parent=11 // pred_fallthru
        _
      // Predicated region
      $region25: #{decoder_block_forward.6} parent=11 // pred_check
        %p199 = pneg %p123
      $region26: #{decoder_block_forward.6} parent=11 // pred_check_branch
        %201 = sbr.rel (%p199) target = $region28
      $region27: #{decoder_block_forward.6} parent=11 // pred_region
        _
      $region28: #{decoder_block_forward.6} parent=11 // pred_fallthru
        _
    $region12: #{decoder_block_forward.6} parent=5 // pred_fallthru
      _
    %p202 = scmp.lt.s32.totalorder %s13, 2
    // Predicated region
    $region29: #{decoder_block_forward.6} parent=5 // pred_check
      %p203 = pneg %p202
    $region30: #{decoder_block_forward.6} parent=5 // pred_check_branch
      %205 = sbr.rel (%p203) target = $region32
    $region31: #{decoder_block_forward.6} parent=5 // pred_region
      // Predicated region
      $region33: #{decoder_block_forward.6} parent=31 // pred_check
        %p206 = pneg %p33
      $region34: #{decoder_block_forward.6} parent=31 // pred_check_branch
        %208 = sbr.rel (%p206) target = $region36
      $region35: #{decoder_block_forward.6} parent=31 // pred_region
        %p209 = scmp.lt.s32.totalorder %s13, 1
        %s210 = scalar_select %p209, %s13, 1
        %s211 = smul.addr %s210, 3
        %s212 = smul.addr %s211, 2
        %s213 = scalar_lea.vmem %s0, %s212
      $region36: #{decoder_block_forward.6} parent=31 // pred_fallthru
        _
    $region32: #{decoder_block_forward.6} parent=5 // pred_fallthru
      _
    %p214 = scmp.le.s32.totalorder 1, %s13
    %p215 = scmp.lt.s32.totalorder %s13, 3
    %p216 = pnand %p214, %p215
    %p217 = pneg %p216
    // Predicated region
    $region37: #{decoder_block_forward.6} parent=5 // pred_check
      _
    $region38: #{decoder_block_forward.6} parent=5 // pred_check_branch
      %219 = sbr.rel (%p216) target = $region40
    $region39: #{decoder_block_forward.6} parent=5 // pred_region
      %s220 = ssub.s32 %s13, 1
      %p221 = scmp.lt.s32.totalorder %s18, 1
      %s222 = scalar_select %p221, %s18, 1
      %s223 = smul.addr %s222, 3
      %s224 = smul.addr %s223, 2
      %s225 = scalar_lea.vmem %s0, %s224
      %p226 = pneg %p39
      %p227 = pneg %p36
      %p228 = pneg %p60
      %p229 = pneg %p57
      %p230 = pneg %p81
      %p231 = pneg %p78
      %p232 = pneg %p102
      %p233 = pneg %p99
      %p234 = pneg %p123
      %p235 = pneg %p120
      %p236 = pneg %p149
      %p237 = pneg %p146
      %p238 = scmp.lt.s32.totalorder %s18, 1
      %s239 = scalar_select %p238, %s18, 1
      %s240 = smul.addr %s239, 3
      %s241 = smul.addr %s240, 2
      %s242 = scalar_lea.vmem %s5, %s241
      %p243 = pneg %p175
      %p244 = pneg %p172
      %p245 = scmp.lt.s32.totalorder %s18, 1
      %s246 = scalar_select %p245, %s18, 1
      %s247 = smul.addr %s246, 4
      %s248 = scalar_lea.vmem %s6, %s247
      %p249 = scmp.lt.s32.totalorder %s18, 1
      %s250 = scalar_select %p249, %s18, 1
      %s251 = smul.addr %s250, 3
      %s252 = smul.addr %s251, 2
      %s253 = scalar_lea.vmem %s0, %s252
      %p254 = scmp.lt.s32.totalorder %s18, 1
      %s255 = scalar_select %p254, %s18, 1
      %s256 = smul.addr %s255, 3
      %s257 = smul.addr %s256, 2
      %s258 = scalar_lea.vmem %s5, %s257
      %p259 = scmp.lt.s32.totalorder %s18, 1
      %s260 = scalar_select %p259, %s18, 1
      %s261 = smul.addr %s260, 4
      %s262 = scalar_lea.vmem %s6, %s261
      %v264 = vld [vmem:[%s4] sm:$0x7]
      %v265 = vld [vmem:[%s253] sm:$0x3f]
      %v266 = vunpack.c.l.bf16 %v265
      %v267 = vunpack.c.h.bf16 %v265
      %v268 = vld [vmem:[%s2] sm:$0xf]
      %270 = vset.pattern.permute.xlu0 0
      %271 = vperm.xlu0 %270, %v268
      %v272 = vpop.permute.xlu0 %271
      %v274 = vunpack.c.l.s4 839922192
      %v275 = vunpack.c.0.s8 %v274
      %v276 = vlaneseq
      %v277 = vshrl.u32 %v276, 7
      %v278 = vsub.s32 %v275, %v277
      %v279 = vrot.slane %v272, %v278
      %v281 = vmul.f32 %v266, %v279
      %v282 = vmul.f32 %v267, %v279
      %v283 = vld [vmem:[%s3] sm:$0xf]
      %285 = vset.pattern.permute.xlu0 0
      %286 = vperm.xlu0 %285, %v283
      %v287 = vpop.permute.xlu0 %286
      %v289 = vunpack.c.l.s4 839922192
      %v290 = vunpack.c.0.s8 %v289
      %v291 = vlaneseq
      %v292 = vshrl.u32 %v291, 7
      %v293 = vsub.s32 %v290, %v292
      %v294 = vrot.slane %v287, %v293
      %v296 = vadd.f32 %v281, %v294
      %v297 = vadd.f32 %v282, %v294
      %v298 = vmax.f32 %v296, 0.0
      %v299 = vmax.f32 %v297, 0.0
      %v301 = vlaneseq
      %v302 = vshrl.u32 %v301, 7
      %v303 = vsub.s32 0, %v302
      %v304 = vrot.slane %v264, %v303
      %v305 = vlaneseq
      %v306 = vshrl.u32 %v305, 7
      %v307 = vsub.s32 1, %v306
      %v308 = vrot.slane %v264, %v307
      %v309 = vlaneseq
      %v310 = vshrl.u32 %v309, 7
      %v311 = vsub.s32 2, %v310
      %v312 = vrot.slane %v264, %v311
      %v316 = vcombine.low %v304, %v308
      %v318 = vmul.f32 %v298, %v316
      %v319 = vmul.f32 %v299, %v312
      %vm320 = vcmask 148480
      %321 = vst.msk [vmem:[#allocation2] sm:$0x3] %vm320, 0
      %vm322 = vcmask 304280
      %323 = vst.msk [vmem:[#allocation2 + $0x6] sm:$0x3] %vm322, 0
      %v325 = vcombine.high %v318, %v318
      %v327 = vpack.c.bf16 %v318, %v318
      %v328 = vpack.c.bf16 %v325, %v325
      %v329 = vpack.c.bf16 %v319, %v319
      %v333 = vcombine.low %v327, %v328
      %v335 = vunpack.c.l.s4 1983009808
      %v336 = vunpack.c.0.s8 %v335
      %v337 = vlaneseq
      %v338 = vshrl.u32 %v337, 7
      %v339 = vsub.s32 %v336, %v338
      %v340 = vrot.slane %v333, %v339
      %v342 = vunpack.c.l.s4 1983009808
      %v343 = vunpack.c.0.s8 %v342
      %v344 = vlaneseq
      %v345 = vshrl.u32 %v344, 7
      %v346 = vsub.s32 %v343, %v345
      %v347 = vrot.slane %v329, %v346
      %v348 = vcombine.low %v340, %v347
      %349 = vrot.lane.b32.xlu0 %v348, 19
      %v350 = vpop.permute.xlu0 %349
      %v351 = vrot.slane %v350, 6
      %vm352 = vcmask 154624
      %v353 = vsel %vm352, %v351, %v350
      %vm355 = vcmask 1041560
      %vm356 = vcmask 1043458
      %vm357 = vmor %vm356, %vm355
      %vm358 = vcmask 1045508
      %vm359 = vmor %vm358, %vm357
      %vm360 = vcmask 154630
      %vm361 = vmor %vm360, %vm359
      %362 = vst.msk [vmem:[#allocation2] sm:$0xff] %vm361, %v353
      %v363 = vld [vmem:[#allocation2] sm:$0x3f]
      %v365 = vcombine.high %v363, %v363
      %v367 = vunpack.c.l.s4 1983009808
      %v368 = vunpack.c.0.s8 %v367
      %v369 = vlaneseq
      %v370 = vshrl.u32 %v369, 7
      %v371 = vsub.s32 %v368, %v370
      %v372 = vrot.slane %v363, %v371
      %v374 = vunpack.c.l.s4 1983009808
      %v375 = vunpack.c.0.s8 %v374
      %v376 = vlaneseq
      %v377 = vshrl.u32 %v376, 7
      %v378 = vsub.s32 %v375, %v377
      %v379 = vrot.slane %v365, %v378
      %382 = vst [vmem:[#allocation3] sm:$0x33] %v372
      %383 = vst [vmem:[#allocation3 + $0x8] sm:$0x3] %v379
      %v384 = vld [vmem:[#allocation2] sm:$0xff]
      %v386 = vcombine.low %v384, %v384
      %v388 = vunpack.c.l.s4 1983009808
      %v389 = vunpack.c.0.s8 %v388
      %v390 = vlaneseq
      %v391 = vshrl.u32 %v390, 7
      %v392 = vsub.s32 %v389, %v391
      %v393 = vrot.slane %v386, %v392
      %v395 = vunpack.c.l.s4 1983009808
      %v396 = vunpack.c.0.s8 %v395
      %v397 = vlaneseq
      %v398 = vshrl.u32 %v397, 7
      %v399 = vsub.s32 %v396, %v398
      %v400 = vrot.slane %v384, %v399
      %401 = vrot.lane.b32.xlu0 %v393, 127
      %v402 = vpop.permute.xlu0 %401
      %403 = vrot.lane.b32.xlu0 %v400, 127
      %v404 = vpop.permute.xlu0 %403
      %v405 = vrot.slane %v402, 4
      %v406 = vrot.slane %v404, 4
      %vm407 = vcmask 1043456
      %v408 = vsel %vm407, %v405, %v406
      %vm409 = vcmask 1039360
      %v410 = vsel %vm409, %v402, %v408
      %v411 = vsel %vm409, %v404, %v406
      %414 = vst [vmem:[#allocation3] sm:$0xcc] %v410
      %415 = vst [vmem:[#allocation3 + $0x8] sm:$0xc] %v411
      %v416 = vld [vmem:[#allocation2] sm:$0xff]
      %v418 = vcombine.high %v416, %v416
      %v420 = vunpack.c.l.s4 1983009808
      %v421 = vunpack.c.0.s8 %v420
      %v422 = vlaneseq
      %v423 = vshrl.u32 %v422, 7
      %v424 = vsub.s32 %v421, %v423
      %v425 = vrot.slane %v416, %v424
      %v427 = vunpack.c.l.s4 1983009808
      %v428 = vunpack.c.0.s8 %v427
      %v429 = vlaneseq
      %v430 = vshrl.u32 %v429, 7
      %v431 = vsub.s32 %v428, %v430
      %v432 = vrot.slane %v418, %v431
      %433 = vrot.lane.b32.xlu0 %v425, 126
      %v434 = vpop.permute.xlu0 %433
      %435 = vrot.lane.b32.xlu0 %v432, 126
      %v436 = vpop.permute.xlu0 %435
      %v437 = vrot.slane %v434, 4
      %v438 = vrot.slane %v436, 4
      %v439 = vsel %vm407, %v437, %v438
      %vm440 = vcmask 1031168
      %v441 = vsel %vm440, %v434, %v439
      %v442 = vsel %vm440, %v436, %v438
      %445 = vst [vmem:[#allocation3 + $0xc] sm:$0x33] %v441
      %446 = vst [vmem:[#allocation3 + $0x14] sm:$0x3] %v442
      %v447 = vld [vmem:[#allocation2] sm:$0xff]
      %v449 = vcombine.low %v447, %v447
      %v451 = vunpack.c.l.s4 1983009808
      %v452 = vunpack.c.0.s8 %v451
      %v453 = vlaneseq
      %v454 = vshrl.u32 %v453, 7
      %v455 = vsub.s32 %v452, %v454
      %v456 = vrot.slane %v449, %v455
      %v458 = vunpack.c.l.s4 1983009808
      %v459 = vunpack.c.0.s8 %v458
      %v460 = vlaneseq
      %v461 = vshrl.u32 %v460, 7
      %v462 = vsub.s32 %v459, %v461
      %v463 = vrot.slane %v447, %v462
      %464 = vrot.lane.b32.xlu0 %v456, 110
      %v465 = vpop.permute.xlu0 %464
      %466 = vrot.lane.b32.xlu0 %v463, 110
      %v467 = vpop.permute.xlu0 %466
      %v468 = vrot.slane %v465, 4
      %v469 = vrot.slane %v467, 4
      %v470 = vsel %vm407, %v468, %v469
      %vm471 = vcmask 900096
      %v472 = vsel %vm471, %v465, %v470
      %v473 = vsel %vm471, %v467, %v469
      %476 = vst [vmem:[#allocation3 + $0xc] sm:$0xcc] %v472
      %477 = vst [vmem:[#allocation3 + $0x14] sm:$0xc] %v473
      %v478 = vld [vmem:[#allocation2] sm:$0xff]
      %v480 = vcombine.high %v478, %v478
      %v482 = vunpack.c.l.s4 1983009808
      %v483 = vunpack.c.0.s8 %v482
      %v484 = vlaneseq
      %v485 = vshrl.u32 %v484, 7
      %v486 = vsub.s32 %v483, %v485
      %v487 = vrot.slane %v478, %v486
      %v489 = vunpack.c.l.s4 1983009808
      %v490 = vunpack.c.0.s8 %v489
      %v491 = vlaneseq
      %v492 = vshrl.u32 %v491, 7
      %v493 = vsub.s32 %v490, %v492
      %v494 = vrot.slane %v480, %v493
      %495 = vrot.lane.b32.xlu0 %v487, 109
      %v496 = vpop.permute.xlu0 %495
      %497 = vrot.lane.b32.xlu0 %v494, 109
      %v498 = vpop.permute.xlu0 %497
      %v499 = vrot.slane %v496, 4
      %v500 = vrot.slane %v498, 4
      %v501 = vsel %vm407, %v499, %v500
      %vm502 = vcmask 891904
      %v503 = vsel %vm502, %v496, %v501
      %v504 = vsel %vm502, %v498, %v500
      %507 = vst [vmem:[#allocation3 + $0x18] sm:$0x33] %v503
      %508 = vst [vmem:[#allocation3 + $0x20] sm:$0x3] %v504
      %v509 = vld [vmem:[#allocation2] sm:$0xff]
      %v511 = vcombine.low %v509, %v509
      %v513 = vunpack.c.l.s4 1983009808
      %v514 = vunpack.c.0.s8 %v513
      %v515 = vlaneseq
      %v516 = vshrl.u32 %v515, 7
      %v517 = vsub.s32 %v514, %v516
      %v518 = vrot.slane %v511, %v517
      %v520 = vunpack.c.l.s4 1983009808
      %v521 = vunpack.c.0.s8 %v520
      %v522 = vlaneseq
      %v523 = vshrl.u32 %v522, 7
      %v524 = vsub.s32 %v521, %v523
      %v525 = vrot.slane %v509, %v524
      %526 = vrot.lane.b32.xlu0 %v518, 108
      %v527 = vpop.permute.xlu0 %526
      %528 = vrot.lane.b32.xlu0 %v525, 108
      %v529 = vpop.permute.xlu0 %528
      %v530 = vrot.slane %v527, 4
      %v531 = vrot.slane %v529, 4
      %v532 = vsel %vm407, %v530, %v531
      %vm533 = vcmask 883712
      %v534 = vsel %vm533, %v527, %v532
      %v535 = vsel %vm533, %v529, %v531
      %538 = vst [vmem:[#allocation3 + $0x18] sm:$0xcc] %v534
      %539 = vst [vmem:[#allocation3 + $0x20] sm:$0xc] %v535
      %v540 = vld [vmem:[#allocation2] sm:$0xff]
      %v542 = vcombine.high %v540, %v540
      %v544 = vunpack.c.l.s4 1983009808
      %v545 = vunpack.c.0.s8 %v544
      %v546 = vlaneseq
      %v547 = vshrl.u32 %v546, 7
      %v548 = vsub.s32 %v545, %v547
      %v549 = vrot.slane %v540, %v548
      %v551 = vunpack.c.l.s4 1983009808
      %v552 = vunpack.c.0.s8 %v551
      %v553 = vlaneseq
      %v554 = vshrl.u32 %v553, 7
      %v555 = vsub.s32 %v552, %v554
      %v556 = vrot.slane %v542, %v555
      %557 = vrot.lane.b32.xlu0 %v549, 92
      %v558 = vpop.permute.xlu0 %557
      %559 = vrot.lane.b32.xlu0 %v556, 92
      %v560 = vpop.permute.xlu0 %559
      %v561 = vrot.slane %v558, 4
      %v562 = vrot.slane %v560, 4
      %v563 = vsel %vm407, %v561, %v562
      %vm564 = vcmask 752640
      %v565 = vsel %vm564, %v558, %v563
      %v566 = vsel %vm564, %v560, %v562
      %569 = vst [vmem:[#allocation3 + $0x24] sm:$0x33] %v565
      %570 = vst [vmem:[#allocation3 + $0x2c] sm:$0x3] %v566
      %v571 = vld [vmem:[#allocation2] sm:$0xff]
      %v573 = vcombine.low %v571, %v571
      %v575 = vunpack.c.l.s4 1983009808
      %v576 = vunpack.c.0.s8 %v575
      %v577 = vlaneseq
      %v578 = vshrl.u32 %v577, 7
      %v579 = vsub.s32 %v576, %v578
      %v580 = vrot.slane %v573, %v579
      %v582 = vunpack.c.l.s4 1983009808
      %v583 = vunpack.c.0.s8 %v582
      %v584 = vlaneseq
      %v585 = vshrl.u32 %v584, 7
      %v586 = vsub.s32 %v583, %v585
      %v587 = vrot.slane %v571, %v586
      %588 = vrot.lane.b32.xlu0 %v580, 91
      %v589 = vpop.permute.xlu0 %588
      %590 = vrot.lane.b32.xlu0 %v587, 91
      %v591 = vpop.permute.xlu0 %590
      %v592 = vrot.slane %v589, 4
      %v593 = vrot.slane %v591, 4
      %v594 = vsel %vm407, %v592, %v593
      %vm595 = vcmask 744448
      %v596 = vsel %vm595, %v589, %v594
      %v597 = vsel %vm595, %v591, %v593
      %600 = vst [vmem:[#allocation3 + $0x24] sm:$0xcc] %v596
      %601 = vst [vmem:[#allocation3 + $0x2c] sm:$0xc] %v597
      %v602 = vld [vmem:[#allocation2] sm:$0xff]
      %v604 = vcombine.high %v602, %v602
      %v606 = vunpack.c.l.s4 1983009808
      %v607 = vunpack.c.0.s8 %v606
      %v608 = vlaneseq
      %v609 = vshrl.u32 %v608, 7
      %v610 = vsub.s32 %v607, %v609
      %v611 = vrot.slane %v602, %v610
      %v613 = vunpack.c.l.s4 1983009808
      %v614 = vunpack.c.0.s8 %v613
      %v615 = vlaneseq
      %v616 = vshrl.u32 %v615, 7
      %v617 = vsub.s32 %v614, %v616
      %v618 = vrot.slane %v604, %v617
      %619 = vrot.lane.b32.xlu0 %v611, 90
      %v620 = vpop.permute.xlu0 %619
      %621 = vrot.lane.b32.xlu0 %v618, 90
      %v622 = vpop.permute.xlu0 %621
      %v623 = vrot.slane %v620, 4
      %v624 = vrot.slane %v622, 4
      %v625 = vsel %vm407, %v623, %v624
      %vm626 = vcmask 736256
      %v627 = vsel %vm626, %v620, %v625
      %v628 = vsel %vm626, %v622, %v624
      %631 = vst [vmem:[#allocation3 + $0x30] sm:$0x33] %v627
      %632 = vst [vmem:[#allocation3 + $0x38] sm:$0x3] %v628
      %v633 = vld [vmem:[%s1] sm:$0x3]
      %v634 = vld [vmem:[#allocation3] sm:$0xff]
      %v635 = vld [vmem:[#allocation3 + $0x8] sm:$0xf]
      %v636 = vld [vmem:[#allocation3 + $0xc] sm:$0xff]
      %v637 = vld [vmem:[#allocation3 + $0x14] sm:$0xf]
      %v638 = vld [vmem:[#allocation3 + $0x18] sm:$0xff]
      %v639 = vld [vmem:[#allocation3 + $0x20] sm:$0xf]
      %v640 = vld [vmem:[#allocation3 + $0x24] sm:$0xff]
      %v641 = vld [vmem:[#allocation3 + $0x2c] sm:$0xf]
      %v642 = vld [vmem:[#allocation3 + $0x30] sm:$0x33]
      %v643 = vld [vmem:[#allocation3 + $0x38] sm:$0x3]
      %v654 = vunpack.c.l.b16 %v634
      %v655 = vunpack.c.h.b16 %v634
      %v656 = vunpack.c.l.b16 %v635
      %v657 = vunpack.c.l.b16 %v636
      %v658 = vunpack.c.h.b16 %v636
      %v659 = vunpack.c.l.b16 %v637
      %v660 = vunpack.c.l.b16 %v638
      %v661 = vunpack.c.h.b16 %v638
      %v662 = vunpack.c.l.b16 %v639
      %v663 = vunpack.c.l.b16 %v640
      %v664 = vunpack.c.h.b16 %v640
      %v665 = vunpack.c.l.b16 %v641
      %v666 = vunpack.c.l.b16 %v642
      %v667 = vunpack.c.h.b16 %v642
      %v668 = vunpack.c.l.b16 %v643
      %v669 = vpack.c.b16 %v657, %v654
      %v670 = vpack.c.b16 %v658, %v655
      %v671 = vpack.c.b16 %v659, %v656
      %v672 = vpack.c.b16 %v663, %v660
      %v673 = vpack.c.b16 %v664, %v661
      %v674 = vpack.c.b16 %v665, %v662
      %v675 = vpack.c.b16 %v666, %v666
      %v676 = vpack.c.b16 %v667, %v667
      %v677 = vpack.c.b16 %v668, %v668
      %vm684 = vcmask 293888
      %v686 = vsel %vm684, %v633, 0
      %vm688 = vcmask 1041408
      %v690 = vsel %vm688, %v675, 0
      %v693 = vsel %vm688, %v676, 0
      %v696 = vsel %vm688, %v677, 0
      %698 = vmatprep.subr.bf16.mxu0 0
      %699 = vmatpush1.bf16.msra.mxu0 0
      %700 = vmatprep.subr.bf16.mxu0 0
      %701 = vmatpush1.bf16.msra.mxu0 0
      %702 = vmatprep.subr.bf16.mxu0 0
      %703 = vmatpush1.bf16.msra.mxu0 0
      %704 = vmatprep.subr.bf16.mxu0 0
      %705 = vmatpush1.bf16.msra.mxu0 0
      %706 = vmatprep.subr.bf16.mxu0 0
      %707 = vmatpush1.bf16.msra.mxu0 0
      %708 = vmatprep.subr.bf16.mxu0 %v693
      %709 = vmatpush1.bf16.msra.mxu0 %v690
      %710 = vmatprep.subr.bf16.mxu0 %v673
      %711 = vmatpush1.bf16.msra.mxu0 %v672
      %712 = vmatprep.subr.bf16.mxu0 %v670
      %713 = vmatpush1.bf16.msra.mxu0 %v669
      %714 = vmatprep.subr.bf16.mxu0 0
      %715 = vmatpush2.bf16.msra.mxu0 0
      %716 = vmatprep.subr.bf16.mxu0 0
      %717 = vmatpush2.bf16.msra.mxu0 0
      %718 = vmatprep.subr.bf16.mxu0 0
      %719 = vmatpush2.bf16.msra.mxu0 0
      %720 = vmatprep.subr.bf16.mxu0 0
      %721 = vmatpush2.bf16.msra.mxu0 0
      %722 = vmatprep.subr.bf16.mxu0 0
      %723 = vmatpush2.bf16.msra.mxu0 0
      %724 = vmatprep.subr.bf16.mxu0 0
      %725 = vmatpush2.bf16.msra.mxu0 0
      %726 = vmatprep.subr.bf16.mxu0 0
      %727 = vmatpush2.bf16.msra.mxu0 0
      %728 = vmatprep.subr.bf16.mxu0 0
      %729 = vmatpush2.bf16.msra.mxu0 0
      %730 = vmatprep.mubr.bf16.mxu0 0
      %731 = vmatmul.mubr.bf16.gmra.mxu0 %v686
      %v732 = vpop.f32.mrf.mxu0
      %v733 = vadd.f32 0.0, %v732
      %v734 = vpop.f32.mrf.mxu0
      %v735 = vadd.f32 0.0, %v734
      %v736 = vpop.f32.mrf.mxu0
      %v737 = vpop.f32.mrf.mxu0
      %738 = vdwg.mxu0
      %739 = vmatprep.subr.bf16.mxu0 0
      %740 = vmatpush1.bf16.msra.mxu0 0
      %741 = vmatprep.subr.bf16.mxu0 0
      %742 = vmatpush1.bf16.msra.mxu0 0
      %743 = vmatprep.subr.bf16.mxu0 0
      %744 = vmatpush1.bf16.msra.mxu0 0
      %745 = vmatprep.subr.bf16.mxu0 0
      %746 = vmatpush1.bf16.msra.mxu0 0
      %747 = vmatprep.subr.bf16.mxu0 0
      %748 = vmatpush1.bf16.msra.mxu0 0
      %749 = vmatprep.subr.bf16.mxu0 0
      %750 = vmatpush1.bf16.msra.mxu0 %v696
      %751 = vmatprep.subr.bf16.mxu0 0
      %752 = vmatpush1.bf16.msra.mxu0 %v674
      %753 = vmatprep.subr.bf16.mxu0 0
      %754 = vmatpush1.bf16.msra.mxu0 %v671
      %755 = vmatprep.subr.bf16.mxu0 0
      %756 = vmatpush2.bf16.msra.mxu0 0
      %757 = vmatprep.subr.bf16.mxu0 0
      %758 = vmatpush2.bf16.msra.mxu0 0
      %759 = vmatprep.subr.bf16.mxu0 0
      %760 = vmatpush2.bf16.msra.mxu0 0
      %761 = vmatprep.subr.bf16.mxu0 0
      %762 = vmatpush2.bf16.msra.mxu0 0
      %763 = vmatprep.subr.bf16.mxu0 0
      %764 = vmatpush2.bf16.msra.mxu0 0
      %765 = vmatprep.subr.bf16.mxu0 0
      %766 = vmatpush2.bf16.msra.mxu0 0
      %767 = vmatprep.subr.bf16.mxu0 0
      %768 = vmatpush2.bf16.msra.mxu0 0
      %769 = vmatprep.subr.bf16.mxu0 0
      %770 = vmatpush2.bf16.msra.mxu0 0
      %771 = vmatprep.mubr.bf16.mxu0 0
      %772 = vmatmul.mubr.bf16.gmra.mxu0 %v686
      %v773 = vpop.f32.mrf.mxu0
      %v774 = vadd.f32 0.0, %v773
      %v775 = vpop.f32.mrf.mxu0
      %v776 = vpop.f32.mrf.mxu0
      %v777 = vpop.f32.mrf.mxu0
      %778 = vdwg.mxu0
      %v779 = vmul.f32 %v733, %v304
      %v780 = vmul.f32 %v735, %v308
      %v781 = vmul.f32 %v774, %v312
      %vm782 = vcmask 1043456
      %v783 = vsel %vm782, %v779, 0.0
      %v784 = vsel %vm782, %v780, 0.0
      %v785 = vadd.f32 %v783, %v784
      %v786 = vsel %vm782, %v781, 0.0
      %v787 = vadd.f32 %v785, %v786
      %788 = vadd.xlane.f32.xlu0 %v787
      %v789 = vpop.xlane.xlu0 %788
      %v790 = vmul.f32 %v779, %v733
      %v791 = vmul.f32 %v780, %v735
      %v792 = vmul.f32 %v781, %v774
      %v793 = vsel %vm782, %v790, 0.0
      %v794 = vsel %vm782, %v791, 0.0
      %v795 = vadd.f32 %v793, %v794
      %v796 = vsel %vm782, %v792, 0.0
      %v797 = vadd.f32 %v795, %v796
      %798 = vadd.xlane.f32.xlu0 %v797
      %v799 = vpop.xlane.xlu0 %798
      %vm800 = vcmask 7168
      %v801 = vsel %vm800, %v789, %v799
      %v802 = vpack.c.bf16 %v733, %v733
      %v803 = vpack.c.bf16 %v735, %v735
      %v804 = vpack.c.bf16 %v774, %v774
      %v808 = vcombine.low %v802, %v803
      %v810 = vunpack.c.l.s4 1983009808
      %v811 = vunpack.c.0.s8 %v810
      %v812 = vlaneseq
      %v813 = vshrl.u32 %v812, 7
      %v814 = vsub.s32 %v811, %v813
      %v815 = vrot.slane %v808, %v814
      %v817 = vunpack.c.l.s4 1983009808
      %v818 = vunpack.c.0.s8 %v817
      %v819 = vlaneseq
      %v820 = vshrl.u32 %v819, 7
      %v821 = vsub.s32 %v818, %v820
      %v822 = vrot.slane %v804, %v821
      %v823 = vcombine.low %v815, %v822
      %825 = vst [vmem:[%s258] sm:$0x3f] %v823
      %vm826 = vcmask 11264
      %827 = vst.msk [vmem:[%s262] sm:$0xf] %vm826, %v801
      %p828 = scmp.lt.s32.totalorder %s18, 1
      %s829 = scalar_select %p828, %s18, 1
      %s830 = smul.addr %s829, 3
      %s831 = smul.addr %s830, 2
      %s832 = scalar_lea.vmem %s5, %s831
      %p833 = scmp.lt.s32.totalorder %s18, 1
      %s834 = scalar_select %p833, %s18, 1
      %s835 = smul.addr %s834, 4
      %s836 = scalar_lea.vmem %s6, %s835
      // Predicated region
      $region41: #{decoder_block_forward.6} parent=39 // pred_check
        %p837 = pneg %p146
      $region42: #{decoder_block_forward.6} parent=39 // pred_check_branch
        %839 = sbr.rel (%p837) target = $region44
      $region43: #{decoder_block_forward.6} parent=39 // pred_region
        _
      $region44: #{decoder_block_forward.6} parent=39 // pred_fallthru
        _
      // Predicated region
      $region45: #{decoder_block_forward.6} parent=39 // pred_check
        %p840 = pneg %p172
      $region46: #{decoder_block_forward.6} parent=39 // pred_check_branch
        %842 = sbr.rel (%p840) target = $region48
      $region47: #{decoder_block_forward.6} parent=39 // pred_region
        _
      $region48: #{decoder_block_forward.6} parent=39 // pred_fallthru
        _
    $region40: #{decoder_block_forward.6} parent=5 // pred_fallthru
      _
    %p843 = scmp.le.s32.totalorder 2, %s13
    // Predicated region
    $region49: #{decoder_block_forward.6} parent=5 // pred_check
      %p844 = pneg %p843
    $region50: #{decoder_block_forward.6} parent=5 // pred_check_branch
      %846 = sbr.rel (%p844) target = $region52
    $region51: #{decoder_block_forward.6} parent=5 // pred_region
      %s847 = ssub.s32 %s13, 2
      // Predicated region
      $region53: #{decoder_block_forward.6} parent=51 // pred_check
        %p848 = pneg %p152
      $region54: #{decoder_block_forward.6} parent=51 // pred_check_branch
        %850 = sbr.rel (%p848) target = $region56
      $region55: #{decoder_block_forward.6} parent=51 // pred_region
        %p851 = scmp.lt.s32.totalorder %s19, 1
        %s852 = scalar_select %p851, %s19, 1
        %s853 = smul.addr %s852, 3
        %s854 = smul.addr %s853, 2
        %s855 = scalar_lea.vmem %s5, %s854
      $region56: #{decoder_block_forward.6} parent=51 // pred_fallthru
        _
      // Predicated region
      $region57: #{decoder_block_forward.6} parent=51 // pred_check
        %p856 = pneg %p178
      $region58: #{decoder_block_forward.6} parent=51 // pred_check_branch
        %858 = sbr.rel (%p856) target = $region60
      $region59: #{decoder_block_forward.6} parent=51 // pred_region
        %p859 = scmp.lt.s32.totalorder %s19, 1
        %s860 = scalar_select %p859, %s19, 1
        %s861 = smul.addr %s860, 4
        %s862 = scalar_lea.vmem %s6, %s861
      $region60: #{decoder_block_forward.6} parent=51 // pred_fallthru
        _
    $region52: #{decoder_block_forward.6} parent=5 // pred_fallthru
      _
  $region6: #{decoder_block_forward.6} parent=0 // loop_footer
    %s17 = sadd.s32 1, %s13
  $region7: #{decoder_block_forward.6} parent=0 // loop_footer_branch
    %12 = sbr.rel target = $region3
  $region8: #{decoder_block_forward.6} parent=0 // loop_exit
    _

</llo_original>
